<compile_context>
chip_gen: v6e
topology: v6e:2x2x1
jax: 0.10.0
libtpu: 0.0.40
codegen_flags: <defaults>
</compile_context>

<pallas_src>
import jax
import jax.numpy as jnp
import numpy as np
from jax.experimental import pallas as pl
from jax.experimental.pallas import tpu as pltpu

# ---------------- hyper-parameters (TPU friendly) ----------------
BATCH = 256                     # total batch (multiple of BATCH_TILE)
BATCH_TILE = 128                # rows per grid step
OBS_DIM = 32
EM_INPUT_DIM = 16
BASE_HIDDEN = (64, 32)          # base_hidden_sizes
EM_HIDDEN = (64, 32)            # em_hidden_sizes (last dim must match base)
FEATURE_DIM = BASE_HIDDEN[-1]   # 32
MODULE_HIDDEN = 32              # == FEATURE_DIM so stacks fuse cleanly
NUM_LAYERS = 3
NUM_MODULES = 4
GATING_HIDDEN = 32
ACTION_DIM = 8
LOG_STD_MIN, LOG_STD_MAX = -20.0, 2.0
ACTION_SCALE = 1.0

LANES = 128
H = FEATURE_DIM                 # 32-lane group per module
assert NUM_MODULES * H == LANES
assert OBS_DIM + EM_INPUT_DIM <= LANES

# --------- packed parameter layout: named row blocks of one (ROWS, 128) matrix ---------
_BLOCKS = (
    [("Wt0", LANES), ("bt0", 16), ("Wt1", LANES), ("bt1", 16), ("SelE", LANES)]
    + [blk for i in range(NUM_LAYERS) for blk in ((f"Gf{i}", LANES), (f"gb{i}", 16))]
    + [("Wgw", LANES), ("bgw", 16), ("Ssum", LANES),
       ("Wgl", LANES), ("bgl", 16), ("Sl", LANES), ("Elast", LANES)]
    + [(f"E{j}", LANES) for j in range(NUM_MODULES)]
    + [("Wm0", LANES), ("bm0", 16), ("Wm1", H), ("bm1", 16),
       ("Wm2", LANES), ("bm2", 16), ("Wout", H), ("bout", 16)]
)
_OFF = {}
_row = 0
for _name, _rows in _BLOCKS:
    _OFF[_name] = _row
    _row += _rows
TOTAL_ROWS = _row               # multiple of 16 (bf16 sublane tile aligned)


# ------------------------------ kernel ----------------------------------
def actor_kernel(x_ref, p_ref, o_ref):
    f32, bf16 = jnp.float32, jnp.bfloat16
    relu = lambda v: jnp.maximum(v, 0.0)
    n = NUM_MODULES

    def mm(x, name, rows=LANES, row0=0):
        off = _OFF[name] + row0
        w = p_ref[off:off + rows, :]                       # static slice: zero-cost view
        return jnp.dot(x.astype(bf16), w, preferred_element_type=f32)

    def bias(name):
        return p_ref[_OFF[name]:_OFF[name] + 1, :].astype(f32)

    def group_sum(v):                                      # sum of the n 32-lane groups
        return sum(v[:, k * H:(k + 1) * H] for k in range(n))

    x = x_ref[...]                                         # (Bt,128) = [obs | emb | 0]

    # --- fused base + embedding trunks (block-diagonal weights) ---
    h01 = relu(mm(x, "Wt0") + bias("bt0"))                 # [f0(64) | e0(64)]
    fe = relu(mm(h01, "Wt1") + bias("bt1"))                # [f(32) | e(32) | 0]

    # --- soft-gated feature g = f * e (selector matmul aligns e under f) ---
    g = fe * mm(fe, "SelE")                                # lanes 0..31 = f*e, rest 0

    # --- gating trunk ---
    feats = []
    h = g
    for i in range(NUM_LAYERS):
        h = relu(mm(h, f"Gf{i}") + bias(f"gb{i}"))
        feats.append(h)

    # --- routing probabilities: grouped softmax over n sources per target ---
    raw = mm(feats[1], "Wgw") + bias("bgw")                # lanes 0..n*n-1 = logits, rest 0
    raw = raw - jnp.max(raw, axis=-1, keepdims=True)       # per-row constant -> softmax-invariant
    ew = jnp.exp(raw)
    den = mm(ew, "Ssum") + 1e-20                           # per-lane group sums (MXU)
    probs = ew * pl.reciprocal(den, approx=True)           # lanes 0..15 = grouped softmax

    rawl = mm(feats[-1], "Wgl") + bias("bgl")              # lanes 0..n-1 = logits
    rawl = rawl - jnp.max(rawl, axis=-1, keepdims=True)
    el = jnp.exp(rawl)
    denl = mm(el, "Sl") + 1e-20
    p_last = el * pl.reciprocal(denl, approx=True)         # lanes 0..n-1 = softmax
    p_last_rep = mm(p_last, "Elast")                       # lane c = p_last[c // H]

    # --- routed module layers, lane-concatenated: (Bt, n*H) = (Bt, 128) ---
    x0 = mm(fe, "Wm0") + bias("bm0")                       # all n layer-0 modules in one dot
    # layer 1 transition: uniform 1/n routing.
    # TODO(synk): reference forward() is `pass` and __init__ defines no
    # gating_weight_fc_0, so the first module transition uses uniform weights.
    mixed1 = relu(group_sum(x0) * (1.0 / n))               # (Bt, H)
    x1 = mm(mixed1, "Wm1", rows=H) + bias("bm1")           # all n layer-1 modules in one dot
    # layer 2 transition: learned soft routing.
    acc = bias("bm2")
    for j in range(n):
        pj = mm(probs, f"E{j}")                            # lane c = probs[:, j*n + c//H]
        mixed_j = relu(group_sum(pj * x1))                 # (Bt, H)
        acc = acc + mm(mixed_j, "Wm2", rows=H, row0=j * H) # block-diag rows of module j
    x2 = acc                                               # (Bt, 128)

    # --- final soft combine + output head (packed as [mu | mu | log_std | 0]) ---
    feat = relu(group_sum(p_last_rep * x2))                # (Bt, H)
    out = mm(feat, "Wout", rows=H) + bias("bout")          # (Bt, 128)

    lane = jax.lax.broadcasted_iota(jnp.int32, out.shape, 1)
    act = jnp.tanh(out) * ACTION_SCALE
    # TODO(synk): reparameterized sampling + tanh-corrected log-prob omitted
    # (reference forward() is `pass`); deterministic tanh(mu)*scale returned.
    log_std = jnp.clip(out, LOG_STD_MIN, LOG_STD_MAX)
    o_ref[...] = jnp.where(lane < ACTION_DIM, act,
                  jnp.where(lane < 2 * ACTION_DIM, out,
                   jnp.where(lane < 3 * ACTION_DIM, log_std, 0.0)))


# ------------------------- parameter construction -----------------------
def _linear(key, fan_in, fan_out):
    """PyTorch-default-style uniform init; weight stored (in, out), bias (1, out)."""
    kw, kb = jax.random.split(key)
    bound = float(fan_in) ** -0.5
    w = jax.random.uniform(kw, (fan_in, fan_out), jnp.float32, -bound, bound)
    b = jax.random.uniform(kb, (1, fan_out), jnp.float32, -bound, bound)
    return w, b


def make_params(key):
    keys = iter(jax.random.split(key, 64))
    p = {}
    p["bw0"], p["bb0"] = _linear(next(keys), OBS_DIM, BASE_HIDDEN[0])
    p["bw1"], p["bb1"] = _linear(next(keys), BASE_HIDDEN[0], BASE_HIDDEN[1])
    p["ew0"], p["eb0"] = _linear(next(keys), EM_INPUT_DIM, EM_HIDDEN[0])
    p["ew1"], p["eb1"] = _linear(next(keys), EM_HIDDEN[0], EM_HIDDEN[1])
    gfw, gfb = [], []
    for _ in range(NUM_LAYERS):
        w, b = _linear(next(keys), GATING_HIDDEN, GATING_HIDDEN)
        gfw.append(w); gfb.append(b)
    p["gfw"], p["gfb"] = jnp.stack(gfw), jnp.stack(gfb)
    gwfw, gwfb = [], []
    for _ in range(NUM_LAYERS - 2):
        w, b = _linear(next(keys), GATING_HIDDEN, NUM_MODULES * NUM_MODULES)
        gwfw.append(w); gwfb.append(b)
    p["gwfw"], p["gwfb"] = jnp.stack(gwfw), jnp.stack(gwfb)
    p["gwlw"], p["gwlb"] = _linear(next(keys), GATING_HIDDEN, NUM_MODULES)
    mw, mb = [], []
    for _ in range(NUM_LAYERS):
        lw, lb = [], []
        for _ in range(NUM_MODULES):
            w, b = _linear(next(keys), FEATURE_DIM, MODULE_HIDDEN)
            lw.append(w); lb.append(b)
        mw.append(jnp.stack(lw)); mb.append(jnp.stack(lb))
    p["mw"], p["mb"] = jnp.stack(mw), jnp.stack(mb)
    p["ow"], p["ob"] = _linear(next(keys), MODULE_HIDDEN, 2 * ACTION_DIM)
    return p


def pack_params(p):
    """Pack every weight/bias/expansion matrix into one (TOTAL_ROWS, 128) bf16 array."""
    n = NUM_MODULES
    P = np.zeros((TOTAL_ROWS, LANES), np.float32)

    def put(name, arr, row0=0, col0=0):
        a = np.asarray(arr, np.float32)
        off = _OFF[name] + row0
        P[off:off + a.shape[0], col0:col0 + a.shape[1]] = a

    # fused trunk layer 0: [obs | emb] -> [f0 | e0]
    put("Wt0", p["bw0"], row0=0, col0=0)
    put("Wt0", p["ew0"], row0=OBS_DIM, col0=BASE_HIDDEN[0])
    put("bt0", p["bb0"], col0=0)
    put("bt0", p["eb0"], col0=BASE_HIDDEN[0])
    # fused trunk layer 1: [f0 | e0] -> [f | e | 0]
    put("Wt1", p["bw1"], row0=0, col0=0)
    put("Wt1", p["ew1"], row0=BASE_HIDDEN[0], col0=H)
    put("bt1", p["bb1"], col0=0)
    put("bt1", p["eb1"], col0=H)
    # selector aligning e under f: SelE[H+h, h] = 1
    sel = np.zeros((2 * H, H), np.float32)
    sel[H:, :] = np.eye(H, dtype=np.float32)
    put("SelE", sel)
    # gating trunk
    for i in range(NUM_LAYERS):
        put(f"Gf{i}", p["gfw"][i])
        put(f"gb{i}", p["gfb"][i])
    # layer-2 routing logits (gating_weight_fc)
    put("Wgw", p["gwfw"][0])
    put("bgw", p["gwfb"][0])
    # grouped-softmax denominator matrix (group sums for lanes < n*n, identity guard after)
    nn_ = n * n
    ss = np.zeros((LANES, LANES), np.float32)
    for r in range(nn_):
        for c in range(nn_):
            if r // n == c // n:
                ss[r, c] = 1.0
    for r in range(nn_, LANES):
        ss[r, r] = 1.0
    put("Ssum", ss)
    # final-combine logits (gating_weight_last)
    put("Wgl", p["gwlw"])
    put("bgl", p["gwlb"])
    sl = np.zeros((LANES, LANES), np.float32)
    sl[:n, :] = 1.0
    put("Sl", sl)
    # expand final-combine probs to 32-lane groups
    elast = np.zeros((LANES, LANES), np.float32)
    for j in range(n):
        elast[j, j * H:(j + 1) * H] = 1.0
    put("Elast", elast)
    # expand routing probs for target module j: E_j[j*n + k, k*H + h] = 1
    for j in range(n):
        ej = np.zeros((LANES, LANES), np.float32)
        for k in range(n):
            ej[j * n + k, k * H:(k + 1) * H] = 1.0
        put(f"E{j}", ej)
    # module layer 0: lane-concatenated along the output dim
    for j in range(n):
        put("Wm0", p["mw"][0, j], row0=0, col0=j * H)
        put("bm0", p["mb"][0, j], col0=j * H)
    # module layer 1: shared (uniform-mixed) input, lane-concatenated outputs
    for j in range(n):
        put("Wm1", p["mw"][1, j], row0=0, col0=j * H)
        put("bm1", p["mb"][1, j], col0=j * H)
    # module layer 2: block-diagonal (module j rows at j*H, output slot j)
    for j in range(n):
        put("Wm2", p["mw"][2, j], row0=j * H, col0=j * H)
        put("bm2", p["mb"][2, j], col0=j * H)
    # output head packed as [mu | mu | log_std | 0]
    ow = np.asarray(p["ow"], np.float32)
    ob = np.asarray(p["ob"], np.float32)
    put("Wout", ow[:, :ACTION_DIM], col0=0)
    put("Wout", ow[:, :ACTION_DIM], col0=ACTION_DIM)
    put("Wout", ow[:, ACTION_DIM:], col0=2 * ACTION_DIM)
    put("bout", ob[:, :ACTION_DIM], col0=0)
    put("bout", ob[:, :ACTION_DIM], col0=ACTION_DIM)
    put("bout", ob[:, ACTION_DIM:], col0=2 * ACTION_DIM)
    return jnp.asarray(P, dtype=jnp.bfloat16)


# ------------------------- pure-JAX reference (f32) -----------------------
def reference_forward(obs, emb, p):
    relu = lambda v: jnp.maximum(v, 0.0)
    dense = lambda x, w, b: x @ w + b
    n = NUM_MODULES
    f = relu(dense(obs, p["bw0"], p["bb0"]))
    f = relu(dense(f, p["bw1"], p["bb1"]))
    e = relu(dense(emb, p["ew0"], p["eb0"]))
    e = relu(dense(e, p["ew1"], p["eb1"]))
    g = f * e
    feats, h = [], g
    for i in range(NUM_LAYERS):
        h = relu(dense(h, p["gfw"][i], p["gfb"][i]))
        feats.append(h)
    probs = []
    for i in range(NUM_LAYERS - 2):
        raw = dense(feats[i + 1], p["gwfw"][i], p["gwfb"][i])
        probs.append([jax.nn.softmax(raw[:, j * n:(j + 1) * n], axis=-1) for j in range(n)])
    p_last = jax.nn.softmax(dense(feats[-1], p["gwlw"], p["gwlb"]), axis=-1)
    x = [dense(f, p["mw"][0, j], p["mb"][0, j]) for j in range(n)]
    for l in range(1, NUM_LAYERS):
        new_x = []
        for j in range(n):
            if l == 1:
                mixed = sum(x) * (1.0 / n)
            else:
                rows = probs[l - 2]
                mixed = sum(rows[j][:, k:k + 1] * x[k] for k in range(n))
            new_x.append(dense(relu(mixed), p["mw"][l, j], p["mb"][l, j]))
        x = new_x
    feat = relu(sum(p_last[:, j:j + 1] * x[j] for j in range(n)))
    out = dense(feat, p["ow"], p["ob"])
    mu = out[:, :ACTION_DIM]
    log_std = jnp.clip(out[:, ACTION_DIM:], LOG_STD_MIN, LOG_STD_MAX)
    return jnp.tanh(mu) * ACTION_SCALE, mu, log_std


# ------------------------------ wrapper ----------------------------------
def _cost_estimate(batch):
    n_full, n_small = 12 + NUM_MODULES, 2 + NUM_MODULES      # 128-row / 32-row dots
    flops = batch * (n_full * 2 * LANES * LANES + n_small * 2 * H * LANES)
    transcendentals = batch * 3 * LANES                      # 2x exp + tanh
    bytes_accessed = TOTAL_ROWS * LANES * 2 + 2 * batch * LANES * 4
    return pl.CostEstimate(flops=flops, transcendentals=transcendentals,
                           bytes_accessed=bytes_accessed)


def actor_forward(obs, embedding, packed):
    b = obs.shape[0]
    bp = ((b + BATCH_TILE - 1) // BATCH_TILE) * BATCH_TILE
    x = jnp.zeros((bp, LANES), jnp.float32)
    x = x.at[:b, :OBS_DIM].set(obs)
    x = x.at[:b, OBS_DIM:OBS_DIM + EM_INPUT_DIM].set(embedding)

    y = pl.pallas_call(
        actor_kernel,
        out_shape=jax.ShapeDtypeStruct((bp, LANES), jnp.float32),
        grid=(bp // BATCH_TILE,),
        in_specs=[
            pl.BlockSpec((BATCH_TILE, LANES), lambda i: (i, 0)),   # batch tile
            pl.BlockSpec((TOTAL_ROWS, LANES), lambda i: (0, 0)),   # packed params (resident)
        ],
        out_specs=pl.BlockSpec((BATCH_TILE, LANES), lambda i: (i, 0)),
        compiler_params=pltpu.CompilerParams(
            dimension_semantics=("parallel",)),
        cost_estimate=_cost_estimate(bp),
    )(x, packed)

    act = y[:b, :ACTION_DIM]
    mu = y[:b, ACTION_DIM:2 * ACTION_DIM]
    log_std = y[:b, 2 * ACTION_DIM:3 * ACTION_DIM]
    return act, mu, log_std


if __name__ == "__main__":
    key = jax.random.PRNGKey(0)
    k_param, k_obs, k_emb = jax.random.split(key, 3)
    params = make_params(k_param)
    packed = pack_params(params)
    obs = jax.random.normal(k_obs, (BATCH, OBS_DIM), jnp.float32)
    embedding = jax.random.normal(k_emb, (BATCH, EM_INPUT_DIM), jnp.float32)

    action, mu, log_std = actor_forward(obs, embedding, packed)
    jax.block_until_ready((action, mu, log_std))

    assert action.shape == (BATCH, ACTION_DIM)
    assert mu.shape == (BATCH, ACTION_DIM)
    assert log_std.shape == (BATCH, ACTION_DIM)
    assert bool(jnp.all(jnp.isfinite(action)))
    assert bool(jnp.all(jnp.abs(action) <= ACTION_SCALE + 1e-6))
    assert bool(jnp.all(log_std >= LOG_STD_MIN)) and bool(jnp.all(log_std <= LOG_STD_MAX))

    # cross-check against the f32 pure-JAX reference (bf16 matmuls -> loose tol)
    r_act, r_mu, r_ls = reference_forward(obs, embedding, params)
    assert float(jnp.max(jnp.abs(action - r_act))) < 0.1
    assert float(jnp.max(jnp.abs(mu - r_mu))) < 0.1
    assert float(jnp.max(jnp.abs(log_std - r_ls))) < 0.1

    print("KERNEL_OK")
</pallas_src>

<mosaic_0001>
module attributes {stable_mosaic.version = 11 : i64} {
  func.func @actor_kernel(%arg0: i32, %arg1: memref<128x128xf32, #tpu.memory_space<vmem>>, %arg2: memref<2416x128xbf16, #tpu.memory_space<vmem>>, %arg3: memref<128x128xf32, #tpu.memory_space<vmem>>) attributes {dimension_semantics = [#tpu.dimension_semantics<parallel>], iteration_bounds = array<i64: 2>, scalar_prefetch = 0 : i64, scratch_operands = 0 : i64, tpu.core_type = #tpu.core_type<tc>, window_params = [{transform_indices = @transform_0, window_bounds = array<i64: 128, 128>}, {pipeline_mode = #tpu.pipeline_mode<synchronous>, transform_indices = @transform_1, window_bounds = array<i64: 2416, 128>}, {transform_indices = @transform_2, window_bounds = array<i64: 128, 128>}]} {
    %c0 = arith.constant 0 : index
    %c0_0 = arith.constant 0 : index
    %0 = vector.load %arg1[%c0, %c0_0] : memref<128x128xf32, #tpu.memory_space<vmem>>, vector<128x128xf32>
    %c0_1 = arith.constant 0 : index
    %c0_2 = arith.constant 0 : index
    %1 = vector.load %arg2[%c0_1, %c0_2] : memref<2416x128xbf16, #tpu.memory_space<vmem>>, vector<128x128xbf16>
    %2 = arith.truncf %0 : vector<128x128xf32> to vector<128x128xbf16>
    %cst = arith.constant dense<0.000000e+00> : vector<128x128xf32>
    %3 = tpu.matmul %2, %1, %cst {dimension_numbers = #tpu.dot_dimension_numbers<[1], [0], [0], [1], [0, 0, 1, 1], [], []>} : vector<128x128xbf16>, vector<128x128xbf16>, vector<128x128xf32> -> vector<128x128xf32>
    %c128 = arith.constant 128 : index
    %c0_3 = arith.constant 0 : index
    %4 = vector.load %arg2[%c128, %c0_3] : memref<2416x128xbf16, #tpu.memory_space<vmem>>, vector<1x128xbf16>
    %5 = arith.extf %4 : vector<1x128xbf16> to vector<1x128xf32>
    %6 = vector.broadcast %5 : vector<1x128xf32> to vector<128x128xf32>
    %7 = arith.addf %3, %6 : vector<128x128xf32>
    %cst_4 = arith.constant 0.000000e+00 : f32
    %8 = vector.broadcast %cst_4 : f32 to vector<128x128xf32>
    %9 = arith.maximumf %7, %8 : vector<128x128xf32>
    %c144 = arith.constant 144 : index
    %c0_5 = arith.constant 0 : index
    %10 = vector.load %arg2[%c144, %c0_5] : memref<2416x128xbf16, #tpu.memory_space<vmem>>, vector<128x128xbf16>
    %11 = arith.truncf %9 : vector<128x128xf32> to vector<128x128xbf16>
    %cst_6 = arith.constant dense<0.000000e+00> : vector<128x128xf32>
    %12 = tpu.matmul %11, %10, %cst_6 {dimension_numbers = #tpu.dot_dimension_numbers<[1], [0], [0], [1], [0, 0, 1, 1], [], []>} : vector<128x128xbf16>, vector<128x128xbf16>, vector<128x128xf32> -> vector<128x128xf32>
    %c272 = arith.constant 272 : index
    %c0_7 = arith.constant 0 : index
    %13 = vector.load %arg2[%c272, %c0_7] : memref<2416x128xbf16, #tpu.memory_space<vmem>>, vector<1x128xbf16>
    %14 = arith.extf %13 : vector<1x128xbf16> to vector<1x128xf32>
    %15 = vector.broadcast %14 : vector<1x128xf32> to vector<128x128xf32>
    %16 = arith.addf %12, %15 : vector<128x128xf32>
    %cst_8 = arith.constant 0.000000e+00 : f32
    %17 = vector.broadcast %cst_8 : f32 to vector<128x128xf32>
    %18 = arith.maximumf %16, %17 : vector<128x128xf32>
    %c288 = arith.constant 288 : index
    %c0_9 = arith.constant 0 : index
    %19 = vector.load %arg2[%c288, %c0_9] : memref<2416x128xbf16, #tpu.memory_space<vmem>>, vector<128x128xbf16>
    %20 = arith.truncf %18 : vector<128x128xf32> to vector<128x128xbf16>
    %cst_10 = arith.constant dense<0.000000e+00> : vector<128x128xf32>
    %21 = tpu.matmul %20, %19, %cst_10 {dimension_numbers = #tpu.dot_dimension_numbers<[1], [0], [0], [1], [0, 0, 1, 1], [], []>} : vector<128x128xbf16>, vector<128x128xbf16>, vector<128x128xf32> -> vector<128x128xf32>
    %22 = arith.mulf %18, %21 : vector<128x128xf32>
    %c416 = arith.constant 416 : index
    %c0_11 = arith.constant 0 : index
    %23 = vector.load %arg2[%c416, %c0_11] : memref<2416x128xbf16, #tpu.memory_space<vmem>>, vector<128x128xbf16>
    %24 = arith.truncf %22 : vector<128x128xf32> to vector<128x128xbf16>
    %cst_12 = arith.constant dense<0.000000e+00> : vector<128x128xf32>
    %25 = tpu.matmul %24, %23, %cst_12 {dimension_numbers = #tpu.dot_dimension_numbers<[1], [0], [0], [1], [0, 0, 1, 1], [], []>} : vector<128x128xbf16>, vector<128x128xbf16>, vector<128x128xf32> -> vector<128x128xf32>
    %c544 = arith.constant 544 : index
    %c0_13 = arith.constant 0 : index
    %26 = vector.load %arg2[%c544, %c0_13] : memref<2416x128xbf16, #tpu.memory_space<vmem>>, vector<1x128xbf16>
    %27 = arith.extf %26 : vector<1x128xbf16> to vector<1x128xf32>
    %28 = vector.broadcast %27 : vector<1x128xf32> to vector<128x128xf32>
    %29 = arith.addf %25, %28 : vector<128x128xf32>
    %cst_14 = arith.constant 0.000000e+00 : f32
    %30 = vector.broadcast %cst_14 : f32 to vector<128x128xf32>
    %31 = arith.maximumf %29, %30 : vector<128x128xf32>
    %c560 = arith.constant 560 : index
    %c0_15 = arith.constant 0 : index
    %32 = vector.load %arg2[%c560, %c0_15] : memref<2416x128xbf16, #tpu.memory_space<vmem>>, vector<128x128xbf16>
    %33 = arith.truncf %31 : vector<128x128xf32> to vector<128x128xbf16>
    %cst_16 = arith.constant dense<0.000000e+00> : vector<128x128xf32>
    %34 = tpu.matmul %33, %32, %cst_16 {dimension_numbers = #tpu.dot_dimension_numbers<[1], [0], [0], [1], [0, 0, 1, 1], [], []>} : vector<128x128xbf16>, vector<128x128xbf16>, vector<128x128xf32> -> vector<128x128xf32>
    %c688 = arith.constant 688 : index
    %c0_17 = arith.constant 0 : index
    %35 = vector.load %arg2[%c688, %c0_17] : memref<2416x128xbf16, #tpu.memory_space<vmem>>, vector<1x128xbf16>
    %36 = arith.extf %35 : vector<1x128xbf16> to vector<1x128xf32>
    %37 = vector.broadcast %36 : vector<1x128xf32> to vector<128x128xf32>
    %38 = arith.addf %34, %37 : vector<128x128xf32>
    %cst_18 = arith.constant 0.000000e+00 : f32
    %39 = vector.broadcast %cst_18 : f32 to vector<128x128xf32>
    %40 = arith.maximumf %38, %39 : vector<128x128xf32>
    %c704 = arith.constant 704 : index
    %c0_19 = arith.constant 0 : index
    %41 = vector.load %arg2[%c704, %c0_19] : memref<2416x128xbf16, #tpu.memory_space<vmem>>, vector<128x128xbf16>
    %42 = arith.truncf %40 : vector<128x128xf32> to vector<128x128xbf16>
    %cst_20 = arith.constant dense<0.000000e+00> : vector<128x128xf32>
    %43 = tpu.matmul %42, %41, %cst_20 {dimension_numbers = #tpu.dot_dimension_numbers<[1], [0], [0], [1], [0, 0, 1, 1], [], []>} : vector<128x128xbf16>, vector<128x128xbf16>, vector<128x128xf32> -> vector<128x128xf32>
    %c832 = arith.constant 832 : index
    %c0_21 = arith.constant 0 : index
    %44 = vector.load %arg2[%c832, %c0_21] : memref<2416x128xbf16, #tpu.memory_space<vmem>>, vector<1x128xbf16>
    %45 = arith.extf %44 : vector<1x128xbf16> to vector<1x128xf32>
    %46 = vector.broadcast %45 : vector<1x128xf32> to vector<128x128xf32>
    %47 = arith.addf %43, %46 : vector<128x128xf32>
    %cst_22 = arith.constant 0.000000e+00 : f32
    %48 = vector.broadcast %cst_22 : f32 to vector<128x128xf32>
    %49 = arith.maximumf %47, %48 : vector<128x128xf32>
    %c848 = arith.constant 848 : index
    %c0_23 = arith.constant 0 : index
    %50 = vector.load %arg2[%c848, %c0_23] : memref<2416x128xbf16, #tpu.memory_space<vmem>>, vector<128x128xbf16>
    %51 = arith.truncf %40 : vector<128x128xf32> to vector<128x128xbf16>
    %cst_24 = arith.constant dense<0.000000e+00> : vector<128x128xf32>
    %52 = tpu.matmul %51, %50, %cst_24 {dimension_numbers = #tpu.dot_dimension_numbers<[1], [0], [0], [1], [0, 0, 1, 1], [], []>} : vector<128x128xbf16>, vector<128x128xbf16>, vector<128x128xf32> -> vector<128x128xf32>
    %c976 = arith.constant 976 : index
    %c0_25 = arith.constant 0 : index
    %53 = vector.load %arg2[%c976, %c0_25] : memref<2416x128xbf16, #tpu.memory_space<vmem>>, vector<1x128xbf16>
    %54 = arith.extf %53 : vector<1x128xbf16> to vector<1x128xf32>
    %55 = vector.broadcast %54 : vector<1x128xf32> to vector<128x128xf32>
    %56 = arith.addf %52, %55 : vector<128x128xf32>
    %cst_26 = arith.constant dense<0xFF800000> : vector<128xf32>
    %57 = vector.multi_reduction <maximumf>, %56, %cst_26 [1] : vector<128x128xf32> to vector<128xf32>
    %58 = vector.shape_cast %57 : vector<128xf32> to vector<128x1xf32>
    %59 = vector.broadcast %58 : vector<128x1xf32> to vector<128x128xf32>
    %60 = arith.subf %56, %59 : vector<128x128xf32>
    %61 = math.exp %60 : vector<128x128xf32>
    %c992 = arith.constant 992 : index
    %c0_27 = arith.constant 0 : index
    %62 = vector.load %arg2[%c992, %c0_27] : memref<2416x128xbf16, #tpu.memory_space<vmem>>, vector<128x128xbf16>
    %63 = arith.truncf %61 : vector<128x128xf32> to vector<128x128xbf16>
    %cst_28 = arith.constant dense<0.000000e+00> : vector<128x128xf32>
    %64 = tpu.matmul %63, %62, %cst_28 {dimension_numbers = #tpu.dot_dimension_numbers<[1], [0], [0], [1], [0, 0, 1, 1], [], []>} : vector<128x128xbf16>, vector<128x128xbf16>, vector<128x128xf32> -> vector<128x128xf32>
    %cst_29 = arith.constant 9.99999968E-21 : f32
    %65 = vector.broadcast %cst_29 : f32 to vector<128x128xf32>
    %66 = arith.addf %64, %65 : vector<128x128xf32>
    %67 = tpu.reciprocal %66 {approx = true} : vector<128x128xf32> -> vector<128x128xf32>
    %68 = arith.mulf %61, %67 : vector<128x128xf32>
    %c1120 = arith.constant 1120 : index
    %c0_30 = arith.constant 0 : index
    %69 = vector.load %arg2[%c1120, %c0_30] : memref<2416x128xbf16, #tpu.memory_space<vmem>>, vector<128x128xbf16>
    %70 = arith.truncf %49 : vector<128x128xf32> to vector<128x128xbf16>
    %cst_31 = arith.constant dense<0.000000e+00> : vector<128x128xf32>
    %71 = tpu.matmul %70, %69, %cst_31 {dimension_numbers = #tpu.dot_dimension_numbers<[1], [0], [0], [1], [0, 0, 1, 1], [], []>} : vector<128x128xbf16>, vector<128x128xbf16>, vector<128x128xf32> -> vector<128x128xf32>
    %c1248 = arith.constant 1248 : index
    %c0_32 = arith.constant 0 : index
    %72 = vector.load %arg2[%c1248, %c0_32] : memref<2416x128xbf16, #tpu.memory_space<vmem>>, vector<1x128xbf16>
    %73 = arith.extf %72 : vector<1x128xbf16> to vector<1x128xf32>
    %74 = vector.broadcast %73 : vector<1x128xf32> to vector<128x128xf32>
    %75 = arith.addf %71, %74 : vector<128x128xf32>
    %cst_33 = arith.constant dense<0xFF800000> : vector<128xf32>
    %76 = vector.multi_reduction <maximumf>, %75, %cst_33 [1] : vector<128x128xf32> to vector<128xf32>
    %77 = vector.shape_cast %76 : vector<128xf32> to vector<128x1xf32>
    %78 = vector.broadcast %77 : vector<128x1xf32> to vector<128x128xf32>
    %79 = arith.subf %75, %78 : vector<128x128xf32>
    %80 = math.exp %79 : vector<128x128xf32>
    %c1264 = arith.constant 1264 : index
    %c0_34 = arith.constant 0 : index
    %81 = vector.load %arg2[%c1264, %c0_34] : memref<2416x128xbf16, #tpu.memory_space<vmem>>, vector<128x128xbf16>
    %82 = arith.truncf %80 : vector<128x128xf32> to vector<128x128xbf16>
    %cst_35 = arith.constant dense<0.000000e+00> : vector<128x128xf32>
    %83 = tpu.matmul %82, %81, %cst_35 {dimension_numbers = #tpu.dot_dimension_numbers<[1], [0], [0], [1], [0, 0, 1, 1], [], []>} : vector<128x128xbf16>, vector<128x128xbf16>, vector<128x128xf32> -> vector<128x128xf32>
    %cst_36 = arith.constant 9.99999968E-21 : f32
    %84 = vector.broadcast %cst_36 : f32 to vector<128x128xf32>
    %85 = arith.addf %83, %84 : vector<128x128xf32>
    %86 = tpu.reciprocal %85 {approx = true} : vector<128x128xf32> -> vector<128x128xf32>
    %87 = arith.mulf %80, %86 : vector<128x128xf32>
    %c1392 = arith.constant 1392 : index
    %c0_37 = arith.constant 0 : index
    %88 = vector.load %arg2[%c1392, %c0_37] : memref<2416x128xbf16, #tpu.memory_space<vmem>>, vector<128x128xbf16>
    %89 = arith.truncf %87 : vector<128x128xf32> to vector<128x128xbf16>
    %cst_38 = arith.constant dense<0.000000e+00> : vector<128x128xf32>
    %90 = tpu.matmul %89, %88, %cst_38 {dimension_numbers = #tpu.dot_dimension_numbers<[1], [0], [0], [1], [0, 0, 1, 1], [], []>} : vector<128x128xbf16>, vector<128x128xbf16>, vector<128x128xf32> -> vector<128x128xf32>
    %c2032 = arith.constant 2032 : index
    %c0_39 = arith.constant 0 : index
    %91 = vector.load %arg2[%c2032, %c0_39] : memref<2416x128xbf16, #tpu.memory_space<vmem>>, vector<128x128xbf16>
    %92 = arith.truncf %18 : vector<128x128xf32> to vector<128x128xbf16>
    %cst_40 = arith.constant dense<0.000000e+00> : vector<128x128xf32>
    %93 = tpu.matmul %92, %91, %cst_40 {dimension_numbers = #tpu.dot_dimension_numbers<[1], [0], [0], [1], [0, 0, 1, 1], [], []>} : vector<128x128xbf16>, vector<128x128xbf16>, vector<128x128xf32> -> vector<128x128xf32>
    %c2160 = arith.constant 2160 : index
    %c0_41 = arith.constant 0 : index
    %94 = vector.load %arg2[%c2160, %c0_41] : memref<2416x128xbf16, #tpu.memory_space<vmem>>, vector<1x128xbf16>
    %95 = arith.extf %94 : vector<1x128xbf16> to vector<1x128xf32>
    %96 = vector.broadcast %95 : vector<1x128xf32> to vector<128x128xf32>
    %97 = arith.addf %93, %96 : vector<128x128xf32>
    %98 = vector.extract_strided_slice %97 {offsets = [0, 0], sizes = [128, 32], strides = [1, 1]} : vector<128x128xf32> to vector<128x32xf32>
    %cst_42 = arith.constant 0.000000e+00 : f32
    %99 = vector.broadcast %cst_42 : f32 to vector<128x32xf32>
    %100 = arith.addf %99, %98 : vector<128x32xf32>
    %101 = vector.extract_strided_slice %97 {offsets = [0, 32], sizes = [128, 32], strides = [1, 1]} : vector<128x128xf32> to vector<128x32xf32>
    %102 = arith.addf %100, %101 : vector<128x32xf32>
    %103 = vector.extract_strided_slice %97 {offsets = [0, 64], sizes = [128, 32], strides = [1, 1]} : vector<128x128xf32> to vector<128x32xf32>
    %104 = arith.addf %102, %103 : vector<128x32xf32>
    %105 = vector.extract_strided_slice %97 {offsets = [0, 96], sizes = [128, 32], strides = [1, 1]} : vector<128x128xf32> to vector<128x32xf32>
    %106 = arith.addf %104, %105 : vector<128x32xf32>
    %cst_43 = arith.constant 2.500000e-01 : f32
    %107 = vector.broadcast %cst_43 : f32 to vector<128x32xf32>
    %108 = arith.mulf %106, %107 : vector<128x32xf32>
    %cst_44 = arith.constant 0.000000e+00 : f32
    %109 = vector.broadcast %cst_44 : f32 to vector<128x32xf32>
    %110 = arith.maximumf %108, %109 : vector<128x32xf32>
    %c2176 = arith.constant 2176 : index
    %c0_45 = arith.constant 0 : index
    %111 = vector.load %arg2[%c2176, %c0_45] : memref<2416x128xbf16, #tpu.memory_space<vmem>>, vector<32x128xbf16>
    %112 = arith.truncf %110 : vector<128x32xf32> to vector<128x32xbf16>
    %cst_46 = arith.constant dense<0.000000e+00> : vector<128x128xf32>
    %113 = tpu.matmul %112, %111, %cst_46 {dimension_numbers = #tpu.dot_dimension_numbers<[1], [0], [0], [1], [0, 0, 1, 1], [], []>} : vector<128x32xbf16>, vector<32x128xbf16>, vector<128x128xf32> -> vector<128x128xf32>
    %c2208 = arith.constant 2208 : index
    %c0_47 = arith.constant 0 : index
    %114 = vector.load %arg2[%c2208, %c0_47] : memref<2416x128xbf16, #tpu.memory_space<vmem>>, vector<1x128xbf16>
    %115 = arith.extf %114 : vector<1x128xbf16> to vector<1x128xf32>
    %116 = vector.broadcast %115 : vector<1x128xf32> to vector<128x128xf32>
    %117 = arith.addf %113, %116 : vector<128x128xf32>
    %c2352 = arith.constant 2352 : index
    %c0_48 = arith.constant 0 : index
    %118 = vector.load %arg2[%c2352, %c0_48] : memref<2416x128xbf16, #tpu.memory_space<vmem>>, vector<1x128xbf16>
    %119 = arith.extf %118 : vector<1x128xbf16> to vector<1x128xf32>
    %c1520 = arith.constant 1520 : index
    %c0_49 = arith.constant 0 : index
    %120 = vector.load %arg2[%c1520, %c0_49] : memref<2416x128xbf16, #tpu.memory_space<vmem>>, vector<128x128xbf16>
    %121 = arith.truncf %68 : vector<128x128xf32> to vector<128x128xbf16>
    %cst_50 = arith.constant dense<0.000000e+00> : vector<128x128xf32>
    %122 = tpu.matmul %121, %120, %cst_50 {dimension_numbers = #tpu.dot_dimension_numbers<[1], [0], [0], [1], [0, 0, 1, 1], [], []>} : vector<128x128xbf16>, vector<128x128xbf16>, vector<128x128xf32> -> vector<128x128xf32>
    %123 = arith.mulf %122, %117 : vector<128x128xf32>
    %124 = vector.extract_strided_slice %123 {offsets = [0, 0], sizes = [128, 32], strides = [1, 1]} : vector<128x128xf32> to vector<128x32xf32>
    %cst_51 = arith.constant 0.000000e+00 : f32
    %125 = vector.broadcast %cst_51 : f32 to vector<128x32xf32>
    %126 = arith.addf %125, %124 : vector<128x32xf32>
    %127 = vector.extract_strided_slice %123 {offsets = [0, 32], sizes = [128, 32], strides = [1, 1]} : vector<128x128xf32> to vector<128x32xf32>
    %128 = arith.addf %126, %127 : vector<128x32xf32>
    %129 = vector.extract_strided_slice %123 {offsets = [0, 64], sizes = [128, 32], strides = [1, 1]} : vector<128x128xf32> to vector<128x32xf32>
    %130 = arith.addf %128, %129 : vector<128x32xf32>
    %131 = vector.extract_strided_slice %123 {offsets = [0, 96], sizes = [128, 32], strides = [1, 1]} : vector<128x128xf32> to vector<128x32xf32>
    %132 = arith.addf %130, %131 : vector<128x32xf32>
    %cst_52 = arith.constant 0.000000e+00 : f32
    %133 = vector.broadcast %cst_52 : f32 to vector<128x32xf32>
    %134 = arith.maximumf %132, %133 : vector<128x32xf32>
    %c2224 = arith.constant 2224 : index
    %c0_53 = arith.constant 0 : index
    %135 = vector.load %arg2[%c2224, %c0_53] : memref<2416x128xbf16, #tpu.memory_space<vmem>>, vector<32x128xbf16>
    %136 = arith.truncf %134 : vector<128x32xf32> to vector<128x32xbf16>
    %cst_54 = arith.constant dense<0.000000e+00> : vector<128x128xf32>
    %137 = tpu.matmul %136, %135, %cst_54 {dimension_numbers = #tpu.dot_dimension_numbers<[1], [0], [0], [1], [0, 0, 1, 1], [], []>} : vector<128x32xbf16>, vector<32x128xbf16>, vector<128x128xf32> -> vector<128x128xf32>
    %138 = vector.broadcast %119 : vector<1x128xf32> to vector<128x128xf32>
    %139 = arith.addf %138, %137 : vector<128x128xf32>
    %c1648 = arith.constant 1648 : index
    %c0_55 = arith.constant 0 : index
    %140 = vector.load %arg2[%c1648, %c0_55] : memref<2416x128xbf16, #tpu.memory_space<vmem>>, vector<128x128xbf16>
    %141 = arith.truncf %68 : vector<128x128xf32> to vector<128x128xbf16>
    %cst_56 = arith.constant dense<0.000000e+00> : vector<128x128xf32>
    %142 = tpu.matmul %141, %140, %cst_56 {dimension_numbers = #tpu.dot_dimension_numbers<[1], [0], [0], [1], [0, 0, 1, 1], [], []>} : vector<128x128xbf16>, vector<128x128xbf16>, vector<128x128xf32> -> vector<128x128xf32>
    %143 = arith.mulf %142, %117 : vector<128x128xf32>
    %144 = vector.extract_strided_slice %143 {offsets = [0, 0], sizes = [128, 32], strides = [1, 1]} : vector<128x128xf32> to vector<128x32xf32>
    %cst_57 = arith.constant 0.000000e+00 : f32
    %145 = vector.broadcast %cst_57 : f32 to vector<128x32xf32>
    %146 = arith.addf %145, %144 : vector<128x32xf32>
    %147 = vector.extract_strided_slice %143 {offsets = [0, 32], sizes = [128, 32], strides = [1, 1]} : vector<128x128xf32> to vector<128x32xf32>
    %148 = arith.addf %146, %147 : vector<128x32xf32>
    %149 = vector.extract_strided_slice %143 {offsets = [0, 64], sizes = [128, 32], strides = [1, 1]} : vector<128x128xf32> to vector<128x32xf32>
    %150 = arith.addf %148, %149 : vector<128x32xf32>
    %151 = vector.extract_strided_slice %143 {offsets = [0, 96], sizes = [128, 32], strides = [1, 1]} : vector<128x128xf32> to vector<128x32xf32>
    %152 = arith.addf %150, %151 : vector<128x32xf32>
    %cst_58 = arith.constant 0.000000e+00 : f32
    %153 = vector.broadcast %cst_58 : f32 to vector<128x32xf32>
    %154 = arith.maximumf %152, %153 : vector<128x32xf32>
    %c2256 = arith.constant 2256 : index
    %c0_59 = arith.constant 0 : index
    %155 = vector.load %arg2[%c2256, %c0_59] : memref<2416x128xbf16, #tpu.memory_space<vmem>>, vector<32x128xbf16>
    %156 = arith.truncf %154 : vector<128x32xf32> to vector<128x32xbf16>
    %cst_60 = arith.constant dense<0.000000e+00> : vector<128x128xf32>
    %157 = tpu.matmul %156, %155, %cst_60 {dimension_numbers = #tpu.dot_dimension_numbers<[1], [0], [0], [1], [0, 0, 1, 1], [], []>} : vector<128x32xbf16>, vector<32x128xbf16>, vector<128x128xf32> -> vector<128x128xf32>
    %158 = arith.addf %139, %157 : vector<128x128xf32>
    %c1776 = arith.constant 1776 : index
    %c0_61 = arith.constant 0 : index
    %159 = vector.load %arg2[%c1776, %c0_61] : memref<2416x128xbf16, #tpu.memory_space<vmem>>, vector<128x128xbf16>
    %160 = arith.truncf %68 : vector<128x128xf32> to vector<128x128xbf16>
    %cst_62 = arith.constant dense<0.000000e+00> : vector<128x128xf32>
    %161 = tpu.matmul %160, %159, %cst_62 {dimension_numbers = #tpu.dot_dimension_numbers<[1], [0], [0], [1], [0, 0, 1, 1], [], []>} : vector<128x128xbf16>, vector<128x128xbf16>, vector<128x128xf32> -> vector<128x128xf32>
    %162 = arith.mulf %161, %117 : vector<128x128xf32>
    %163 = vector.extract_strided_slice %162 {offsets = [0, 0], sizes = [128, 32], strides = [1, 1]} : vector<128x128xf32> to vector<128x32xf32>
    %cst_63 = arith.constant 0.000000e+00 : f32
    %164 = vector.broadcast %cst_63 : f32 to vector<128x32xf32>
    %165 = arith.addf %164, %163 : vector<128x32xf32>
    %166 = vector.extract_strided_slice %162 {offsets = [0, 32], sizes = [128, 32], strides = [1, 1]} : vector<128x128xf32> to vector<128x32xf32>
    %167 = arith.addf %165, %166 : vector<128x32xf32>
    %168 = vector.extract_strided_slice %162 {offsets = [0, 64], sizes = [128, 32], strides = [1, 1]} : vector<128x128xf32> to vector<128x32xf32>
    %169 = arith.addf %167, %168 : vector<128x32xf32>
    %170 = vector.extract_strided_slice %162 {offsets = [0, 96], sizes = [128, 32], strides = [1, 1]} : vector<128x128xf32> to vector<128x32xf32>
    %171 = arith.addf %169, %170 : vector<128x32xf32>
    %cst_64 = arith.constant 0.000000e+00 : f32
    %172 = vector.broadcast %cst_64 : f32 to vector<128x32xf32>
    %173 = arith.maximumf %171, %172 : vector<128x32xf32>
    %c2288 = arith.constant 2288 : index
    %c0_65 = arith.constant 0 : index
    %174 = vector.load %arg2[%c2288, %c0_65] : memref<2416x128xbf16, #tpu.memory_space<vmem>>, vector<32x128xbf16>
    %175 = arith.truncf %173 : vector<128x32xf32> to vector<128x32xbf16>
    %cst_66 = arith.constant dense<0.000000e+00> : vector<128x128xf32>
    %176 = tpu.matmul %175, %174, %cst_66 {dimension_numbers = #tpu.dot_dimension_numbers<[1], [0], [0], [1], [0, 0, 1, 1], [], []>} : vector<128x32xbf16>, vector<32x128xbf16>, vector<128x128xf32> -> vector<128x128xf32>
    %177 = arith.addf %158, %176 : vector<128x128xf32>
    %c1904 = arith.constant 1904 : index
    %c0_67 = arith.constant 0 : index
    %178 = vector.load %arg2[%c1904, %c0_67] : memref<2416x128xbf16, #tpu.memory_space<vmem>>, vector<128x128xbf16>
    %179 = arith.truncf %68 : vector<128x128xf32> to vector<128x128xbf16>
    %cst_68 = arith.constant dense<0.000000e+00> : vector<128x128xf32>
    %180 = tpu.matmul %179, %178, %cst_68 {dimension_numbers = #tpu.dot_dimension_numbers<[1], [0], [0], [1], [0, 0, 1, 1], [], []>} : vector<128x128xbf16>, vector<128x128xbf16>, vector<128x128xf32> -> vector<128x128xf32>
    %181 = arith.mulf %180, %117 : vector<128x128xf32>
    %182 = vector.extract_strided_slice %181 {offsets = [0, 0], sizes = [128, 32], strides = [1, 1]} : vector<128x128xf32> to vector<128x32xf32>
    %cst_69 = arith.constant 0.000000e+00 : f32
    %183 = vector.broadcast %cst_69 : f32 to vector<128x32xf32>
    %184 = arith.addf %183, %182 : vector<128x32xf32>
    %185 = vector.extract_strided_slice %181 {offsets = [0, 32], sizes = [128, 32], strides = [1, 1]} : vector<128x128xf32> to vector<128x32xf32>
    %186 = arith.addf %184, %185 : vector<128x32xf32>
    %187 = vector.extract_strided_slice %181 {offsets = [0, 64], sizes = [128, 32], strides = [1, 1]} : vector<128x128xf32> to vector<128x32xf32>
    %188 = arith.addf %186, %187 : vector<128x32xf32>
    %189 = vector.extract_strided_slice %181 {offsets = [0, 96], sizes = [128, 32], strides = [1, 1]} : vector<128x128xf32> to vector<128x32xf32>
    %190 = arith.addf %188, %189 : vector<128x32xf32>
    %cst_70 = arith.constant 0.000000e+00 : f32
    %191 = vector.broadcast %cst_70 : f32 to vector<128x32xf32>
    %192 = arith.maximumf %190, %191 : vector<128x32xf32>
    %c2320 = arith.constant 2320 : index
    %c0_71 = arith.constant 0 : index
    %193 = vector.load %arg2[%c2320, %c0_71] : memref<2416x128xbf16, #tpu.memory_space<vmem>>, vector<32x128xbf16>
    %194 = arith.truncf %192 : vector<128x32xf32> to vector<128x32xbf16>
    %cst_72 = arith.constant dense<0.000000e+00> : vector<128x128xf32>
    %195 = tpu.matmul %194, %193, %cst_72 {dimension_numbers = #tpu.dot_dimension_numbers<[1], [0], [0], [1], [0, 0, 1, 1], [], []>} : vector<128x32xbf16>, vector<32x128xbf16>, vector<128x128xf32> -> vector<128x128xf32>
    %196 = arith.addf %177, %195 : vector<128x128xf32>
    %197 = arith.mulf %90, %196 : vector<128x128xf32>
    %198 = vector.extract_strided_slice %197 {offsets = [0, 0], sizes = [128, 32], strides = [1, 1]} : vector<128x128xf32> to vector<128x32xf32>
    %cst_73 = arith.constant 0.000000e+00 : f32
    %199 = vector.broadcast %cst_73 : f32 to vector<128x32xf32>
    %200 = arith.addf %199, %198 : vector<128x32xf32>
    %201 = vector.extract_strided_slice %197 {offsets = [0, 32], sizes = [128, 32], strides = [1, 1]} : vector<128x128xf32> to vector<128x32xf32>
    %202 = arith.addf %200, %201 : vector<128x32xf32>
    %203 = vector.extract_strided_slice %197 {offsets = [0, 64], sizes = [128, 32], strides = [1, 1]} : vector<128x128xf32> to vector<128x32xf32>
    %204 = arith.addf %202, %203 : vector<128x32xf32>
    %205 = vector.extract_strided_slice %197 {offsets = [0, 96], sizes = [128, 32], strides = [1, 1]} : vector<128x128xf32> to vector<128x32xf32>
    %206 = arith.addf %204, %205 : vector<128x32xf32>
    %cst_74 = arith.constant 0.000000e+00 : f32
    %207 = vector.broadcast %cst_74 : f32 to vector<128x32xf32>
    %208 = arith.maximumf %206, %207 : vector<128x32xf32>
    %c2368 = arith.constant 2368 : index
    %c0_75 = arith.constant 0 : index
    %209 = vector.load %arg2[%c2368, %c0_75] : memref<2416x128xbf16, #tpu.memory_space<vmem>>, vector<32x128xbf16>
    %210 = arith.truncf %208 : vector<128x32xf32> to vector<128x32xbf16>
    %cst_76 = arith.constant dense<0.000000e+00> : vector<128x128xf32>
    %211 = tpu.matmul %210, %209, %cst_76 {dimension_numbers = #tpu.dot_dimension_numbers<[1], [0], [0], [1], [0, 0, 1, 1], [], []>} : vector<128x32xbf16>, vector<32x128xbf16>, vector<128x128xf32> -> vector<128x128xf32>
    %c2400 = arith.constant 2400 : index
    %c0_77 = arith.constant 0 : index
    %212 = vector.load %arg2[%c2400, %c0_77] : memref<2416x128xbf16, #tpu.memory_space<vmem>>, vector<1x128xbf16>
    %213 = arith.extf %212 : vector<1x128xbf16> to vector<1x128xf32>
    %214 = vector.broadcast %213 : vector<1x128xf32> to vector<128x128xf32>
    %215 = arith.addf %211, %214 : vector<128x128xf32>
    %216 = tpu.iota {dimensions = array<i32: 1>} : vector<128x128xi32>
    %217 = math.tanh %215 : vector<128x128xf32>
    %cst_78 = arith.constant 1.000000e+00 : f32
    %218 = vector.broadcast %cst_78 : f32 to vector<128x128xf32>
    %219 = arith.mulf %217, %218 : vector<128x128xf32>
    %cst_79 = arith.constant -2.000000e+01 : f32
    %cst_80 = arith.constant 2.000000e+00 : f32
    %220 = vector.broadcast %cst_79 : f32 to vector<128x128xf32>
    %221 = arith.maximumf %220, %215 : vector<128x128xf32>
    %222 = vector.broadcast %cst_80 : f32 to vector<128x128xf32>
    %223 = arith.minimumf %222, %221 : vector<128x128xf32>
    %c8_i32 = arith.constant 8 : i32
    %224 = vector.broadcast %c8_i32 : i32 to vector<128x128xi32>
    %225 = arith.cmpi slt, %216, %224 : vector<128x128xi32>
    %c16_i32 = arith.constant 16 : i32
    %226 = vector.broadcast %c16_i32 : i32 to vector<128x128xi32>
    %227 = arith.cmpi slt, %216, %226 : vector<128x128xi32>
    %c24_i32 = arith.constant 24 : i32
    %228 = vector.broadcast %c24_i32 : i32 to vector<128x128xi32>
    %229 = arith.cmpi slt, %216, %228 : vector<128x128xi32>
    %cst_81 = arith.constant 0.000000e+00 : f32
    %230 = vector.broadcast %cst_81 : f32 to vector<128x128xf32>
    %231 = arith.select %229, %223, %230 : vector<128x128xi1>, vector<128x128xf32>
    %232 = arith.select %227, %215, %231 : vector<128x128xi1>, vector<128x128xf32>
    %233 = arith.select %225, %219, %232 : vector<128x128xi1>, vector<128x128xf32>
    %c0_82 = arith.constant 0 : index
    %c0_83 = arith.constant 0 : index
    %234 = vector.load %arg3[%c0_82, %c0_83] : memref<128x128xf32, #tpu.memory_space<vmem>>, vector<128x128xf32>
    tpu.vector_store %arg3[%c0_82, %c0_83], %233 {strides = array<i32>} : memref<128x128xf32, #tpu.memory_space<vmem>>, vector<128x128xf32>,
    return
  }
  func.func @transform_0(%arg0: i32) -> (i32, i32) {
    %c0_i32 = arith.constant 0 : i32
    %c0_i32_0 = arith.constant 0 : i32
    return %arg0, %c0_i32 : i32, i32
  }
  func.func @transform_1(%arg0: i32) -> (i32, i32) {
    %c0_i32 = arith.constant 0 : i32
    %c0_i32_0 = arith.constant 0 : i32
    %c0_i32_1 = arith.constant 0 : i32
    return %c0_i32, %c0_i32_0 : i32, i32
  }
  func.func @transform_2(%arg0: i32) -> (i32, i32) {
    %c0_i32 = arith.constant 0 : i32
    %c0_i32_0 = arith.constant 0 : i32
    return %arg0, %c0_i32 : i32, i32
  }
}

</mosaic_0001>

<llo_original>
// kernel: tpu_custom_call.1
$region0: #{tpu_custom_call.1}
  #allocation0 [shape = 'u32[]', space=smem, size = 0x4, offset = 0x4, fixed_abs, tag = 'smem constant byte address 0x4 - core index']
  #allocation1 [shape = 'u32[144,128]{1,0:T(1,128)}', space=vmem, size = 0x12000, scoped, tag = 'internal scratch']
  %s0 = inlined_call_operand.hbm [shape: f32[256,128], index: 0, kind: input, shape index: {}]
  %s1 = inlined_call_operand.hbm [shape: bf16[2416,128], index: 1, kind: input, shape index: {}]
  %s2 = inlined_call_operand.hbm [shape: f32[256,128], index: 2, kind: output, shape index: {}]
  %s3 = sld [smem:[#allocation0]]
  $region49: #{tpu_custom_call.1} parent=0
    _
  %s5 = ssub.s32 1, %s3
  %s6 = scalar_select 0, %s5, %s3
  $region1: #{tpu_custom_call.1} parent=0
    #allocation2 [shape = 'u8[131072]{0}', space=vmem, size = 0x20000, scoped, tag = 'input window, operand 0']
    #allocation3 [shape = 's32[2]{0}', space=sflag, size = 0x8, scoped, tag = 'scoped memory for tpu_custom_call.1']
    #allocation4 [shape = 's32[2]{0}', space=sflag, size = 0x8, scoped, tag = 'scoped memory for tpu_custom_call.1']
    #allocation5 [shape = 'u8[618496]{0}', space=vmem, size = 0x97000, scoped, tag = 'input window, operand 1, single buffered']
    #allocation6 [shape = 's32[1]{0}', space=sflag, size = 0x4, scoped, tag = 'scoped memory for tpu_custom_call.1']
    #allocation7 [shape = 'u8[131072]{0}', space=vmem, size = 0x20000, scoped, tag = 'output window, operand 0']
    %7 = vsyncpa [#allocation3], 0
    %s8 = scalar_lea.sflag [#allocation3], 1
    %9 = vsyncpa %s8, 0
    %10 = vsyncpa [#allocation6], 0
    %11 = vsyncpa [#allocation4], 0
    %s12 = scalar_lea.sflag [#allocation4], 1
    %13 = vsyncpa %s12, 0
    loop: start=0, step=1, limit=4
    $region2: #{tpu_custom_call.1} parent=1 // loop_pre_header
      _
    $region3: #{tpu_custom_call.1} parent=1 // loop_header
      %s15 = sphi 0, %s19
      %p16 = scmp.ge.s32.totalorder %s15, 4
      %s25 = sphi 0, %s27
      %s28 = sphi 0, %s25
      %s29 = sphi 0, %s28
      %s45 = sphi 0, %s29
      %s49 = sphi 0, %s49
      %s51 = sphi 0, %s49
      %s52 = sphi 0, %s51
      %s66 = sphi 0, %s52
      %s72 = sphi 0, %s74
      %s75 = sphi 0, %s72
      %s76 = sphi 0, %s75
      %s92 = sphi 0, %s76
    $region4: #{tpu_custom_call.1} parent=1 // loop_header_branch
      %18 = sbr.rel (%p16) target = $region8
    $region5: #{tpu_custom_call.1} parent=1 // loop_body
      %s20 = ssub.s32 %s15, 1
      %s21 = ssub.s32 %s15, 2
      %s22 = sadd.s32 %s15, 1
      %s23 = ssub.s32 %s15, %s22
      %p24 = scmp.eq.s32.totalorder %s23, 0
      %s26 = sadd.s32 %s25, 1
      %s27 = scalar_select %p24, %s25, %s26
      %p30 = pneg %p24
      %p31 = scmp.eq.s32.totalorder %s15, 1
      %p32 = por %p30, %p31
      %p33 = scmp.ne.s32.totalorder %s25, %s28
      %p34 = scmp.eq.s32.totalorder %s15, 0
      %p35 = por %p33, %p34
      %p36 = scmp.ne.s32.totalorder %s25, %s28
      %p37 = scmp.eq.s32.totalorder %s20, 1
      %p38 = por %p36, %p37
      %p39 = scmp.ne.s32.totalorder %s28, %s29
      %p40 = scmp.eq.s32.totalorder %s20, 0
      %p41 = por %p39, %p40
      %p42 = scmp.ne.s32.totalorder %s28, %s29
      %p43 = scmp.eq.s32.totalorder %s21, 1
      %p44 = por %p42, %p43
      %p46 = scmp.ne.s32.totalorder %s29, %s45
      %p47 = scmp.eq.s32.totalorder %s21, 0
      %p48 = por %p46, %p47
      %s50 = sadd.s32 %s49, 1
      %p53 = scmp.eq.s32.totalorder %s15, 1
      %p54 = scmp.ne.s32.totalorder %s49, %s51
      %p55 = scmp.eq.s32.totalorder %s15, 0
      %p56 = por %p54, %p55
      %p57 = scmp.ne.s32.totalorder %s49, %s51
      %p58 = scmp.eq.s32.totalorder %s20, 1
      %p59 = por %p57, %p58
      %p60 = scmp.ne.s32.totalorder %s51, %s52
      %p61 = scmp.eq.s32.totalorder %s20, 0
      %p62 = por %p60, %p61
      %p63 = scmp.ne.s32.totalorder %s51, %s52
      %p64 = scmp.eq.s32.totalorder %s21, 1
      %p65 = por %p63, %p64
      %p67 = scmp.ne.s32.totalorder %s52, %s66
      %p68 = scmp.eq.s32.totalorder %s21, 0
      %p69 = por %p67, %p68
      %s70 = ssub.s32 %s15, %s22
      %p71 = scmp.eq.s32.totalorder %s70, 0
      %s73 = sadd.s32 %s72, 1
      %s74 = scalar_select %p71, %s72, %s73
      %p77 = pneg %p71
      %p78 = scmp.eq.s32.totalorder %s15, 1
      %p79 = por %p77, %p78
      %p80 = scmp.ne.s32.totalorder %s72, %s75
      %p81 = scmp.eq.s32.totalorder %s15, 0
      %p82 = por %p80, %p81
      %p83 = scmp.ne.s32.totalorder %s72, %s75
      %p84 = scmp.eq.s32.totalorder %s20, 1
      %p85 = por %p83, %p84
      %p86 = scmp.ne.s32.totalorder %s75, %s76
      %p87 = scmp.eq.s32.totalorder %s20, 0
      %p88 = por %p86, %p87
      %p89 = scmp.ne.s32.totalorder %s75, %s76
      %p90 = scmp.eq.s32.totalorder %s21, 1
      %p91 = por %p89, %p90
      %p93 = scmp.ne.s32.totalorder %s76, %s92
      %p94 = scmp.eq.s32.totalorder %s21, 0
      %p95 = por %p93, %p94
      %p96 = scmp.le.s32.totalorder 1, %s15
      %p97 = scmp.lt.s32.totalorder %s15, 3
      %p98 = pnand %p96, %p97
      %p99 = pneg %p98
      // Predicated region
      $region9: #{tpu_custom_call.1} parent=5 // pred_check
        _
      $region10: #{tpu_custom_call.1} parent=5 // pred_check_branch
        %101 = sbr.rel (%p98) target = $region12
      $region11: #{tpu_custom_call.1} parent=5 // pred_region
        %s102 = ssub.s32 %s15, 1
        // Predicated region
        $region13: #{tpu_custom_call.1} parent=11 // pred_check
          %p103 = pneg %p62
        $region14: #{tpu_custom_call.1} parent=11 // pred_check_branch
          %105 = sbr.rel (%p103) target = $region16
        $region15: #{tpu_custom_call.1} parent=11 // pred_region
          %s107 = ssub.s32 19328, 19328
          %108 = vsyncadd [#allocation6], %s107
          %s109 = sshll.u32 [#allocation5], 4
          %s110 = int_to_ptr.vmem [resolvable:$true] %s109
          %115 = dma.hbm_to_vmem [thread:$0]  %s1, 19328, %s110, [#allocation6], 64, 64, 4
        $region16: #{tpu_custom_call.1} parent=11 // pred_fallthru
          _
      $region12: #{tpu_custom_call.1} parent=5 // pred_fallthru
        _
      %p116 = scmp.lt.s32.totalorder %s15, 2
      // Predicated region
      $region17: #{tpu_custom_call.1} parent=5 // pred_check
        %p117 = pneg %p116
      $region18: #{tpu_custom_call.1} parent=5 // pred_check_branch
        %119 = sbr.rel (%p117) target = $region20
      $region19: #{tpu_custom_call.1} parent=5 // pred_region
        // Predicated region
        $region21: #{tpu_custom_call.1} parent=19 // pred_check
          %p120 = pneg %p35
        $region22: #{tpu_custom_call.1} parent=19 // pred_check_branch
          %122 = sbr.rel (%p120) target = $region24
        $region23: #{tpu_custom_call.1} parent=19 // pred_region
          %s123 = sand.u32 %s25, 1
          %s124 = scalar_lea.sflag [#allocation3], %s123
          %s125 = sand.u32 %s25, 1
          %s126 = smul.addr %s125, 128
          %s127 = scalar_lea.vmem [#allocation2], %s126
          %s128 = smul.u32 16, %s15
          %s130 = ssub.s32 2048, 2048
          %131 = vsyncadd %s124, %s130
          %s132 = smul.addr %s128, 128
          %s133 = scalar_lea.hbm %s0, %s132
          %s134 = sshll.u32 %s127, 4
          %s135 = int_to_ptr.vmem [resolvable:$true] %s134
          %140 = dma.hbm_to_vmem [thread:$0]  %s133, 2048, %s135, %s124, 128, 128, 8
        $region24: #{tpu_custom_call.1} parent=19 // pred_fallthru
          _
      $region20: #{tpu_custom_call.1} parent=5 // pred_fallthru
        _
      %p141 = scmp.le.s32.totalorder 1, %s15
      %p142 = scmp.lt.s32.totalorder %s15, 3
      %p143 = pnand %p141, %p142
      %p144 = pneg %p143
      // Predicated region
      $region25: #{tpu_custom_call.1} parent=5 // pred_check
        _
      $region26: #{tpu_custom_call.1} parent=5 // pred_check_branch
        %146 = sbr.rel (%p143) target = $region28
      $region27: #{tpu_custom_call.1} parent=5 // pred_region
        %s147 = ssub.s32 %s15, 1
        %s148 = sand.u32 %s28, 1
        %s149 = scalar_lea.sflag [#allocation3], %s148
        %s150 = sand.u32 %s28, 1
        %s151 = smul.addr %s150, 128
        %s152 = scalar_lea.vmem [#allocation2], %s151
        // Predicated region
        $region29: #{tpu_custom_call.1} parent=27 // pred_check
          %p153 = pneg %p41
        $region30: #{tpu_custom_call.1} parent=27 // pred_check_branch
          %155 = sbr.rel (%p153) target = $region32
        $region31: #{tpu_custom_call.1} parent=27 // pred_region
          %156 = dma.done %s149, 2048
        $region32: #{tpu_custom_call.1} parent=27 // pred_fallthru
          _
        // Predicated region
        $region33: #{tpu_custom_call.1} parent=27 // pred_check
          %p157 = pneg %p62
        $region34: #{tpu_custom_call.1} parent=27 // pred_check_branch
          %159 = sbr.rel (%p157) target = $region36
        $region35: #{tpu_custom_call.1} parent=27 // pred_region
          %160 = dma.done [#allocation6], 19328
        $region36: #{tpu_custom_call.1} parent=27 // pred_fallthru
          _
        %s161 = sand.u32 %s28, 1
        %s162 = scalar_lea.sflag [#allocation3], %s161
        %s163 = sand.u32 %s28, 1
        %s164 = smul.addr %s163, 128
        %s165 = scalar_lea.vmem [#allocation2], %s164
        %p166 = pneg %p41
        %p167 = pneg %p38
        %p168 = pneg %p62
        %p169 = pneg %p59
        %p170 = pneg %p88
        %p171 = pneg %p85
        %s172 = sand.u32 %s75, 1
        %s173 = scalar_lea.sflag [#allocation4], %s172
        %s174 = sand.u32 %s75, 1
        %s175 = smul.addr %s174, 128
        %s176 = scalar_lea.vmem [#allocation7], %s175
        %s177 = smul.u32 16, %s20
        %s178 = smul.u32 16, %s20
        %v180 = vld [vmem:[%s152] sm:$0xff]
        %v181 = vld [vmem:[%s152 + $0x8] sm:$0xff]
        %v182 = vld [vmem:[%s152 + $0x10] sm:$0xff]
        %v183 = vld [vmem:[%s152 + $0x18] sm:$0xff]
        %v184 = vld [vmem:[%s152 + $0x20] sm:$0xff]
        %v185 = vld [vmem:[%s152 + $0x28] sm:$0xff]
        %v186 = vld [vmem:[%s152 + $0x30] sm:$0xff]
        %v187 = vld [vmem:[%s152 + $0x38] sm:$0xff]
        %v188 = vld [vmem:[%s152 + $0x40] sm:$0xff]
        %v189 = vld [vmem:[%s152 + $0x48] sm:$0xff]
        %v190 = vld [vmem:[%s152 + $0x50] sm:$0xff]
        %v191 = vld [vmem:[%s152 + $0x58] sm:$0xff]
        %v192 = vld [vmem:[%s152 + $0x60] sm:$0xff]
        %v193 = vld [vmem:[%s152 + $0x68] sm:$0xff]
        %v194 = vld [vmem:[%s152 + $0x70] sm:$0xff]
        %v195 = vld [vmem:[%s152 + $0x78] sm:$0xff]
        %v196 = vld [vmem:[#allocation5] sm:$0xf]
        %v197 = vld [vmem:[#allocation5 + $0x4] sm:$0xf]
        %v198 = vld [vmem:[#allocation5 + $0x8] sm:$0xf]
        %v199 = vld [vmem:[#allocation5 + $0xc] sm:$0xf]
        %v200 = vld [vmem:[#allocation5 + $0x10] sm:$0xf]
        %v201 = vld [vmem:[#allocation5 + $0x14] sm:$0xf]
        %v202 = vld [vmem:[#allocation5 + $0x18] sm:$0xf]
        %v203 = vld [vmem:[#allocation5 + $0x1c] sm:$0xf]
        %v204 = vld [vmem:[#allocation5 + $0x20] sm:$0xf]
        %v205 = vld [vmem:[#allocation5 + $0x24] sm:$0xf]
        %v206 = vld [vmem:[#allocation5 + $0x28] sm:$0xf]
        %v207 = vld [vmem:[#allocation5 + $0x2c] sm:$0xf]
        %v208 = vld [vmem:[#allocation5 + $0x30] sm:$0xf]
        %v209 = vld [vmem:[#allocation5 + $0x34] sm:$0xf]
        %v210 = vld [vmem:[#allocation5 + $0x38] sm:$0xf]
        %v211 = vld [vmem:[#allocation5 + $0x3c] sm:$0xf]
        %v212 = vpack.c.bf16 %v181, %v180
        %v213 = vpack.c.bf16 %v183, %v182
        %v214 = vpack.c.bf16 %v185, %v184
        %v215 = vpack.c.bf16 %v187, %v186
        %v216 = vpack.c.bf16 %v189, %v188
        %v217 = vpack.c.bf16 %v191, %v190
        %v218 = vpack.c.bf16 %v193, %v192
        %v219 = vpack.c.bf16 %v195, %v194
        %v220 = vld [vmem:[#allocation5 + $0x40] sm:$0x1]
        %v221 = vunpack.c.l.bf16 %v220
        %v222 = vlaneseq
        %v223 = vshrl.u32 %v222, 7
        %v224 = vsub.s32 0, %v223
        %v225 = vrot.slane %v221, %v224
        %v242 = vunpack.c.l.b16 %v196
        %v243 = vunpack.c.l.b16 %v197
        %v244 = vunpack.c.l.b16 %v198
        %v245 = vunpack.c.l.b16 %v199
        %v246 = vunpack.c.l.b16 %v200
        %v247 = vunpack.c.l.b16 %v201
        %v248 = vunpack.c.l.b16 %v202
        %v249 = vunpack.c.l.b16 %v203
        %v250 = vunpack.c.l.b16 %v204
        %v251 = vunpack.c.l.b16 %v205
        %v252 = vunpack.c.l.b16 %v206
        %v253 = vunpack.c.l.b16 %v207
        %v254 = vunpack.c.l.b16 %v208
        %v255 = vunpack.c.l.b16 %v209
        %v256 = vunpack.c.l.b16 %v210
        %v257 = vunpack.c.l.b16 %v211
        %v258 = vpack.c.b16 %v243, %v242
        %v259 = vpack.c.b16 %v245, %v244
        %v260 = vpack.c.b16 %v247, %v246
        %v261 = vpack.c.b16 %v249, %v248
        %v262 = vpack.c.b16 %v251, %v250
        %v263 = vpack.c.b16 %v253, %v252
        %v264 = vpack.c.b16 %v255, %v254
        %v265 = vpack.c.b16 %v257, %v256
        %274 = vmatprep.subr.bf16.mxu0 0
        %275 = vmatpush1.bf16.msra.mxu0 %v265
        %276 = vmatprep.subr.bf16.mxu0 0
        %277 = vmatpush1.bf16.msra.mxu0 %v264
        %278 = vmatprep.subr.bf16.mxu0 0
        %279 = vmatpush1.bf16.msra.mxu0 %v263
        %280 = vmatprep.subr.bf16.mxu0 0
        %281 = vmatpush1.bf16.msra.mxu0 %v262
        %282 = vmatprep.subr.bf16.mxu0 0
        %283 = vmatpush1.bf16.msra.mxu0 %v261
        %284 = vmatprep.subr.bf16.mxu0 0
        %285 = vmatpush1.bf16.msra.mxu0 %v260
        %286 = vmatprep.subr.bf16.mxu0 0
        %287 = vmatpush1.bf16.msra.mxu0 %v259
        %288 = vmatprep.subr.bf16.mxu0 0
        %289 = vmatpush1.bf16.msra.mxu0 %v258
        %290 = vmatprep.subr.bf16.mxu0 0
        %291 = vmatpush2.bf16.msra.mxu0 0
        %292 = vmatprep.subr.bf16.mxu0 0
        %293 = vmatpush2.bf16.msra.mxu0 0
        %294 = vmatprep.subr.bf16.mxu0 0
        %295 = vmatpush2.bf16.msra.mxu0 0
        %296 = vmatprep.subr.bf16.mxu0 0
        %297 = vmatpush2.bf16.msra.mxu0 0
        %298 = vmatprep.subr.bf16.mxu0 0
        %299 = vmatpush2.bf16.msra.mxu0 0
        %300 = vmatprep.subr.bf16.mxu0 0
        %301 = vmatpush2.bf16.msra.mxu0 0
        %302 = vmatprep.subr.bf16.mxu0 0
        %303 = vmatpush2.bf16.msra.mxu0 0
        %304 = vmatprep.subr.bf16.mxu0 0
        %305 = vmatpush2.bf16.msra.mxu0 0
        %306 = vmatprep.mubr.bf16.mxu0 0
        %307 = vmatmul.mubr.bf16.gmra.mxu0 %v212
        %v308 = vpop.f32.mrf.mxu0
        %v309 = vadd.f32 %v225, %v308
        %v310 = vpop.f32.mrf.mxu0
        %v311 = vpop.f32.mrf.mxu0
        %v312 = vadd.f32 %v225, %v311
        %v313 = vpop.f32.mrf.mxu0
        %314 = vmatprep.mubr.bf16.mxu0 0
        %315 = vmatmul.mubr.bf16.gmra.mxu0 %v213
        %v316 = vpop.f32.mrf.mxu0
        %v317 = vadd.f32 %v225, %v316
        %v318 = vpop.f32.mrf.mxu0
        %v319 = vpop.f32.mrf.mxu0
        %v320 = vadd.f32 %v225, %v319
        %v321 = vpop.f32.mrf.mxu0
        %322 = vmatprep.mubr.bf16.mxu0 0
        %323 = vmatmul.mubr.bf16.gmra.mxu0 %v214
        %v324 = vpop.f32.mrf.mxu0
        %v325 = vadd.f32 %v225, %v324
        %v326 = vpop.f32.mrf.mxu0
        %v327 = vpop.f32.mrf.mxu0
        %v328 = vadd.f32 %v225, %v327
        %v329 = vpop.f32.mrf.mxu0
        %330 = vmatprep.mubr.bf16.mxu0 0
        %331 = vmatmul.mubr.bf16.gmra.mxu0 %v215
        %v332 = vpop.f32.mrf.mxu0
        %v333 = vadd.f32 %v225, %v332
        %v334 = vpop.f32.mrf.mxu0
        %v335 = vpop.f32.mrf.mxu0
        %v336 = vadd.f32 %v225, %v335
        %v337 = vpop.f32.mrf.mxu0
        %338 = vmatprep.mubr.bf16.mxu0 0
        %339 = vmatmul.mubr.bf16.gmra.mxu0 %v216
        %v340 = vpop.f32.mrf.mxu0
        %v341 = vadd.f32 %v225, %v340
        %v342 = vpop.f32.mrf.mxu0
        %v343 = vpop.f32.mrf.mxu0
        %v344 = vadd.f32 %v225, %v343
        %v345 = vpop.f32.mrf.mxu0
        %346 = vmatprep.mubr.bf16.mxu0 0
        %347 = vmatmul.mubr.bf16.gmra.mxu0 %v217
        %v348 = vpop.f32.mrf.mxu0
        %v349 = vadd.f32 %v225, %v348
        %v350 = vpop.f32.mrf.mxu0
        %v351 = vpop.f32.mrf.mxu0
        %v352 = vadd.f32 %v225, %v351
        %v353 = vpop.f32.mrf.mxu0
        %354 = vmatprep.mubr.bf16.mxu0 0
        %355 = vmatmul.mubr.bf16.gmra.mxu0 %v218
        %v356 = vpop.f32.mrf.mxu0
        %v357 = vadd.f32 %v225, %v356
        %v358 = vpop.f32.mrf.mxu0
        %v359 = vpop.f32.mrf.mxu0
        %v360 = vadd.f32 %v225, %v359
        %v361 = vpop.f32.mrf.mxu0
        %362 = vmatprep.mubr.bf16.mxu0 0
        %363 = vmatmul.mubr.bf16.gmra.mxu0 %v219
        %v364 = vpop.f32.mrf.mxu0
        %v365 = vadd.f32 %v225, %v364
        %v366 = vpop.f32.mrf.mxu0
        %v367 = vpop.f32.mrf.mxu0
        %v368 = vadd.f32 %v225, %v367
        %v369 = vpop.f32.mrf.mxu0
        %370 = vdwg.mxu0
        %v371 = vmax.f32 %v309, 0.0
        %v372 = vmax.f32 %v312, 0.0
        %v373 = vmax.f32 %v317, 0.0
        %v374 = vmax.f32 %v320, 0.0
        %v375 = vmax.f32 %v325, 0.0
        %v376 = vmax.f32 %v328, 0.0
        %v377 = vmax.f32 %v333, 0.0
        %v378 = vmax.f32 %v336, 0.0
        %v379 = vmax.f32 %v341, 0.0
        %v380 = vmax.f32 %v344, 0.0
        %v381 = vmax.f32 %v349, 0.0
        %v382 = vmax.f32 %v352, 0.0
        %v383 = vmax.f32 %v357, 0.0
        %v384 = vmax.f32 %v360, 0.0
        %v385 = vmax.f32 %v365, 0.0
        %v386 = vmax.f32 %v368, 0.0
        %v387 = vld [vmem:[#allocation5 + $0x48] sm:$0xf]
        %v388 = vld [vmem:[#allocation5 + $0x4c] sm:$0xf]
        %v389 = vld [vmem:[#allocation5 + $0x50] sm:$0xf]
        %v390 = vld [vmem:[#allocation5 + $0x54] sm:$0xf]
        %v391 = vld [vmem:[#allocation5 + $0x58] sm:$0xf]
        %v392 = vld [vmem:[#allocation5 + $0x5c] sm:$0xf]
        %v393 = vld [vmem:[#allocation5 + $0x60] sm:$0xf]
        %v394 = vld [vmem:[#allocation5 + $0x64] sm:$0xf]
        %v395 = vld [vmem:[#allocation5 + $0x68] sm:$0xf]
        %v396 = vld [vmem:[#allocation5 + $0x6c] sm:$0xf]
        %v397 = vld [vmem:[#allocation5 + $0x70] sm:$0xf]
        %v398 = vld [vmem:[#allocation5 + $0x74] sm:$0xf]
        %v399 = vld [vmem:[#allocation5 + $0x78] sm:$0xf]
        %v400 = vld [vmem:[#allocation5 + $0x7c] sm:$0xf]
        %v401 = vld [vmem:[#allocation5 + $0x80] sm:$0xf]
        %v402 = vld [vmem:[#allocation5 + $0x84] sm:$0xf]
        %v403 = vpack.c.bf16 %v372, %v371
        %v404 = vpack.c.bf16 %v374, %v373
        %v405 = vpack.c.bf16 %v376, %v375
        %v406 = vpack.c.bf16 %v378, %v377
        %v407 = vpack.c.bf16 %v380, %v379
        %v408 = vpack.c.bf16 %v382, %v381
        %v409 = vpack.c.bf16 %v384, %v383
        %v410 = vpack.c.bf16 %v386, %v385
        %v411 = vld [vmem:[#allocation5 + $0x88] sm:$0x1]
        %v412 = vunpack.c.l.bf16 %v411
        %v413 = vlaneseq
        %v414 = vshrl.u32 %v413, 7
        %v415 = vsub.s32 0, %v414
        %v416 = vrot.slane %v412, %v415
        %v433 = vunpack.c.l.b16 %v387
        %v434 = vunpack.c.l.b16 %v388
        %v435 = vunpack.c.l.b16 %v389
        %v436 = vunpack.c.l.b16 %v390
        %v437 = vunpack.c.l.b16 %v391
        %v438 = vunpack.c.l.b16 %v392
        %v439 = vunpack.c.l.b16 %v393
        %v440 = vunpack.c.l.b16 %v394
        %v441 = vunpack.c.l.b16 %v395
        %v442 = vunpack.c.l.b16 %v396
        %v443 = vunpack.c.l.b16 %v397
        %v444 = vunpack.c.l.b16 %v398
        %v445 = vunpack.c.l.b16 %v399
        %v446 = vunpack.c.l.b16 %v400
        %v447 = vunpack.c.l.b16 %v401
        %v448 = vunpack.c.l.b16 %v402
        %v449 = vpack.c.b16 %v434, %v433
        %v450 = vpack.c.b16 %v436, %v435
        %v451 = vpack.c.b16 %v438, %v437
        %v452 = vpack.c.b16 %v440, %v439
        %v453 = vpack.c.b16 %v442, %v441
        %v454 = vpack.c.b16 %v444, %v443
        %v455 = vpack.c.b16 %v446, %v445
        %v456 = vpack.c.b16 %v448, %v447
        %465 = vmatprep.subr.bf16.mxu0 0
        %466 = vmatpush1.bf16.msra.mxu0 %v456
        %467 = vmatprep.subr.bf16.mxu0 0
        %468 = vmatpush1.bf16.msra.mxu0 %v455
        %469 = vmatprep.subr.bf16.mxu0 0
        %470 = vmatpush1.bf16.msra.mxu0 %v454
        %471 = vmatprep.subr.bf16.mxu0 0
        %472 = vmatpush1.bf16.msra.mxu0 %v453
        %473 = vmatprep.subr.bf16.mxu0 0
        %474 = vmatpush1.bf16.msra.mxu0 %v452
        %475 = vmatprep.subr.bf16.mxu0 0
        %476 = vmatpush1.bf16.msra.mxu0 %v451
        %477 = vmatprep.subr.bf16.mxu0 0
        %478 = vmatpush1.bf16.msra.mxu0 %v450
        %479 = vmatprep.subr.bf16.mxu0 0
        %480 = vmatpush1.bf16.msra.mxu0 %v449
        %481 = vmatprep.subr.bf16.mxu0 0
        %482 = vmatpush2.bf16.msra.mxu0 0
        %483 = vmatprep.subr.bf16.mxu0 0
        %484 = vmatpush2.bf16.msra.mxu0 0
        %485 = vmatprep.subr.bf16.mxu0 0
        %486 = vmatpush2.bf16.msra.mxu0 0
        %487 = vmatprep.subr.bf16.mxu0 0
        %488 = vmatpush2.bf16.msra.mxu0 0
        %489 = vmatprep.subr.bf16.mxu0 0
        %490 = vmatpush2.bf16.msra.mxu0 0
        %491 = vmatprep.subr.bf16.mxu0 0
        %492 = vmatpush2.bf16.msra.mxu0 0
        %493 = vmatprep.subr.bf16.mxu0 0
        %494 = vmatpush2.bf16.msra.mxu0 0
        %495 = vmatprep.subr.bf16.mxu0 0
        %496 = vmatpush2.bf16.msra.mxu0 0
        %497 = vmatprep.mubr.bf16.mxu0 0
        %498 = vmatmul.mubr.bf16.gmra.mxu0 %v403
        %v499 = vpop.f32.mrf.mxu0
        %v500 = vadd.f32 %v416, %v499
        %v501 = vpop.f32.mrf.mxu0
        %v502 = vpop.f32.mrf.mxu0
        %v503 = vadd.f32 %v416, %v502
        %v504 = vpop.f32.mrf.mxu0
        %505 = vmatprep.mubr.bf16.mxu0 0
        %506 = vmatmul.mubr.bf16.gmra.mxu0 %v404
        %v507 = vpop.f32.mrf.mxu0
        %v508 = vadd.f32 %v416, %v507
        %v509 = vpop.f32.mrf.mxu0
        %v510 = vpop.f32.mrf.mxu0
        %v511 = vadd.f32 %v416, %v510
        %v512 = vpop.f32.mrf.mxu0
        %513 = vmatprep.mubr.bf16.mxu0 0
        %514 = vmatmul.mubr.bf16.gmra.mxu0 %v405
        %v515 = vpop.f32.mrf.mxu0
        %v516 = vadd.f32 %v416, %v515
        %v517 = vpop.f32.mrf.mxu0
        %v518 = vpop.f32.mrf.mxu0
        %v519 = vadd.f32 %v416, %v518
        %v520 = vpop.f32.mrf.mxu0
        %521 = vmatprep.mubr.bf16.mxu0 0
        %522 = vmatmul.mubr.bf16.gmra.mxu0 %v406
        %v523 = vpop.f32.mrf.mxu0
        %v524 = vadd.f32 %v416, %v523
        %v525 = vpop.f32.mrf.mxu0
        %v526 = vpop.f32.mrf.mxu0
        %v527 = vadd.f32 %v416, %v526
        %v528 = vpop.f32.mrf.mxu0
        %529 = vmatprep.mubr.bf16.mxu0 0
        %530 = vmatmul.mubr.bf16.gmra.mxu0 %v407
        %v531 = vpop.f32.mrf.mxu0
        %v532 = vadd.f32 %v416, %v531
        %v533 = vpop.f32.mrf.mxu0
        %v534 = vpop.f32.mrf.mxu0
        %v535 = vadd.f32 %v416, %v534
        %v536 = vpop.f32.mrf.mxu0
        %537 = vmatprep.mubr.bf16.mxu0 0
        %538 = vmatmul.mubr.bf16.gmra.mxu0 %v408
        %v539 = vpop.f32.mrf.mxu0
        %v540 = vadd.f32 %v416, %v539
        %v541 = vpop.f32.mrf.mxu0
        %v542 = vpop.f32.mrf.mxu0
        %v543 = vadd.f32 %v416, %v542
        %v544 = vpop.f32.mrf.mxu0
        %545 = vmatprep.mubr.bf16.mxu0 0
        %546 = vmatmul.mubr.bf16.gmra.mxu0 %v409
        %v547 = vpop.f32.mrf.mxu0
        %v548 = vadd.f32 %v416, %v547
        %v549 = vpop.f32.mrf.mxu0
        %v550 = vpop.f32.mrf.mxu0
        %v551 = vadd.f32 %v416, %v550
        %v552 = vpop.f32.mrf.mxu0
        %553 = vmatprep.mubr.bf16.mxu0 0
        %554 = vmatmul.mubr.bf16.gmra.mxu0 %v410
        %v555 = vpop.f32.mrf.mxu0
        %v556 = vadd.f32 %v416, %v555
        %v557 = vpop.f32.mrf.mxu0
        %v558 = vpop.f32.mrf.mxu0
        %v559 = vadd.f32 %v416, %v558
        %v560 = vpop.f32.mrf.mxu0
        %561 = vdwg.mxu0
        %v562 = vmax.f32 %v500, 0.0
        %v563 = vmax.f32 %v503, 0.0
        %v564 = vmax.f32 %v508, 0.0
        %v565 = vmax.f32 %v511, 0.0
        %v566 = vmax.f32 %v516, 0.0
        %v567 = vmax.f32 %v519, 0.0
        %v568 = vmax.f32 %v524, 0.0
        %v569 = vmax.f32 %v527, 0.0
        %v570 = vmax.f32 %v532, 0.0
        %v571 = vmax.f32 %v535, 0.0
        %v572 = vmax.f32 %v540, 0.0
        %v573 = vmax.f32 %v543, 0.0
        %v574 = vmax.f32 %v548, 0.0
        %v575 = vmax.f32 %v551, 0.0
        %v576 = vmax.f32 %v556, 0.0
        %v577 = vmax.f32 %v559, 0.0
        %v578 = vld [vmem:[#allocation5 + $0x90] sm:$0xf]
        %v579 = vld [vmem:[#allocation5 + $0x94] sm:$0xf]
        %v580 = vld [vmem:[#allocation5 + $0x98] sm:$0xf]
        %v581 = vld [vmem:[#allocation5 + $0x9c] sm:$0xf]
        %v582 = vld [vmem:[#allocation5 + $0xa0] sm:$0xf]
        %v583 = vld [vmem:[#allocation5 + $0xa4] sm:$0xf]
        %v584 = vld [vmem:[#allocation5 + $0xa8] sm:$0xf]
        %v585 = vld [vmem:[#allocation5 + $0xac] sm:$0xf]
        %v586 = vld [vmem:[#allocation5 + $0xb0] sm:$0xf]
        %v587 = vld [vmem:[#allocation5 + $0xb4] sm:$0xf]
        %v588 = vld [vmem:[#allocation5 + $0xb8] sm:$0xf]
        %v589 = vld [vmem:[#allocation5 + $0xbc] sm:$0xf]
        %v590 = vld [vmem:[#allocation5 + $0xc0] sm:$0xf]
        %v591 = vld [vmem:[#allocation5 + $0xc4] sm:$0xf]
        %v592 = vld [vmem:[#allocation5 + $0xc8] sm:$0xf]
        %v593 = vld [vmem:[#allocation5 + $0xcc] sm:$0xf]
        %v594 = vpack.c.bf16 %v563, %v562
        %v595 = vpack.c.bf16 %v565, %v564
        %v596 = vpack.c.bf16 %v567, %v566
        %v597 = vpack.c.bf16 %v569, %v568
        %v598 = vpack.c.bf16 %v571, %v570
        %v599 = vpack.c.bf16 %v573, %v572
        %v600 = vpack.c.bf16 %v575, %v574
        %v601 = vpack.c.bf16 %v577, %v576
        %v618 = vunpack.c.l.b16 %v578
        %v619 = vunpack.c.l.b16 %v579
        %v620 = vunpack.c.l.b16 %v580
        %v621 = vunpack.c.l.b16 %v581
        %v622 = vunpack.c.l.b16 %v582
        %v623 = vunpack.c.l.b16 %v583
        %v624 = vunpack.c.l.b16 %v584
        %v625 = vunpack.c.l.b16 %v585
        %v626 = vunpack.c.l.b16 %v586
        %v627 = vunpack.c.l.b16 %v587
        %v628 = vunpack.c.l.b16 %v588
        %v629 = vunpack.c.l.b16 %v589
        %v630 = vunpack.c.l.b16 %v590
        %v631 = vunpack.c.l.b16 %v591
        %v632 = vunpack.c.l.b16 %v592
        %v633 = vunpack.c.l.b16 %v593
        %v634 = vpack.c.b16 %v619, %v618
        %v635 = vpack.c.b16 %v621, %v620
        %v636 = vpack.c.b16 %v623, %v622
        %v637 = vpack.c.b16 %v625, %v624
        %v638 = vpack.c.b16 %v627, %v626
        %v639 = vpack.c.b16 %v629, %v628
        %v640 = vpack.c.b16 %v631, %v630
        %v641 = vpack.c.b16 %v633, %v632
        %650 = vmatprep.subr.bf16.mxu0 0
        %651 = vmatpush1.bf16.msra.mxu0 %v641
        %652 = vmatprep.subr.bf16.mxu0 0
        %653 = vmatpush1.bf16.msra.mxu0 %v640
        %654 = vmatprep.subr.bf16.mxu0 0
        %655 = vmatpush1.bf16.msra.mxu0 %v639
        %656 = vmatprep.subr.bf16.mxu0 0
        %657 = vmatpush1.bf16.msra.mxu0 %v638
        %658 = vmatprep.subr.bf16.mxu0 0
        %659 = vmatpush1.bf16.msra.mxu0 %v637
        %660 = vmatprep.subr.bf16.mxu0 0
        %661 = vmatpush1.bf16.msra.mxu0 %v636
        %662 = vmatprep.subr.bf16.mxu0 0
        %663 = vmatpush1.bf16.msra.mxu0 %v635
        %664 = vmatprep.subr.bf16.mxu0 0
        %665 = vmatpush1.bf16.msra.mxu0 %v634
        %666 = vmatprep.subr.bf16.mxu0 0
        %667 = vmatpush2.bf16.msra.mxu0 0
        %668 = vmatprep.subr.bf16.mxu0 0
        %669 = vmatpush2.bf16.msra.mxu0 0
        %670 = vmatprep.subr.bf16.mxu0 0
        %671 = vmatpush2.bf16.msra.mxu0 0
        %672 = vmatprep.subr.bf16.mxu0 0
        %673 = vmatpush2.bf16.msra.mxu0 0
        %674 = vmatprep.subr.bf16.mxu0 0
        %675 = vmatpush2.bf16.msra.mxu0 0
        %676 = vmatprep.subr.bf16.mxu0 0
        %677 = vmatpush2.bf16.msra.mxu0 0
        %678 = vmatprep.subr.bf16.mxu0 0
        %679 = vmatpush2.bf16.msra.mxu0 0
        %680 = vmatprep.subr.bf16.mxu0 0
        %681 = vmatpush2.bf16.msra.mxu0 0
        %682 = vmatprep.mubr.bf16.mxu0 0
        %683 = vmatmul.mubr.bf16.gmra.mxu0 %v594
        %v684 = vpop.f32.mrf.mxu0
        %v685 = vadd.f32 0.0, %v684
        %v686 = vpop.f32.mrf.mxu0
        %v687 = vpop.f32.mrf.mxu0
        %v688 = vadd.f32 0.0, %v687
        %v689 = vpop.f32.mrf.mxu0
        %690 = vmatprep.mubr.bf16.mxu0 0
        %691 = vmatmul.mubr.bf16.gmra.mxu0 %v595
        %v692 = vpop.f32.mrf.mxu0
        %v693 = vadd.f32 0.0, %v692
        %v694 = vpop.f32.mrf.mxu0
        %v695 = vpop.f32.mrf.mxu0
        %v696 = vadd.f32 0.0, %v695
        %v697 = vpop.f32.mrf.mxu0
        %698 = vmatprep.mubr.bf16.mxu0 0
        %699 = vmatmul.mubr.bf16.gmra.mxu0 %v596
        %v700 = vpop.f32.mrf.mxu0
        %v701 = vadd.f32 0.0, %v700
        %v702 = vpop.f32.mrf.mxu0
        %v703 = vpop.f32.mrf.mxu0
        %v704 = vadd.f32 0.0, %v703
        %v705 = vpop.f32.mrf.mxu0
        %706 = vmatprep.mubr.bf16.mxu0 0
        %707 = vmatmul.mubr.bf16.gmra.mxu0 %v597
        %v708 = vpop.f32.mrf.mxu0
        %v709 = vadd.f32 0.0, %v708
        %v710 = vpop.f32.mrf.mxu0
        %v711 = vpop.f32.mrf.mxu0
        %v712 = vadd.f32 0.0, %v711
        %v713 = vpop.f32.mrf.mxu0
        %714 = vmatprep.mubr.bf16.mxu0 0
        %715 = vmatmul.mubr.bf16.gmra.mxu0 %v598
        %v716 = vpop.f32.mrf.mxu0
        %v717 = vadd.f32 0.0, %v716
        %v718 = vpop.f32.mrf.mxu0
        %v719 = vpop.f32.mrf.mxu0
        %v720 = vadd.f32 0.0, %v719
        %v721 = vpop.f32.mrf.mxu0
        %722 = vmatprep.mubr.bf16.mxu0 0
        %723 = vmatmul.mubr.bf16.gmra.mxu0 %v599
        %v724 = vpop.f32.mrf.mxu0
        %v725 = vadd.f32 0.0, %v724
        %v726 = vpop.f32.mrf.mxu0
        %v727 = vpop.f32.mrf.mxu0
        %v728 = vadd.f32 0.0, %v727
        %v729 = vpop.f32.mrf.mxu0
        %730 = vmatprep.mubr.bf16.mxu0 0
        %731 = vmatmul.mubr.bf16.gmra.mxu0 %v600
        %v732 = vpop.f32.mrf.mxu0
        %v733 = vadd.f32 0.0, %v732
        %v734 = vpop.f32.mrf.mxu0
        %v735 = vpop.f32.mrf.mxu0
        %v736 = vadd.f32 0.0, %v735
        %v737 = vpop.f32.mrf.mxu0
        %738 = vmatprep.mubr.bf16.mxu0 0
        %739 = vmatmul.mubr.bf16.gmra.mxu0 %v601
        %v740 = vpop.f32.mrf.mxu0
        %v741 = vadd.f32 0.0, %v740
        %v742 = vpop.f32.mrf.mxu0
        %v743 = vpop.f32.mrf.mxu0
        %v744 = vadd.f32 0.0, %v743
        %v745 = vpop.f32.mrf.mxu0
        %746 = vdwg.mxu0
        %v747 = vmul.f32 %v562, %v685
        %v748 = vmul.f32 %v563, %v688
        %v749 = vmul.f32 %v564, %v693
        %v750 = vmul.f32 %v565, %v696
        %v751 = vmul.f32 %v566, %v701
        %v752 = vmul.f32 %v567, %v704
        %v753 = vmul.f32 %v568, %v709
        %v754 = vmul.f32 %v569, %v712
        %v755 = vmul.f32 %v570, %v717
        %v756 = vmul.f32 %v571, %v720
        %v757 = vmul.f32 %v572, %v725
        %v758 = vmul.f32 %v573, %v728
        %v759 = vmul.f32 %v574, %v733
        %v760 = vmul.f32 %v575, %v736
        %v761 = vmul.f32 %v576, %v741
        %v762 = vmul.f32 %v577, %v744
        %v763 = vld [vmem:[#allocation5 + $0xd0] sm:$0xf]
        %v764 = vld [vmem:[#allocation5 + $0xd4] sm:$0xf]
        %v765 = vld [vmem:[#allocation5 + $0xd8] sm:$0xf]
        %v766 = vld [vmem:[#allocation5 + $0xdc] sm:$0xf]
        %v767 = vld [vmem:[#allocation5 + $0xe0] sm:$0xf]
        %v768 = vld [vmem:[#allocation5 + $0xe4] sm:$0xf]
        %v769 = vld [vmem:[#allocation5 + $0xe8] sm:$0xf]
        %v770 = vld [vmem:[#allocation5 + $0xec] sm:$0xf]
        %v771 = vld [vmem:[#allocation5 + $0xf0] sm:$0xf]
        %v772 = vld [vmem:[#allocation5 + $0xf4] sm:$0xf]
        %v773 = vld [vmem:[#allocation5 + $0xf8] sm:$0xf]
        %v774 = vld [vmem:[#allocation5 + $0xfc] sm:$0xf]
        %v775 = vld [vmem:[#allocation5 + $0x100] sm:$0xf]
        %v776 = vld [vmem:[#allocation5 + $0x104] sm:$0xf]
        %v777 = vld [vmem:[#allocation5 + $0x108] sm:$0xf]
        %v778 = vld [vmem:[#allocation5 + $0x10c] sm:$0xf]
        %v779 = vpack.c.bf16 %v748, %v747
        %v780 = vpack.c.bf16 %v750, %v749
        %v781 = vpack.c.bf16 %v752, %v751
        %v782 = vpack.c.bf16 %v754, %v753
        %v783 = vpack.c.bf16 %v756, %v755
        %v784 = vpack.c.bf16 %v758, %v757
        %v785 = vpack.c.bf16 %v760, %v759
        %v786 = vpack.c.bf16 %v762, %v761
        %v787 = vld [vmem:[#allocation5 + $0x110] sm:$0x1]
        %v788 = vunpack.c.l.bf16 %v787
        %v789 = vlaneseq
        %v790 = vshrl.u32 %v789, 7
        %v791 = vsub.s32 0, %v790
        %v792 = vrot.slane %v788, %v791
        %v809 = vunpack.c.l.b16 %v763
        %v810 = vunpack.c.l.b16 %v764
        %v811 = vunpack.c.l.b16 %v765
        %v812 = vunpack.c.l.b16 %v766
        %v813 = vunpack.c.l.b16 %v767
        %v814 = vunpack.c.l.b16 %v768
        %v815 = vunpack.c.l.b16 %v769
        %v816 = vunpack.c.l.b16 %v770
        %v817 = vunpack.c.l.b16 %v771
        %v818 = vunpack.c.l.b16 %v772
        %v819 = vunpack.c.l.b16 %v773
        %v820 = vunpack.c.l.b16 %v774
        %v821 = vunpack.c.l.b16 %v775
        %v822 = vunpack.c.l.b16 %v776
        %v823 = vunpack.c.l.b16 %v777
        %v824 = vunpack.c.l.b16 %v778
        %v825 = vpack.c.b16 %v810, %v809
        %v826 = vpack.c.b16 %v812, %v811
        %v827 = vpack.c.b16 %v814, %v813
        %v828 = vpack.c.b16 %v816, %v815
        %v829 = vpack.c.b16 %v818, %v817
        %v830 = vpack.c.b16 %v820, %v819
        %v831 = vpack.c.b16 %v822, %v821
        %v832 = vpack.c.b16 %v824, %v823
        %841 = vmatprep.subr.bf16.mxu0 0
        %842 = vmatpush1.bf16.msra.mxu0 %v832
        %843 = vmatprep.subr.bf16.mxu0 0
        %844 = vmatpush1.bf16.msra.mxu0 %v831
        %845 = vmatprep.subr.bf16.mxu0 0
        %846 = vmatpush1.bf16.msra.mxu0 %v830
        %847 = vmatprep.subr.bf16.mxu0 0
        %848 = vmatpush1.bf16.msra.mxu0 %v829
        %849 = vmatprep.subr.bf16.mxu0 0
        %850 = vmatpush1.bf16.msra.mxu0 %v828
        %851 = vmatprep.subr.bf16.mxu0 0
        %852 = vmatpush1.bf16.msra.mxu0 %v827
        %853 = vmatprep.subr.bf16.mxu0 0
        %854 = vmatpush1.bf16.msra.mxu0 %v826
        %855 = vmatprep.subr.bf16.mxu0 0
        %856 = vmatpush1.bf16.msra.mxu0 %v825
        %857 = vmatprep.subr.bf16.mxu0 0
        %858 = vmatpush2.bf16.msra.mxu0 0
        %859 = vmatprep.subr.bf16.mxu0 0
        %860 = vmatpush2.bf16.msra.mxu0 0
        %861 = vmatprep.subr.bf16.mxu0 0
        %862 = vmatpush2.bf16.msra.mxu0 0
        %863 = vmatprep.subr.bf16.mxu0 0
        %864 = vmatpush2.bf16.msra.mxu0 0
        %865 = vmatprep.subr.bf16.mxu0 0
        %866 = vmatpush2.bf16.msra.mxu0 0
        %867 = vmatprep.subr.bf16.mxu0 0
        %868 = vmatpush2.bf16.msra.mxu0 0
        %869 = vmatprep.subr.bf16.mxu0 0
        %870 = vmatpush2.bf16.msra.mxu0 0
        %871 = vmatprep.subr.bf16.mxu0 0
        %872 = vmatpush2.bf16.msra.mxu0 0
        %873 = vmatprep.mubr.bf16.mxu0 0
        %874 = vmatmul.mubr.bf16.gmra.mxu0 %v779
        %v875 = vpop.f32.mrf.mxu0
        %v876 = vadd.f32 %v792, %v875
        %v877 = vpop.f32.mrf.mxu0
        %v878 = vpop.f32.mrf.mxu0
        %v879 = vadd.f32 %v792, %v878
        %v880 = vpop.f32.mrf.mxu0
        %881 = vmatprep.mubr.bf16.mxu0 0
        %882 = vmatmul.mubr.bf16.gmra.mxu0 %v780
        %v883 = vpop.f32.mrf.mxu0
        %v884 = vadd.f32 %v792, %v883
        %v885 = vpop.f32.mrf.mxu0
        %v886 = vpop.f32.mrf.mxu0
        %v887 = vadd.f32 %v792, %v886
        %v888 = vpop.f32.mrf.mxu0
        %889 = vmatprep.mubr.bf16.mxu0 0
        %890 = vmatmul.mubr.bf16.gmra.mxu0 %v781
        %v891 = vpop.f32.mrf.mxu0
        %v892 = vadd.f32 %v792, %v891
        %v893 = vpop.f32.mrf.mxu0
        %v894 = vpop.f32.mrf.mxu0
        %v895 = vadd.f32 %v792, %v894
        %v896 = vpop.f32.mrf.mxu0
        %897 = vmatprep.mubr.bf16.mxu0 0
        %898 = vmatmul.mubr.bf16.gmra.mxu0 %v782
        %v899 = vpop.f32.mrf.mxu0
        %v900 = vadd.f32 %v792, %v899
        %v901 = vpop.f32.mrf.mxu0
        %v902 = vpop.f32.mrf.mxu0
        %v903 = vadd.f32 %v792, %v902
        %v904 = vpop.f32.mrf.mxu0
        %905 = vmatprep.mubr.bf16.mxu0 0
        %906 = vmatmul.mubr.bf16.gmra.mxu0 %v783
        %v907 = vpop.f32.mrf.mxu0
        %v908 = vadd.f32 %v792, %v907
        %v909 = vpop.f32.mrf.mxu0
        %v910 = vpop.f32.mrf.mxu0
        %v911 = vadd.f32 %v792, %v910
        %v912 = vpop.f32.mrf.mxu0
        %913 = vmatprep.mubr.bf16.mxu0 0
        %914 = vmatmul.mubr.bf16.gmra.mxu0 %v784
        %v915 = vpop.f32.mrf.mxu0
        %v916 = vadd.f32 %v792, %v915
        %v917 = vpop.f32.mrf.mxu0
        %v918 = vpop.f32.mrf.mxu0
        %v919 = vadd.f32 %v792, %v918
        %v920 = vpop.f32.mrf.mxu0
        %921 = vmatprep.mubr.bf16.mxu0 0
        %922 = vmatmul.mubr.bf16.gmra.mxu0 %v785
        %v923 = vpop.f32.mrf.mxu0
        %v924 = vadd.f32 %v792, %v923
        %v925 = vpop.f32.mrf.mxu0
        %v926 = vpop.f32.mrf.mxu0
        %v927 = vadd.f32 %v792, %v926
        %v928 = vpop.f32.mrf.mxu0
        %929 = vmatprep.mubr.bf16.mxu0 0
        %930 = vmatmul.mubr.bf16.gmra.mxu0 %v786
        %v931 = vpop.f32.mrf.mxu0
        %v932 = vadd.f32 %v792, %v931
        %v933 = vpop.f32.mrf.mxu0
        %v934 = vpop.f32.mrf.mxu0
        %v935 = vadd.f32 %v792, %v934
        %v936 = vpop.f32.mrf.mxu0
        %937 = vdwg.mxu0
        %v938 = vmax.f32 %v876, 0.0
        %v939 = vmax.f32 %v879, 0.0
        %v940 = vmax.f32 %v884, 0.0
        %v941 = vmax.f32 %v887, 0.0
        %v942 = vmax.f32 %v892, 0.0
        %v943 = vmax.f32 %v895, 0.0
        %v944 = vmax.f32 %v900, 0.0
        %v945 = vmax.f32 %v903, 0.0
        %v946 = vmax.f32 %v908, 0.0
        %v947 = vmax.f32 %v911, 0.0
        %v948 = vmax.f32 %v916, 0.0
        %v949 = vmax.f32 %v919, 0.0
        %v950 = vmax.f32 %v924, 0.0
        %v951 = vmax.f32 %v927, 0.0
        %v952 = vmax.f32 %v932, 0.0
        %v953 = vmax.f32 %v935, 0.0
        %v954 = vld [vmem:[#allocation5 + $0x118] sm:$0xf]
        %v955 = vld [vmem:[#allocation5 + $0x11c] sm:$0xf]
        %v956 = vld [vmem:[#allocation5 + $0x120] sm:$0xf]
        %v957 = vld [vmem:[#allocation5 + $0x124] sm:$0xf]
        %v958 = vld [vmem:[#allocation5 + $0x128] sm:$0xf]
        %v959 = vld [vmem:[#allocation5 + $0x12c] sm:$0xf]
        %v960 = vld [vmem:[#allocation5 + $0x130] sm:$0xf]
        %v961 = vld [vmem:[#allocation5 + $0x134] sm:$0xf]
        %v962 = vld [vmem:[#allocation5 + $0x138] sm:$0xf]
        %v963 = vld [vmem:[#allocation5 + $0x13c] sm:$0xf]
        %v964 = vld [vmem:[#allocation5 + $0x140] sm:$0xf]
        %v965 = vld [vmem:[#allocation5 + $0x144] sm:$0xf]
        %v966 = vld [vmem:[#allocation5 + $0x148] sm:$0xf]
        %v967 = vld [vmem:[#allocation5 + $0x14c] sm:$0xf]
        %v968 = vld [vmem:[#allocation5 + $0x150] sm:$0xf]
        %v969 = vld [vmem:[#allocation5 + $0x154] sm:$0xf]
        %v970 = vpack.c.bf16 %v939, %v938
        %v971 = vpack.c.bf16 %v941, %v940
        %v972 = vpack.c.bf16 %v943, %v942
        %v973 = vpack.c.bf16 %v945, %v944
        %v974 = vpack.c.bf16 %v947, %v946
        %v975 = vpack.c.bf16 %v949, %v948
        %v976 = vpack.c.bf16 %v951, %v950
        %v977 = vpack.c.bf16 %v953, %v952
        %v978 = vld [vmem:[#allocation5 + $0x158] sm:$0x1]
        %v979 = vunpack.c.l.bf16 %v978
        %v980 = vlaneseq
        %v981 = vshrl.u32 %v980, 7
        %v982 = vsub.s32 0, %v981
        %v983 = vrot.slane %v979, %v982
        %v1000 = vunpack.c.l.b16 %v954
        %v1001 = vunpack.c.l.b16 %v955
        %v1002 = vunpack.c.l.b16 %v956
        %v1003 = vunpack.c.l.b16 %v957
        %v1004 = vunpack.c.l.b16 %v958
        %v1005 = vunpack.c.l.b16 %v959
        %v1006 = vunpack.c.l.b16 %v960
        %v1007 = vunpack.c.l.b16 %v961
        %v1008 = vunpack.c.l.b16 %v962
        %v1009 = vunpack.c.l.b16 %v963
        %v1010 = vunpack.c.l.b16 %v964
        %v1011 = vunpack.c.l.b16 %v965
        %v1012 = vunpack.c.l.b16 %v966
        %v1013 = vunpack.c.l.b16 %v967
        %v1014 = vunpack.c.l.b16 %v968
        %v1015 = vunpack.c.l.b16 %v969
        %v1016 = vpack.c.b16 %v1001, %v1000
        %v1017 = vpack.c.b16 %v1003, %v1002
        %v1018 = vpack.c.b16 %v1005, %v1004
        %v1019 = vpack.c.b16 %v1007, %v1006
        %v1020 = vpack.c.b16 %v1009, %v1008
        %v1021 = vpack.c.b16 %v1011, %v1010
        %v1022 = vpack.c.b16 %v1013, %v1012
        %v1023 = vpack.c.b16 %v1015, %v1014
        %1032 = vmatprep.subr.bf16.mxu0 0
        %1033 = vmatpush1.bf16.msra.mxu0 %v1023
        %1034 = vmatprep.subr.bf16.mxu0 0
        %1035 = vmatpush1.bf16.msra.mxu0 %v1022
        %1036 = vmatprep.subr.bf16.mxu0 0
        %1037 = vmatpush1.bf16.msra.mxu0 %v1021
        %1038 = vmatprep.subr.bf16.mxu0 0
        %1039 = vmatpush1.bf16.msra.mxu0 %v1020
        %1040 = vmatprep.subr.bf16.mxu0 0
        %1041 = vmatpush1.bf16.msra.mxu0 %v1019
        %1042 = vmatprep.subr.bf16.mxu0 0
        %1043 = vmatpush1.bf16.msra.mxu0 %v1018
        %1044 = vmatprep.subr.bf16.mxu0 0
        %1045 = vmatpush1.bf16.msra.mxu0 %v1017
        %1046 = vmatprep.subr.bf16.mxu0 0
        %1047 = vmatpush1.bf16.msra.mxu0 %v1016
        %1048 = vmatprep.subr.bf16.mxu0 0
        %1049 = vmatpush2.bf16.msra.mxu0 0
        %1050 = vmatprep.subr.bf16.mxu0 0
        %1051 = vmatpush2.bf16.msra.mxu0 0
        %1052 = vmatprep.subr.bf16.mxu0 0
        %1053 = vmatpush2.bf16.msra.mxu0 0
        %1054 = vmatprep.subr.bf16.mxu0 0
        %1055 = vmatpush2.bf16.msra.mxu0 0
        %1056 = vmatprep.subr.bf16.mxu0 0
        %1057 = vmatpush2.bf16.msra.mxu0 0
        %1058 = vmatprep.subr.bf16.mxu0 0
        %1059 = vmatpush2.bf16.msra.mxu0 0
        %1060 = vmatprep.subr.bf16.mxu0 0
        %1061 = vmatpush2.bf16.msra.mxu0 0
        %1062 = vmatprep.subr.bf16.mxu0 0
        %1063 = vmatpush2.bf16.msra.mxu0 0
        %1064 = vmatprep.mubr.bf16.mxu0 0
        %1065 = vmatmul.mubr.bf16.gmra.mxu0 %v970
        %v1066 = vpop.f32.mrf.mxu0
        %v1067 = vadd.f32 %v983, %v1066
        %v1068 = vpop.f32.mrf.mxu0
        %v1069 = vpop.f32.mrf.mxu0
        %v1070 = vadd.f32 %v983, %v1069
        %v1071 = vpop.f32.mrf.mxu0
        %1072 = vmatprep.mubr.bf16.mxu0 0
        %1073 = vmatmul.mubr.bf16.gmra.mxu0 %v971
        %v1074 = vpop.f32.mrf.mxu0
        %v1075 = vadd.f32 %v983, %v1074
        %v1076 = vpop.f32.mrf.mxu0
        %v1077 = vpop.f32.mrf.mxu0
        %v1078 = vadd.f32 %v983, %v1077
        %v1079 = vpop.f32.mrf.mxu0
        %1080 = vmatprep.mubr.bf16.mxu0 0
        %1081 = vmatmul.mubr.bf16.gmra.mxu0 %v972
        %v1082 = vpop.f32.mrf.mxu0
        %v1083 = vadd.f32 %v983, %v1082
        %v1084 = vpop.f32.mrf.mxu0
        %v1085 = vpop.f32.mrf.mxu0
        %v1086 = vadd.f32 %v983, %v1085
        %v1087 = vpop.f32.mrf.mxu0
        %1088 = vmatprep.mubr.bf16.mxu0 0
        %1089 = vmatmul.mubr.bf16.gmra.mxu0 %v973
        %v1090 = vpop.f32.mrf.mxu0
        %v1091 = vadd.f32 %v983, %v1090
        %v1092 = vpop.f32.mrf.mxu0
        %v1093 = vpop.f32.mrf.mxu0
        %v1094 = vadd.f32 %v983, %v1093
        %v1095 = vpop.f32.mrf.mxu0
        %1096 = vmatprep.mubr.bf16.mxu0 0
        %1097 = vmatmul.mubr.bf16.gmra.mxu0 %v974
        %v1098 = vpop.f32.mrf.mxu0
        %v1099 = vadd.f32 %v983, %v1098
        %v1100 = vpop.f32.mrf.mxu0
        %v1101 = vpop.f32.mrf.mxu0
        %v1102 = vadd.f32 %v983, %v1101
        %v1103 = vpop.f32.mrf.mxu0
        %1104 = vmatprep.mubr.bf16.mxu0 0
        %1105 = vmatmul.mubr.bf16.gmra.mxu0 %v975
        %v1106 = vpop.f32.mrf.mxu0
        %v1107 = vadd.f32 %v983, %v1106
        %v1108 = vpop.f32.mrf.mxu0
        %v1109 = vpop.f32.mrf.mxu0
        %v1110 = vadd.f32 %v983, %v1109
        %v1111 = vpop.f32.mrf.mxu0
        %1112 = vmatprep.mubr.bf16.mxu0 0
        %1113 = vmatmul.mubr.bf16.gmra.mxu0 %v976
        %v1114 = vpop.f32.mrf.mxu0
        %v1115 = vadd.f32 %v983, %v1114
        %v1116 = vpop.f32.mrf.mxu0
        %v1117 = vpop.f32.mrf.mxu0
        %v1118 = vadd.f32 %v983, %v1117
        %v1119 = vpop.f32.mrf.mxu0
        %1120 = vmatprep.mubr.bf16.mxu0 0
        %1121 = vmatmul.mubr.bf16.gmra.mxu0 %v977
        %v1122 = vpop.f32.mrf.mxu0
        %v1123 = vadd.f32 %v983, %v1122
        %v1124 = vpop.f32.mrf.mxu0
        %v1125 = vpop.f32.mrf.mxu0
        %v1126 = vadd.f32 %v983, %v1125
        %v1127 = vpop.f32.mrf.mxu0
        %1128 = vdwg.mxu0
        %v1129 = vmax.f32 %v1067, 0.0
        %v1130 = vmax.f32 %v1070, 0.0
        %v1131 = vmax.f32 %v1075, 0.0
        %v1132 = vmax.f32 %v1078, 0.0
        %v1133 = vmax.f32 %v1083, 0.0
        %v1134 = vmax.f32 %v1086, 0.0
        %v1135 = vmax.f32 %v1091, 0.0
        %v1136 = vmax.f32 %v1094, 0.0
        %v1137 = vmax.f32 %v1099, 0.0
        %v1138 = vmax.f32 %v1102, 0.0
        %v1139 = vmax.f32 %v1107, 0.0
        %v1140 = vmax.f32 %v1110, 0.0
        %v1141 = vmax.f32 %v1115, 0.0
        %v1142 = vmax.f32 %v1118, 0.0
        %v1143 = vmax.f32 %v1123, 0.0
        %v1144 = vmax.f32 %v1126, 0.0
        %v1145 = vld [vmem:[#allocation5 + $0x160] sm:$0xf]
        %v1146 = vld [vmem:[#allocation5 + $0x164] sm:$0xf]
        %v1147 = vld [vmem:[#allocation5 + $0x168] sm:$0xf]
        %v1148 = vld [vmem:[#allocation5 + $0x16c] sm:$0xf]
        %v1149 = vld [vmem:[#allocation5 + $0x170] sm:$0xf]
        %v1150 = vld [vmem:[#allocation5 + $0x174] sm:$0xf]
        %v1151 = vld [vmem:[#allocation5 + $0x178] sm:$0xf]
        %v1152 = vld [vmem:[#allocation5 + $0x17c] sm:$0xf]
        %v1153 = vld [vmem:[#allocation5 + $0x180] sm:$0xf]
        %v1154 = vld [vmem:[#allocation5 + $0x184] sm:$0xf]
        %v1155 = vld [vmem:[#allocation5 + $0x188] sm:$0xf]
        %v1156 = vld [vmem:[#allocation5 + $0x18c] sm:$0xf]
        %v1157 = vld [vmem:[#allocation5 + $0x190] sm:$0xf]
        %v1158 = vld [vmem:[#allocation5 + $0x194] sm:$0xf]
        %v1159 = vld [vmem:[#allocation5 + $0x198] sm:$0xf]
        %v1160 = vld [vmem:[#allocation5 + $0x19c] sm:$0xf]
        %v1161 = vpack.c.bf16 %v1130, %v1129
        %v1162 = vpack.c.bf16 %v1132, %v1131
        %v1163 = vpack.c.bf16 %v1134, %v1133
        %v1164 = vpack.c.bf16 %v1136, %v1135
        %v1165 = vpack.c.bf16 %v1138, %v1137
        %v1166 = vpack.c.bf16 %v1140, %v1139
        %v1167 = vpack.c.bf16 %v1142, %v1141
        %v1168 = vpack.c.bf16 %v1144, %v1143
        %v1169 = vld [vmem:[#allocation5 + $0x1a0] sm:$0x1]
        %v1170 = vunpack.c.l.bf16 %v1169
        %v1171 = vlaneseq
        %v1172 = vshrl.u32 %v1171, 7
        %v1173 = vsub.s32 0, %v1172
        %v1174 = vrot.slane %v1170, %v1173
        %v1191 = vunpack.c.l.b16 %v1145
        %v1192 = vunpack.c.l.b16 %v1146
        %v1193 = vunpack.c.l.b16 %v1147
        %v1194 = vunpack.c.l.b16 %v1148
        %v1195 = vunpack.c.l.b16 %v1149
        %v1196 = vunpack.c.l.b16 %v1150
        %v1197 = vunpack.c.l.b16 %v1151
        %v1198 = vunpack.c.l.b16 %v1152
        %v1199 = vunpack.c.l.b16 %v1153
        %v1200 = vunpack.c.l.b16 %v1154
        %v1201 = vunpack.c.l.b16 %v1155
        %v1202 = vunpack.c.l.b16 %v1156
        %v1203 = vunpack.c.l.b16 %v1157
        %v1204 = vunpack.c.l.b16 %v1158
        %v1205 = vunpack.c.l.b16 %v1159
        %v1206 = vunpack.c.l.b16 %v1160
        %v1207 = vpack.c.b16 %v1192, %v1191
        %v1208 = vpack.c.b16 %v1194, %v1193
        %v1209 = vpack.c.b16 %v1196, %v1195
        %v1210 = vpack.c.b16 %v1198, %v1197
        %v1211 = vpack.c.b16 %v1200, %v1199
        %v1212 = vpack.c.b16 %v1202, %v1201
        %v1213 = vpack.c.b16 %v1204, %v1203
        %v1214 = vpack.c.b16 %v1206, %v1205
        %1223 = vmatprep.subr.bf16.mxu0 0
        %1224 = vmatpush1.bf16.msra.mxu0 %v1214
        %1225 = vmatprep.subr.bf16.mxu0 0
        %1226 = vmatpush1.bf16.msra.mxu0 %v1213
        %1227 = vmatprep.subr.bf16.mxu0 0
        %1228 = vmatpush1.bf16.msra.mxu0 %v1212
        %1229 = vmatprep.subr.bf16.mxu0 0
        %1230 = vmatpush1.bf16.msra.mxu0 %v1211
        %1231 = vmatprep.subr.bf16.mxu0 0
        %1232 = vmatpush1.bf16.msra.mxu0 %v1210
        %1233 = vmatprep.subr.bf16.mxu0 0
        %1234 = vmatpush1.bf16.msra.mxu0 %v1209
        %1235 = vmatprep.subr.bf16.mxu0 0
        %1236 = vmatpush1.bf16.msra.mxu0 %v1208
        %1237 = vmatprep.subr.bf16.mxu0 0
        %1238 = vmatpush1.bf16.msra.mxu0 %v1207
        %1239 = vmatprep.subr.bf16.mxu0 0
        %1240 = vmatpush2.bf16.msra.mxu0 0
        %1241 = vmatprep.subr.bf16.mxu0 0
        %1242 = vmatpush2.bf16.msra.mxu0 0
        %1243 = vmatprep.subr.bf16.mxu0 0
        %1244 = vmatpush2.bf16.msra.mxu0 0
        %1245 = vmatprep.subr.bf16.mxu0 0
        %1246 = vmatpush2.bf16.msra.mxu0 0
        %1247 = vmatprep.subr.bf16.mxu0 0
        %1248 = vmatpush2.bf16.msra.mxu0 0
        %1249 = vmatprep.subr.bf16.mxu0 0
        %1250 = vmatpush2.bf16.msra.mxu0 0
        %1251 = vmatprep.subr.bf16.mxu0 0
        %1252 = vmatpush2.bf16.msra.mxu0 0
        %1253 = vmatprep.subr.bf16.mxu0 0
        %1254 = vmatpush2.bf16.msra.mxu0 0
        %1255 = vmatprep.mubr.bf16.mxu0 0
        %1256 = vmatmul.mubr.bf16.gmra.mxu0 %v1161
        %v1257 = vpop.f32.mrf.mxu0
        %v1258 = vadd.f32 %v1174, %v1257
        %v1259 = vpop.f32.mrf.mxu0
        %v1260 = vpop.f32.mrf.mxu0
        %v1261 = vadd.f32 %v1174, %v1260
        %v1262 = vpop.f32.mrf.mxu0
        %1263 = vmatprep.mubr.bf16.mxu0 0
        %1264 = vmatmul.mubr.bf16.gmra.mxu0 %v1162
        %v1265 = vpop.f32.mrf.mxu0
        %v1266 = vadd.f32 %v1174, %v1265
        %v1267 = vpop.f32.mrf.mxu0
        %v1268 = vpop.f32.mrf.mxu0
        %v1269 = vadd.f32 %v1174, %v1268
        %v1270 = vpop.f32.mrf.mxu0
        %1271 = vmatprep.mubr.bf16.mxu0 0
        %1272 = vmatmul.mubr.bf16.gmra.mxu0 %v1163
        %v1273 = vpop.f32.mrf.mxu0
        %v1274 = vadd.f32 %v1174, %v1273
        %v1275 = vpop.f32.mrf.mxu0
        %v1276 = vpop.f32.mrf.mxu0
        %v1277 = vadd.f32 %v1174, %v1276
        %v1278 = vpop.f32.mrf.mxu0
        %1279 = vmatprep.mubr.bf16.mxu0 0
        %1280 = vmatmul.mubr.bf16.gmra.mxu0 %v1164
        %v1281 = vpop.f32.mrf.mxu0
        %v1282 = vadd.f32 %v1174, %v1281
        %v1283 = vpop.f32.mrf.mxu0
        %v1284 = vpop.f32.mrf.mxu0
        %v1285 = vadd.f32 %v1174, %v1284
        %v1286 = vpop.f32.mrf.mxu0
        %1287 = vmatprep.mubr.bf16.mxu0 0
        %1288 = vmatmul.mubr.bf16.gmra.mxu0 %v1165
        %v1289 = vpop.f32.mrf.mxu0
        %v1290 = vadd.f32 %v1174, %v1289
        %v1291 = vpop.f32.mrf.mxu0
        %v1292 = vpop.f32.mrf.mxu0
        %v1293 = vadd.f32 %v1174, %v1292
        %v1294 = vpop.f32.mrf.mxu0
        %1295 = vmatprep.mubr.bf16.mxu0 0
        %1296 = vmatmul.mubr.bf16.gmra.mxu0 %v1166
        %v1297 = vpop.f32.mrf.mxu0
        %v1298 = vadd.f32 %v1174, %v1297
        %v1299 = vpop.f32.mrf.mxu0
        %v1300 = vpop.f32.mrf.mxu0
        %v1301 = vadd.f32 %v1174, %v1300
        %v1302 = vpop.f32.mrf.mxu0
        %1303 = vmatprep.mubr.bf16.mxu0 0
        %1304 = vmatmul.mubr.bf16.gmra.mxu0 %v1167
        %v1305 = vpop.f32.mrf.mxu0
        %v1306 = vadd.f32 %v1174, %v1305
        %v1307 = vpop.f32.mrf.mxu0
        %v1308 = vpop.f32.mrf.mxu0
        %v1309 = vadd.f32 %v1174, %v1308
        %v1310 = vpop.f32.mrf.mxu0
        %1311 = vmatprep.mubr.bf16.mxu0 0
        %1312 = vmatmul.mubr.bf16.gmra.mxu0 %v1168
        %v1313 = vpop.f32.mrf.mxu0
        %v1314 = vadd.f32 %v1174, %v1313
        %v1315 = vpop.f32.mrf.mxu0
        %v1316 = vpop.f32.mrf.mxu0
        %v1317 = vadd.f32 %v1174, %v1316
        %v1318 = vpop.f32.mrf.mxu0
        %1319 = vdwg.mxu0
        %v1320 = vmax.f32 %v1258, 0.0
        %v1321 = vmax.f32 %v1261, 0.0
        %v1322 = vmax.f32 %v1266, 0.0
        %v1323 = vmax.f32 %v1269, 0.0
        %v1324 = vmax.f32 %v1274, 0.0
        %v1325 = vmax.f32 %v1277, 0.0
        %v1326 = vmax.f32 %v1282, 0.0
        %v1327 = vmax.f32 %v1285, 0.0
        %v1328 = vmax.f32 %v1290, 0.0
        %v1329 = vmax.f32 %v1293, 0.0
        %v1330 = vmax.f32 %v1298, 0.0
        %v1331 = vmax.f32 %v1301, 0.0
        %v1332 = vmax.f32 %v1306, 0.0
        %v1333 = vmax.f32 %v1309, 0.0
        %v1334 = vmax.f32 %v1314, 0.0
        %v1335 = vmax.f32 %v1317, 0.0
        %v1336 = vld [vmem:[#allocation5 + $0x1a8] sm:$0xf]
        %v1337 = vld [vmem:[#allocation5 + $0x1ac] sm:$0xf]
        %v1338 = vld [vmem:[#allocation5 + $0x1b0] sm:$0xf]
        %v1339 = vld [vmem:[#allocation5 + $0x1b4] sm:$0xf]
        %v1340 = vld [vmem:[#allocation5 + $0x1b8] sm:$0xf]
        %v1341 = vld [vmem:[#allocation5 + $0x1bc] sm:$0xf]
        %v1342 = vld [vmem:[#allocation5 + $0x1c0] sm:$0xf]
        %v1343 = vld [vmem:[#allocation5 + $0x1c4] sm:$0xf]
        %v1344 = vld [vmem:[#allocation5 + $0x1c8] sm:$0xf]
        %v1345 = vld [vmem:[#allocation5 + $0x1cc] sm:$0xf]
        %v1346 = vld [vmem:[#allocation5 + $0x1d0] sm:$0xf]
        %v1347 = vld [vmem:[#allocation5 + $0x1d4] sm:$0xf]
        %v1348 = vld [vmem:[#allocation5 + $0x1d8] sm:$0xf]
        %v1349 = vld [vmem:[#allocation5 + $0x1dc] sm:$0xf]
        %v1350 = vld [vmem:[#allocation5 + $0x1e0] sm:$0xf]
        %v1351 = vld [vmem:[#allocation5 + $0x1e4] sm:$0xf]
        %v1352 = vld [vmem:[#allocation5 + $0x1e8] sm:$0x1]
        %v1353 = vunpack.c.l.bf16 %v1352
        %v1354 = vlaneseq
        %v1355 = vshrl.u32 %v1354, 7
        %v1356 = vsub.s32 0, %v1355
        %v1357 = vrot.slane %v1353, %v1356
        %v1374 = vunpack.c.l.b16 %v1336
        %v1375 = vunpack.c.l.b16 %v1337
        %v1376 = vunpack.c.l.b16 %v1338
        %v1377 = vunpack.c.l.b16 %v1339
        %v1378 = vunpack.c.l.b16 %v1340
        %v1379 = vunpack.c.l.b16 %v1341
        %v1380 = vunpack.c.l.b16 %v1342
        %v1381 = vunpack.c.l.b16 %v1343
        %v1382 = vunpack.c.l.b16 %v1344
        %v1383 = vunpack.c.l.b16 %v1345
        %v1384 = vunpack.c.l.b16 %v1346
        %v1385 = vunpack.c.l.b16 %v1347
        %v1386 = vunpack.c.l.b16 %v1348
        %v1387 = vunpack.c.l.b16 %v1349
        %v1388 = vunpack.c.l.b16 %v1350
        %v1389 = vunpack.c.l.b16 %v1351
        %v1390 = vpack.c.b16 %v1375, %v1374
        %v1391 = vpack.c.b16 %v1377, %v1376
        %v1392 = vpack.c.b16 %v1379, %v1378
        %v1393 = vpack.c.b16 %v1381, %v1380
        %v1394 = vpack.c.b16 %v1383, %v1382
        %v1395 = vpack.c.b16 %v1385, %v1384
        %v1396 = vpack.c.b16 %v1387, %v1386
        %v1397 = vpack.c.b16 %v1389, %v1388
        %1406 = vmatprep.subr.bf16.mxu0 0
        %1407 = vmatpush1.bf16.msra.mxu0 %v1397
        %1408 = vmatprep.subr.bf16.mxu0 0
        %1409 = vmatpush1.bf16.msra.mxu0 %v1396
        %1410 = vmatprep.subr.bf16.mxu0 0
        %1411 = vmatpush1.bf16.msra.mxu0 %v1395
        %1412 = vmatprep.subr.bf16.mxu0 0
        %1413 = vmatpush1.bf16.msra.mxu0 %v1394
        %1414 = vmatprep.subr.bf16.mxu0 0
        %1415 = vmatpush1.bf16.msra.mxu0 %v1393
        %1416 = vmatprep.subr.bf16.mxu0 0
        %1417 = vmatpush1.bf16.msra.mxu0 %v1392
        %1418 = vmatprep.subr.bf16.mxu0 0
        %1419 = vmatpush1.bf16.msra.mxu0 %v1391
        %1420 = vmatprep.subr.bf16.mxu0 0
        %1421 = vmatpush1.bf16.msra.mxu0 %v1390
        %1422 = vmatprep.subr.bf16.mxu0 0
        %1423 = vmatpush2.bf16.msra.mxu0 0
        %1424 = vmatprep.subr.bf16.mxu0 0
        %1425 = vmatpush2.bf16.msra.mxu0 0
        %1426 = vmatprep.subr.bf16.mxu0 0
        %1427 = vmatpush2.bf16.msra.mxu0 0
        %1428 = vmatprep.subr.bf16.mxu0 0
        %1429 = vmatpush2.bf16.msra.mxu0 0
        %1430 = vmatprep.subr.bf16.mxu0 0
        %1431 = vmatpush2.bf16.msra.mxu0 0
        %1432 = vmatprep.subr.bf16.mxu0 0
        %1433 = vmatpush2.bf16.msra.mxu0 0
        %1434 = vmatprep.subr.bf16.mxu0 0
        %1435 = vmatpush2.bf16.msra.mxu0 0
        %1436 = vmatprep.subr.bf16.mxu0 0
        %1437 = vmatpush2.bf16.msra.mxu0 0
        %1438 = vmatprep.mubr.bf16.mxu0 0
        %1439 = vmatmul.mubr.bf16.gmra.mxu0 %v1161
        %v1440 = vpop.f32.mrf.mxu0
        %v1441 = vadd.f32 %v1357, %v1440
        %v1442 = vpop.f32.mrf.mxu0
        %v1443 = vpop.f32.mrf.mxu0
        %v1444 = vadd.f32 %v1357, %v1443
        %v1445 = vpop.f32.mrf.mxu0
        %1446 = vmatprep.mubr.bf16.mxu0 0
        %1447 = vmatmul.mubr.bf16.gmra.mxu0 %v1162
        %v1448 = vpop.f32.mrf.mxu0
        %v1449 = vadd.f32 %v1357, %v1448
        %v1450 = vpop.f32.mrf.mxu0
        %v1451 = vpop.f32.mrf.mxu0
        %v1452 = vadd.f32 %v1357, %v1451
        %v1453 = vpop.f32.mrf.mxu0
        %1454 = vmatprep.mubr.bf16.mxu0 0
        %1455 = vmatmul.mubr.bf16.gmra.mxu0 %v1163
        %v1456 = vpop.f32.mrf.mxu0
        %v1457 = vadd.f32 %v1357, %v1456
        %v1458 = vpop.f32.mrf.mxu0
        %v1459 = vpop.f32.mrf.mxu0
        %v1460 = vadd.f32 %v1357, %v1459
        %v1461 = vpop.f32.mrf.mxu0
        %1462 = vmatprep.mubr.bf16.mxu0 0
        %1463 = vmatmul.mubr.bf16.gmra.mxu0 %v1164
        %v1464 = vpop.f32.mrf.mxu0
        %v1465 = vadd.f32 %v1357, %v1464
        %v1466 = vpop.f32.mrf.mxu0
        %v1467 = vpop.f32.mrf.mxu0
        %v1468 = vadd.f32 %v1357, %v1467
        %v1469 = vpop.f32.mrf.mxu0
        %1470 = vmatprep.mubr.bf16.mxu0 0
        %1471 = vmatmul.mubr.bf16.gmra.mxu0 %v1165
        %v1472 = vpop.f32.mrf.mxu0
        %v1473 = vadd.f32 %v1357, %v1472
        %v1474 = vpop.f32.mrf.mxu0
        %v1475 = vpop.f32.mrf.mxu0
        %v1476 = vadd.f32 %v1357, %v1475
        %v1477 = vpop.f32.mrf.mxu0
        %1478 = vmatprep.mubr.bf16.mxu0 0
        %1479 = vmatmul.mubr.bf16.gmra.mxu0 %v1166
        %v1480 = vpop.f32.mrf.mxu0
        %v1481 = vadd.f32 %v1357, %v1480
        %v1482 = vpop.f32.mrf.mxu0
        %v1483 = vpop.f32.mrf.mxu0
        %v1484 = vadd.f32 %v1357, %v1483
        %v1485 = vpop.f32.mrf.mxu0
        %1486 = vmatprep.mubr.bf16.mxu0 0
        %1487 = vmatmul.mubr.bf16.gmra.mxu0 %v1167
        %v1488 = vpop.f32.mrf.mxu0
        %v1489 = vadd.f32 %v1357, %v1488
        %v1490 = vpop.f32.mrf.mxu0
        %v1491 = vpop.f32.mrf.mxu0
        %v1492 = vadd.f32 %v1357, %v1491
        %v1493 = vpop.f32.mrf.mxu0
        %1494 = vmatprep.mubr.bf16.mxu0 0
        %1495 = vmatmul.mubr.bf16.gmra.mxu0 %v1168
        %v1496 = vpop.f32.mrf.mxu0
        %v1497 = vadd.f32 %v1357, %v1496
        %v1498 = vpop.f32.mrf.mxu0
        %v1499 = vpop.f32.mrf.mxu0
        %v1500 = vadd.f32 %v1357, %v1499
        %v1501 = vpop.f32.mrf.mxu0
        %1502 = vdwg.mxu0
        %1503 = vmax.xlane.f32.xlu0 %v1441
        %v1504 = vpop.xlane.xlu0 %1503
        %1505 = vmax.xlane.f32.xlu0 %v1444
        %v1506 = vpop.xlane.xlu0 %1505
        %1507 = vmax.xlane.f32.xlu0 %v1449
        %v1508 = vpop.xlane.xlu0 %1507
        %1509 = vmax.xlane.f32.xlu0 %v1452
        %v1510 = vpop.xlane.xlu0 %1509
        %1511 = vmax.xlane.f32.xlu0 %v1457
        %v1512 = vpop.xlane.xlu0 %1511
        %1513 = vmax.xlane.f32.xlu0 %v1460
        %v1514 = vpop.xlane.xlu0 %1513
        %1515 = vmax.xlane.f32.xlu0 %v1465
        %v1516 = vpop.xlane.xlu0 %1515
        %1517 = vmax.xlane.f32.xlu0 %v1468
        %v1518 = vpop.xlane.xlu0 %1517
        %1519 = vmax.xlane.f32.xlu0 %v1473
        %v1520 = vpop.xlane.xlu0 %1519
        %1521 = vmax.xlane.f32.xlu0 %v1476
        %v1522 = vpop.xlane.xlu0 %1521
        %1523 = vmax.xlane.f32.xlu0 %v1481
        %v1524 = vpop.xlane.xlu0 %1523
        %1525 = vmax.xlane.f32.xlu0 %v1484
        %v1526 = vpop.xlane.xlu0 %1525
        %1527 = vmax.xlane.f32.xlu0 %v1489
        %v1528 = vpop.xlane.xlu0 %1527
        %1529 = vmax.xlane.f32.xlu0 %v1492
        %v1530 = vpop.xlane.xlu0 %1529
        %1531 = vmax.xlane.f32.xlu0 %v1497
        %v1532 = vpop.xlane.xlu0 %1531
        %1533 = vmax.xlane.f32.xlu0 %v1500
        %v1534 = vpop.xlane.xlu0 %1533
        %v1535 = vsub.f32 %v1441, %v1504
        %v1536 = vsub.f32 %v1444, %v1506
        %v1537 = vsub.f32 %v1449, %v1508
        %v1538 = vsub.f32 %v1452, %v1510
        %v1539 = vsub.f32 %v1457, %v1512
        %v1540 = vsub.f32 %v1460, %v1514
        %v1541 = vsub.f32 %v1465, %v1516
        %v1542 = vsub.f32 %v1468, %v1518
        %v1543 = vsub.f32 %v1473, %v1520
        %v1544 = vsub.f32 %v1476, %v1522
        %v1545 = vsub.f32 %v1481, %v1524
        %v1546 = vsub.f32 %v1484, %v1526
        %v1547 = vsub.f32 %v1489, %v1528
        %v1548 = vsub.f32 %v1492, %v1530
        %v1549 = vsub.f32 %v1497, %v1532
        %v1550 = vsub.f32 %v1500, %v1534
        %v1551 = vmul.f32 %v1535, 1.442695
        %v1552 = vpow.pop %v1551
        %v1553 = vmul.f32 %v1536, 1.442695
        %v1554 = vpow.pop %v1553
        %v1555 = vmul.f32 %v1537, 1.442695
        %v1556 = vpow.pop %v1555
        %v1557 = vmul.f32 %v1538, 1.442695
        %v1558 = vpow.pop %v1557
        %v1559 = vmul.f32 %v1539, 1.442695
        %v1560 = vpow.pop %v1559
        %v1561 = vmul.f32 %v1540, 1.442695
        %v1562 = vpow.pop %v1561
        %v1563 = vmul.f32 %v1541, 1.442695
        %v1564 = vpow.pop %v1563
        %v1565 = vmul.f32 %v1542, 1.442695
        %v1566 = vpow.pop %v1565
        %v1567 = vmul.f32 %v1543, 1.442695
        %v1568 = vpow.pop %v1567
        %v1569 = vmul.f32 %v1544, 1.442695
        %v1570 = vpow.pop %v1569
        %v1571 = vmul.f32 %v1545, 1.442695
        %v1572 = vpow.pop %v1571
        %v1573 = vmul.f32 %v1546, 1.442695
        %v1574 = vpow.pop %v1573
        %v1575 = vmul.f32 %v1547, 1.442695
        %v1576 = vpow.pop %v1575
        %v1577 = vmul.f32 %v1548, 1.442695
        %v1578 = vpow.pop %v1577
        %v1579 = vmul.f32 %v1549, 1.442695
        %v1580 = vpow.pop %v1579
        %v1581 = vmul.f32 %v1550, 1.442695
        %v1582 = vpow.pop %v1581
        %v1583 = vld [vmem:[#allocation5 + $0x1f0] sm:$0xf]
        %v1584 = vld [vmem:[#allocation5 + $0x1f4] sm:$0xf]
        %v1585 = vld [vmem:[#allocation5 + $0x1f8] sm:$0xf]
        %v1586 = vld [vmem:[#allocation5 + $0x1fc] sm:$0xf]
        %v1587 = vld [vmem:[#allocation5 + $0x200] sm:$0xf]
        %v1588 = vld [vmem:[#allocation5 + $0x204] sm:$0xf]
        %v1589 = vld [vmem:[#allocation5 + $0x208] sm:$0xf]
        %v1590 = vld [vmem:[#allocation5 + $0x20c] sm:$0xf]
        %v1591 = vld [vmem:[#allocation5 + $0x210] sm:$0xf]
        %v1592 = vld [vmem:[#allocation5 + $0x214] sm:$0xf]
        %v1593 = vld [vmem:[#allocation5 + $0x218] sm:$0xf]
        %v1594 = vld [vmem:[#allocation5 + $0x21c] sm:$0xf]
        %v1595 = vld [vmem:[#allocation5 + $0x220] sm:$0xf]
        %v1596 = vld [vmem:[#allocation5 + $0x224] sm:$0xf]
        %v1597 = vld [vmem:[#allocation5 + $0x228] sm:$0xf]
        %v1598 = vld [vmem:[#allocation5 + $0x22c] sm:$0xf]
        %v1599 = vpack.c.bf16 %v1554, %v1552
        %v1600 = vpack.c.bf16 %v1558, %v1556
        %v1601 = vpack.c.bf16 %v1562, %v1560
        %v1602 = vpack.c.bf16 %v1566, %v1564
        %v1603 = vpack.c.bf16 %v1570, %v1568
        %v1604 = vpack.c.bf16 %v1574, %v1572
        %v1605 = vpack.c.bf16 %v1578, %v1576
        %v1606 = vpack.c.bf16 %v1582, %v1580
        %v1623 = vunpack.c.l.b16 %v1583
        %v1624 = vunpack.c.l.b16 %v1584
        %v1625 = vunpack.c.l.b16 %v1585
        %v1626 = vunpack.c.l.b16 %v1586
        %v1627 = vunpack.c.l.b16 %v1587
        %v1628 = vunpack.c.l.b16 %v1588
        %v1629 = vunpack.c.l.b16 %v1589
        %v1630 = vunpack.c.l.b16 %v1590
        %v1631 = vunpack.c.l.b16 %v1591
        %v1632 = vunpack.c.l.b16 %v1592
        %v1633 = vunpack.c.l.b16 %v1593
        %v1634 = vunpack.c.l.b16 %v1594
        %v1635 = vunpack.c.l.b16 %v1595
        %v1636 = vunpack.c.l.b16 %v1596
        %v1637 = vunpack.c.l.b16 %v1597
        %v1638 = vunpack.c.l.b16 %v1598
        %v1639 = vpack.c.b16 %v1624, %v1623
        %v1640 = vpack.c.b16 %v1626, %v1625
        %v1641 = vpack.c.b16 %v1628, %v1627
        %v1642 = vpack.c.b16 %v1630, %v1629
        %v1643 = vpack.c.b16 %v1632, %v1631
        %v1644 = vpack.c.b16 %v1634, %v1633
        %v1645 = vpack.c.b16 %v1636, %v1635
        %v1646 = vpack.c.b16 %v1638, %v1637
        %1655 = vmatprep.subr.bf16.mxu0 0
        %1656 = vmatpush1.bf16.msra.mxu0 %v1646
        %1657 = vmatprep.subr.bf16.mxu0 0
        %1658 = vmatpush1.bf16.msra.mxu0 %v1645
        %1659 = vmatprep.subr.bf16.mxu0 0
        %1660 = vmatpush1.bf16.msra.mxu0 %v1644
        %1661 = vmatprep.subr.bf16.mxu0 0
        %1662 = vmatpush1.bf16.msra.mxu0 %v1643
        %1663 = vmatprep.subr.bf16.mxu0 0
        %1664 = vmatpush1.bf16.msra.mxu0 %v1642
        %1665 = vmatprep.subr.bf16.mxu0 0
        %1666 = vmatpush1.bf16.msra.mxu0 %v1641
        %1667 = vmatprep.subr.bf16.mxu0 0
        %1668 = vmatpush1.bf16.msra.mxu0 %v1640
        %1669 = vmatprep.subr.bf16.mxu0 0
        %1670 = vmatpush1.bf16.msra.mxu0 %v1639
        %1671 = vmatprep.subr.bf16.mxu0 0
        %1672 = vmatpush2.bf16.msra.mxu0 0
        %1673 = vmatprep.subr.bf16.mxu0 0
        %1674 = vmatpush2.bf16.msra.mxu0 0
        %1675 = vmatprep.subr.bf16.mxu0 0
        %1676 = vmatpush2.bf16.msra.mxu0 0
        %1677 = vmatprep.subr.bf16.mxu0 0
        %1678 = vmatpush2.bf16.msra.mxu0 0
        %1679 = vmatprep.subr.bf16.mxu0 0
        %1680 = vmatpush2.bf16.msra.mxu0 0
        %1681 = vmatprep.subr.bf16.mxu0 0
        %1682 = vmatpush2.bf16.msra.mxu0 0
        %1683 = vmatprep.subr.bf16.mxu0 0
        %1684 = vmatpush2.bf16.msra.mxu0 0
        %1685 = vmatprep.subr.bf16.mxu0 0
        %1686 = vmatpush2.bf16.msra.mxu0 0
        %1687 = vmatprep.mubr.bf16.mxu0 0
        %1688 = vmatmul.mubr.bf16.gmra.mxu0 %v1599
        %v1689 = vpop.f32.mrf.mxu0
        %v1690 = vadd.f32 1e-20, %v1689
        %v1691 = vpop.f32.mrf.mxu0
        %v1692 = vpop.f32.mrf.mxu0
        %v1693 = vadd.f32 1e-20, %v1692
        %v1694 = vpop.f32.mrf.mxu0
        %1695 = vmatprep.mubr.bf16.mxu0 0
        %1696 = vmatmul.mubr.bf16.gmra.mxu0 %v1600
        %v1697 = vpop.f32.mrf.mxu0
        %v1698 = vadd.f32 1e-20, %v1697
        %v1699 = vpop.f32.mrf.mxu0
        %v1700 = vpop.f32.mrf.mxu0
        %v1701 = vadd.f32 1e-20, %v1700
        %v1702 = vpop.f32.mrf.mxu0
        %1703 = vmatprep.mubr.bf16.mxu0 0
        %1704 = vmatmul.mubr.bf16.gmra.mxu0 %v1601
        %v1705 = vpop.f32.mrf.mxu0
        %v1706 = vadd.f32 1e-20, %v1705
        %v1707 = vpop.f32.mrf.mxu0
        %v1708 = vpop.f32.mrf.mxu0
        %v1709 = vadd.f32 1e-20, %v1708
        %v1710 = vpop.f32.mrf.mxu0
        %1711 = vmatprep.mubr.bf16.mxu0 0
        %1712 = vmatmul.mubr.bf16.gmra.mxu0 %v1602
        %v1713 = vpop.f32.mrf.mxu0
        %v1714 = vadd.f32 1e-20, %v1713
        %v1715 = vpop.f32.mrf.mxu0
        %v1716 = vpop.f32.mrf.mxu0
        %v1717 = vadd.f32 1e-20, %v1716
        %v1718 = vpop.f32.mrf.mxu0
        %1719 = vmatprep.mubr.bf16.mxu0 0
        %1720 = vmatmul.mubr.bf16.gmra.mxu0 %v1603
        %v1721 = vpop.f32.mrf.mxu0
        %v1722 = vadd.f32 1e-20, %v1721
        %v1723 = vpop.f32.mrf.mxu0
        %v1724 = vpop.f32.mrf.mxu0
        %v1725 = vadd.f32 1e-20, %v1724
        %v1726 = vpop.f32.mrf.mxu0
        %1727 = vmatprep.mubr.bf16.mxu0 0
        %1728 = vmatmul.mubr.bf16.gmra.mxu0 %v1604
        %v1729 = vpop.f32.mrf.mxu0
        %v1730 = vadd.f32 1e-20, %v1729
        %v1731 = vpop.f32.mrf.mxu0
        %v1732 = vpop.f32.mrf.mxu0
        %v1733 = vadd.f32 1e-20, %v1732
        %v1734 = vpop.f32.mrf.mxu0
        %1735 = vmatprep.mubr.bf16.mxu0 0
        %1736 = vmatmul.mubr.bf16.gmra.mxu0 %v1605
        %v1737 = vpop.f32.mrf.mxu0
        %v1738 = vadd.f32 1e-20, %v1737
        %v1739 = vpop.f32.mrf.mxu0
        %v1740 = vpop.f32.mrf.mxu0
        %v1741 = vadd.f32 1e-20, %v1740
        %v1742 = vpop.f32.mrf.mxu0
        %1743 = vmatprep.mubr.bf16.mxu0 0
        %1744 = vmatmul.mubr.bf16.gmra.mxu0 %v1606
        %v1745 = vpop.f32.mrf.mxu0
        %v1746 = vadd.f32 1e-20, %v1745
        %v1747 = vpop.f32.mrf.mxu0
        %v1748 = vpop.f32.mrf.mxu0
        %v1749 = vadd.f32 1e-20, %v1748
        %v1750 = vpop.f32.mrf.mxu0
        %1751 = vdwg.mxu0
        %v1752 = vrcp.pop %v1690
        %v1753 = vrcp.pop %v1693
        %v1754 = vrcp.pop %v1698
        %v1755 = vrcp.pop %v1701
        %v1756 = vrcp.pop %v1706
        %v1757 = vrcp.pop %v1709
        %v1758 = vrcp.pop %v1714
        %v1759 = vrcp.pop %v1717
        %v1760 = vrcp.pop %v1722
        %v1761 = vrcp.pop %v1725
        %v1762 = vrcp.pop %v1730
        %v1763 = vrcp.pop %v1733
        %v1764 = vrcp.pop %v1738
        %v1765 = vrcp.pop %v1741
        %v1766 = vrcp.pop %v1746
        %v1767 = vrcp.pop %v1749
        %v1768 = vmul.f32 %v1552, %v1752
        %v1769 = vmul.f32 %v1554, %v1753
        %v1770 = vmul.f32 %v1556, %v1754
        %v1771 = vmul.f32 %v1558, %v1755
        %v1772 = vmul.f32 %v1560, %v1756
        %v1773 = vmul.f32 %v1562, %v1757
        %v1774 = vmul.f32 %v1564, %v1758
        %v1775 = vmul.f32 %v1566, %v1759
        %v1776 = vmul.f32 %v1568, %v1760
        %v1777 = vmul.f32 %v1570, %v1761
        %v1778 = vmul.f32 %v1572, %v1762
        %v1779 = vmul.f32 %v1574, %v1763
        %v1780 = vmul.f32 %v1576, %v1764
        %v1781 = vmul.f32 %v1578, %v1765
        %v1782 = vmul.f32 %v1580, %v1766
        %v1783 = vmul.f32 %v1582, %v1767
        %v1784 = vld [vmem:[#allocation5 + $0x230] sm:$0xf]
        %v1785 = vld [vmem:[#allocation5 + $0x234] sm:$0xf]
        %v1786 = vld [vmem:[#allocation5 + $0x238] sm:$0xf]
        %v1787 = vld [vmem:[#allocation5 + $0x23c] sm:$0xf]
        %v1788 = vld [vmem:[#allocation5 + $0x240] sm:$0xf]
        %v1789 = vld [vmem:[#allocation5 + $0x244] sm:$0xf]
        %v1790 = vld [vmem:[#allocation5 + $0x248] sm:$0xf]
        %v1791 = vld [vmem:[#allocation5 + $0x24c] sm:$0xf]
        %v1792 = vld [vmem:[#allocation5 + $0x250] sm:$0xf]
        %v1793 = vld [vmem:[#allocation5 + $0x254] sm:$0xf]
        %v1794 = vld [vmem:[#allocation5 + $0x258] sm:$0xf]
        %v1795 = vld [vmem:[#allocation5 + $0x25c] sm:$0xf]
        %v1796 = vld [vmem:[#allocation5 + $0x260] sm:$0xf]
        %v1797 = vld [vmem:[#allocation5 + $0x264] sm:$0xf]
        %v1798 = vld [vmem:[#allocation5 + $0x268] sm:$0xf]
        %v1799 = vld [vmem:[#allocation5 + $0x26c] sm:$0xf]
        %v1800 = vpack.c.bf16 %v1321, %v1320
        %v1801 = vpack.c.bf16 %v1323, %v1322
        %v1802 = vpack.c.bf16 %v1325, %v1324
        %v1803 = vpack.c.bf16 %v1327, %v1326
        %v1804 = vpack.c.bf16 %v1329, %v1328
        %v1805 = vpack.c.bf16 %v1331, %v1330
        %v1806 = vpack.c.bf16 %v1333, %v1332
        %v1807 = vpack.c.bf16 %v1335, %v1334
        %v1808 = vld [vmem:[#allocation5 + $0x270] sm:$0x1]
        %v1809 = vunpack.c.l.bf16 %v1808
        %v1810 = vlaneseq
        %v1811 = vshrl.u32 %v1810, 7
        %v1812 = vsub.s32 0, %v1811
        %v1813 = vrot.slane %v1809, %v1812
        %v1830 = vunpack.c.l.b16 %v1784
        %v1831 = vunpack.c.l.b16 %v1785
        %v1832 = vunpack.c.l.b16 %v1786
        %v1833 = vunpack.c.l.b16 %v1787
        %v1834 = vunpack.c.l.b16 %v1788
        %v1835 = vunpack.c.l.b16 %v1789
        %v1836 = vunpack.c.l.b16 %v1790
        %v1837 = vunpack.c.l.b16 %v1791
        %v1838 = vunpack.c.l.b16 %v1792
        %v1839 = vunpack.c.l.b16 %v1793
        %v1840 = vunpack.c.l.b16 %v1794
        %v1841 = vunpack.c.l.b16 %v1795
        %v1842 = vunpack.c.l.b16 %v1796
        %v1843 = vunpack.c.l.b16 %v1797
        %v1844 = vunpack.c.l.b16 %v1798
        %v1845 = vunpack.c.l.b16 %v1799
        %v1846 = vpack.c.b16 %v1831, %v1830
        %v1847 = vpack.c.b16 %v1833, %v1832
        %v1848 = vpack.c.b16 %v1835, %v1834
        %v1849 = vpack.c.b16 %v1837, %v1836
        %v1850 = vpack.c.b16 %v1839, %v1838
        %v1851 = vpack.c.b16 %v1841, %v1840
        %v1852 = vpack.c.b16 %v1843, %v1842
        %v1853 = vpack.c.b16 %v1845, %v1844
        %1862 = vmatprep.subr.bf16.mxu0 0
        %1863 = vmatpush1.bf16.msra.mxu0 %v1853
        %1864 = vmatprep.subr.bf16.mxu0 0
        %1865 = vmatpush1.bf16.msra.mxu0 %v1852
        %1866 = vmatprep.subr.bf16.mxu0 0
        %1867 = vmatpush1.bf16.msra.mxu0 %v1851
        %1868 = vmatprep.subr.bf16.mxu0 0
        %1869 = vmatpush1.bf16.msra.mxu0 %v1850
        %1870 = vmatprep.subr.bf16.mxu0 0
        %1871 = vmatpush1.bf16.msra.mxu0 %v1849
        %1872 = vmatprep.subr.bf16.mxu0 0
        %1873 = vmatpush1.bf16.msra.mxu0 %v1848
        %1874 = vmatprep.subr.bf16.mxu0 0
        %1875 = vmatpush1.bf16.msra.mxu0 %v1847
        %1876 = vmatprep.subr.bf16.mxu0 0
        %1877 = vmatpush1.bf16.msra.mxu0 %v1846
        %1878 = vmatprep.subr.bf16.mxu0 0
        %1879 = vmatpush2.bf16.msra.mxu0 0
        %1880 = vmatprep.subr.bf16.mxu0 0
        %1881 = vmatpush2.bf16.msra.mxu0 0
        %1882 = vmatprep.subr.bf16.mxu0 0
        %1883 = vmatpush2.bf16.msra.mxu0 0
        %1884 = vmatprep.subr.bf16.mxu0 0
        %1885 = vmatpush2.bf16.msra.mxu0 0
        %1886 = vmatprep.subr.bf16.mxu0 0
        %1887 = vmatpush2.bf16.msra.mxu0 0
        %1888 = vmatprep.subr.bf16.mxu0 0
        %1889 = vmatpush2.bf16.msra.mxu0 0
        %1890 = vmatprep.subr.bf16.mxu0 0
        %1891 = vmatpush2.bf16.msra.mxu0 0
        %1892 = vmatprep.subr.bf16.mxu0 0
        %1893 = vmatpush2.bf16.msra.mxu0 0
        %1894 = vmatprep.mubr.bf16.mxu0 0
        %1895 = vmatmul.mubr.bf16.gmra.mxu0 %v1800
        %v1896 = vpop.f32.mrf.mxu0
        %v1897 = vadd.f32 %v1813, %v1896
        %v1898 = vpop.f32.mrf.mxu0
        %v1899 = vpop.f32.mrf.mxu0
        %v1900 = vadd.f32 %v1813, %v1899
        %v1901 = vpop.f32.mrf.mxu0
        %1902 = vmatprep.mubr.bf16.mxu0 0
        %1903 = vmatmul.mubr.bf16.gmra.mxu0 %v1801
        %v1904 = vpop.f32.mrf.mxu0
        %v1905 = vadd.f32 %v1813, %v1904
        %v1906 = vpop.f32.mrf.mxu0
        %v1907 = vpop.f32.mrf.mxu0
        %v1908 = vadd.f32 %v1813, %v1907
        %v1909 = vpop.f32.mrf.mxu0
        %1910 = vmatprep.mubr.bf16.mxu0 0
        %1911 = vmatmul.mubr.bf16.gmra.mxu0 %v1802
        %v1912 = vpop.f32.mrf.mxu0
        %v1913 = vadd.f32 %v1813, %v1912
        %v1914 = vpop.f32.mrf.mxu0
        %v1915 = vpop.f32.mrf.mxu0
        %v1916 = vadd.f32 %v1813, %v1915
        %v1917 = vpop.f32.mrf.mxu0
        %1918 = vmatprep.mubr.bf16.mxu0 0
        %1919 = vmatmul.mubr.bf16.gmra.mxu0 %v1803
        %v1920 = vpop.f32.mrf.mxu0
        %v1921 = vadd.f32 %v1813, %v1920
        %v1922 = vpop.f32.mrf.mxu0
        %v1923 = vpop.f32.mrf.mxu0
        %v1924 = vadd.f32 %v1813, %v1923
        %v1925 = vpop.f32.mrf.mxu0
        %1926 = vmatprep.mubr.bf16.mxu0 0
        %1927 = vmatmul.mubr.bf16.gmra.mxu0 %v1804
        %v1928 = vpop.f32.mrf.mxu0
        %v1929 = vadd.f32 %v1813, %v1928
        %v1930 = vpop.f32.mrf.mxu0
        %v1931 = vpop.f32.mrf.mxu0
        %v1932 = vadd.f32 %v1813, %v1931
        %v1933 = vpop.f32.mrf.mxu0
        %1934 = vmatprep.mubr.bf16.mxu0 0
        %1935 = vmatmul.mubr.bf16.gmra.mxu0 %v1805
        %v1936 = vpop.f32.mrf.mxu0
        %v1937 = vadd.f32 %v1813, %v1936
        %v1938 = vpop.f32.mrf.mxu0
        %v1939 = vpop.f32.mrf.mxu0
        %v1940 = vadd.f32 %v1813, %v1939
        %v1941 = vpop.f32.mrf.mxu0
        %1942 = vmatprep.mubr.bf16.mxu0 0
        %1943 = vmatmul.mubr.bf16.gmra.mxu0 %v1806
        %v1944 = vpop.f32.mrf.mxu0
        %v1945 = vadd.f32 %v1813, %v1944
        %v1946 = vpop.f32.mrf.mxu0
        %v1947 = vpop.f32.mrf.mxu0
        %v1948 = vadd.f32 %v1813, %v1947
        %v1949 = vpop.f32.mrf.mxu0
        %1950 = vmatprep.mubr.bf16.mxu0 0
        %1951 = vmatmul.mubr.bf16.gmra.mxu0 %v1807
        %v1952 = vpop.f32.mrf.mxu0
        %v1953 = vadd.f32 %v1813, %v1952
        %v1954 = vpop.f32.mrf.mxu0
        %v1955 = vpop.f32.mrf.mxu0
        %v1956 = vadd.f32 %v1813, %v1955
        %v1957 = vpop.f32.mrf.mxu0
        %1958 = vdwg.mxu0
        %1959 = vmax.xlane.f32.xlu0 %v1897
        %v1960 = vpop.xlane.xlu0 %1959
        %1961 = vmax.xlane.f32.xlu0 %v1900
        %v1962 = vpop.xlane.xlu0 %1961
        %1963 = vmax.xlane.f32.xlu0 %v1905
        %v1964 = vpop.xlane.xlu0 %1963
        %1965 = vmax.xlane.f32.xlu0 %v1908
        %v1966 = vpop.xlane.xlu0 %1965
        %1967 = vmax.xlane.f32.xlu0 %v1913
        %v1968 = vpop.xlane.xlu0 %1967
        %1969 = vmax.xlane.f32.xlu0 %v1916
        %v1970 = vpop.xlane.xlu0 %1969
        %1971 = vmax.xlane.f32.xlu0 %v1921
        %v1972 = vpop.xlane.xlu0 %1971
        %1973 = vmax.xlane.f32.xlu0 %v1924
        %v1974 = vpop.xlane.xlu0 %1973
        %1975 = vmax.xlane.f32.xlu0 %v1929
        %v1976 = vpop.xlane.xlu0 %1975
        %1977 = vmax.xlane.f32.xlu0 %v1932
        %v1978 = vpop.xlane.xlu0 %1977
        %1979 = vmax.xlane.f32.xlu0 %v1937
        %v1980 = vpop.xlane.xlu0 %1979
        %1981 = vmax.xlane.f32.xlu0 %v1940
        %v1982 = vpop.xlane.xlu0 %1981
        %1983 = vmax.xlane.f32.xlu0 %v1945
        %v1984 = vpop.xlane.xlu0 %1983
        %1985 = vmax.xlane.f32.xlu0 %v1948
        %v1986 = vpop.xlane.xlu0 %1985
        %1987 = vmax.xlane.f32.xlu0 %v1953
        %v1988 = vpop.xlane.xlu0 %1987
        %1989 = vmax.xlane.f32.xlu0 %v1956
        %v1990 = vpop.xlane.xlu0 %1989
        %v1991 = vsub.f32 %v1897, %v1960
        %v1992 = vsub.f32 %v1900, %v1962
        %v1993 = vsub.f32 %v1905, %v1964
        %v1994 = vsub.f32 %v1908, %v1966
        %v1995 = vsub.f32 %v1913, %v1968
        %v1996 = vsub.f32 %v1916, %v1970
        %v1997 = vsub.f32 %v1921, %v1972
        %v1998 = vsub.f32 %v1924, %v1974
        %v1999 = vsub.f32 %v1929, %v1976
        %v2000 = vsub.f32 %v1932, %v1978
        %v2001 = vsub.f32 %v1937, %v1980
        %v2002 = vsub.f32 %v1940, %v1982
        %v2003 = vsub.f32 %v1945, %v1984
        %v2004 = vsub.f32 %v1948, %v1986
        %v2005 = vsub.f32 %v1953, %v1988
        %v2006 = vsub.f32 %v1956, %v1990
        %v2007 = vmul.f32 %v1991, 1.442695
        %v2008 = vpow.pop %v2007
        %v2009 = vmul.f32 %v1992, 1.442695
        %v2010 = vpow.pop %v2009
        %v2011 = vmul.f32 %v1993, 1.442695
        %v2012 = vpow.pop %v2011
        %v2013 = vmul.f32 %v1994, 1.442695
        %v2014 = vpow.pop %v2013
        %v2015 = vmul.f32 %v1995, 1.442695
        %v2016 = vpow.pop %v2015
        %v2017 = vmul.f32 %v1996, 1.442695
        %v2018 = vpow.pop %v2017
        %v2019 = vmul.f32 %v1997, 1.442695
        %v2020 = vpow.pop %v2019
        %v2021 = vmul.f32 %v1998, 1.442695
        %v2022 = vpow.pop %v2021
        %v2023 = vmul.f32 %v1999, 1.442695
        %v2024 = vpow.pop %v2023
        %v2025 = vmul.f32 %v2000, 1.442695
        %v2026 = vpow.pop %v2025
        %v2027 = vmul.f32 %v2001, 1.442695
        %v2028 = vpow.pop %v2027
        %v2029 = vmul.f32 %v2002, 1.442695
        %v2030 = vpow.pop %v2029
        %v2031 = vmul.f32 %v2003, 1.442695
        %v2032 = vpow.pop %v2031
        %v2033 = vmul.f32 %v2004, 1.442695
        %v2034 = vpow.pop %v2033
        %v2035 = vmul.f32 %v2005, 1.442695
        %v2036 = vpow.pop %v2035
        %v2037 = vmul.f32 %v2006, 1.442695
        %v2038 = vpow.pop %v2037
        %v2039 = vld [vmem:[#allocation5 + $0x278] sm:$0xf]
        %v2040 = vld [vmem:[#allocation5 + $0x27c] sm:$0xf]
        %v2041 = vld [vmem:[#allocation5 + $0x280] sm:$0xf]
        %v2042 = vld [vmem:[#allocation5 + $0x284] sm:$0xf]
        %v2043 = vld [vmem:[#allocation5 + $0x288] sm:$0xf]
        %v2044 = vld [vmem:[#allocation5 + $0x28c] sm:$0xf]
        %v2045 = vld [vmem:[#allocation5 + $0x290] sm:$0xf]
        %v2046 = vld [vmem:[#allocation5 + $0x294] sm:$0xf]
        %v2047 = vld [vmem:[#allocation5 + $0x298] sm:$0xf]
        %v2048 = vld [vmem:[#allocation5 + $0x29c] sm:$0xf]
        %v2049 = vld [vmem:[#allocation5 + $0x2a0] sm:$0xf]
        %v2050 = vld [vmem:[#allocation5 + $0x2a4] sm:$0xf]
        %v2051 = vld [vmem:[#allocation5 + $0x2a8] sm:$0xf]
        %v2052 = vld [vmem:[#allocation5 + $0x2ac] sm:$0xf]
        %v2053 = vld [vmem:[#allocation5 + $0x2b0] sm:$0xf]
        %v2054 = vld [vmem:[#allocation5 + $0x2b4] sm:$0xf]
        %v2055 = vpack.c.bf16 %v2010, %v2008
        %v2056 = vpack.c.bf16 %v2014, %v2012
        %v2057 = vpack.c.bf16 %v2018, %v2016
        %v2058 = vpack.c.bf16 %v2022, %v2020
        %v2059 = vpack.c.bf16 %v2026, %v2024
        %v2060 = vpack.c.bf16 %v2030, %v2028
        %v2061 = vpack.c.bf16 %v2034, %v2032
        %v2062 = vpack.c.bf16 %v2038, %v2036
        %v2079 = vunpack.c.l.b16 %v2039
        %v2080 = vunpack.c.l.b16 %v2040
        %v2081 = vunpack.c.l.b16 %v2041
        %v2082 = vunpack.c.l.b16 %v2042
        %v2083 = vunpack.c.l.b16 %v2043
        %v2084 = vunpack.c.l.b16 %v2044
        %v2085 = vunpack.c.l.b16 %v2045
        %v2086 = vunpack.c.l.b16 %v2046
        %v2087 = vunpack.c.l.b16 %v2047
        %v2088 = vunpack.c.l.b16 %v2048
        %v2089 = vunpack.c.l.b16 %v2049
        %v2090 = vunpack.c.l.b16 %v2050
        %v2091 = vunpack.c.l.b16 %v2051
        %v2092 = vunpack.c.l.b16 %v2052
        %v2093 = vunpack.c.l.b16 %v2053
        %v2094 = vunpack.c.l.b16 %v2054
        %v2095 = vpack.c.b16 %v2080, %v2079
        %v2096 = vpack.c.b16 %v2082, %v2081
        %v2097 = vpack.c.b16 %v2084, %v2083
        %v2098 = vpack.c.b16 %v2086, %v2085
        %v2099 = vpack.c.b16 %v2088, %v2087
        %v2100 = vpack.c.b16 %v2090, %v2089
        %v2101 = vpack.c.b16 %v2092, %v2091
        %v2102 = vpack.c.b16 %v2094, %v2093
        %2111 = vmatprep.subr.bf16.mxu0 0
        %2112 = vmatpush1.bf16.msra.mxu0 %v2102
        %2113 = vmatprep.subr.bf16.mxu0 0
        %2114 = vmatpush1.bf16.msra.mxu0 %v2101
        %2115 = vmatprep.subr.bf16.mxu0 0
        %2116 = vmatpush1.bf16.msra.mxu0 %v2100
        %2117 = vmatprep.subr.bf16.mxu0 0
        %2118 = vmatpush1.bf16.msra.mxu0 %v2099
        %2119 = vmatprep.subr.bf16.mxu0 0
        %2120 = vmatpush1.bf16.msra.mxu0 %v2098
        %2121 = vmatprep.subr.bf16.mxu0 0
        %2122 = vmatpush1.bf16.msra.mxu0 %v2097
        %2123 = vmatprep.subr.bf16.mxu0 0
        %2124 = vmatpush1.bf16.msra.mxu0 %v2096
        %2125 = vmatprep.subr.bf16.mxu0 0
        %2126 = vmatpush1.bf16.msra.mxu0 %v2095
        %2127 = vmatprep.subr.bf16.mxu0 0
        %2128 = vmatpush2.bf16.msra.mxu0 0
        %2129 = vmatprep.subr.bf16.mxu0 0
        %2130 = vmatpush2.bf16.msra.mxu0 0
        %2131 = vmatprep.subr.bf16.mxu0 0
        %2132 = vmatpush2.bf16.msra.mxu0 0
        %2133 = vmatprep.subr.bf16.mxu0 0
        %2134 = vmatpush2.bf16.msra.mxu0 0
        %2135 = vmatprep.subr.bf16.mxu0 0
        %2136 = vmatpush2.bf16.msra.mxu0 0
        %2137 = vmatprep.subr.bf16.mxu0 0
        %2138 = vmatpush2.bf16.msra.mxu0 0
        %2139 = vmatprep.subr.bf16.mxu0 0
        %2140 = vmatpush2.bf16.msra.mxu0 0
        %2141 = vmatprep.subr.bf16.mxu0 0
        %2142 = vmatpush2.bf16.msra.mxu0 0
        %2143 = vmatprep.mubr.bf16.mxu0 0
        %2144 = vmatmul.mubr.bf16.gmra.mxu0 %v2055
        %v2145 = vpop.f32.mrf.mxu0
        %v2146 = vadd.f32 1e-20, %v2145
        %v2147 = vpop.f32.mrf.mxu0
        %v2148 = vpop.f32.mrf.mxu0
        %v2149 = vadd.f32 1e-20, %v2148
        %v2150 = vpop.f32.mrf.mxu0
        %2151 = vmatprep.mubr.bf16.mxu0 0
        %2152 = vmatmul.mubr.bf16.gmra.mxu0 %v2056
        %v2153 = vpop.f32.mrf.mxu0
        %v2154 = vadd.f32 1e-20, %v2153
        %v2155 = vpop.f32.mrf.mxu0
        %v2156 = vpop.f32.mrf.mxu0
        %v2157 = vadd.f32 1e-20, %v2156
        %v2158 = vpop.f32.mrf.mxu0
        %2159 = vmatprep.mubr.bf16.mxu0 0
        %2160 = vmatmul.mubr.bf16.gmra.mxu0 %v2057
        %v2161 = vpop.f32.mrf.mxu0
        %v2162 = vadd.f32 1e-20, %v2161
        %v2163 = vpop.f32.mrf.mxu0
        %v2164 = vpop.f32.mrf.mxu0
        %v2165 = vadd.f32 1e-20, %v2164
        %v2166 = vpop.f32.mrf.mxu0
        %2167 = vmatprep.mubr.bf16.mxu0 0
        %2168 = vmatmul.mubr.bf16.gmra.mxu0 %v2058
        %v2169 = vpop.f32.mrf.mxu0
        %v2170 = vadd.f32 1e-20, %v2169
        %v2171 = vpop.f32.mrf.mxu0
        %v2172 = vpop.f32.mrf.mxu0
        %v2173 = vadd.f32 1e-20, %v2172
        %v2174 = vpop.f32.mrf.mxu0
        %2175 = vmatprep.mubr.bf16.mxu0 0
        %2176 = vmatmul.mubr.bf16.gmra.mxu0 %v2059
        %v2177 = vpop.f32.mrf.mxu0
        %v2178 = vadd.f32 1e-20, %v2177
        %v2179 = vpop.f32.mrf.mxu0
        %v2180 = vpop.f32.mrf.mxu0
        %v2181 = vadd.f32 1e-20, %v2180
        %v2182 = vpop.f32.mrf.mxu0
        %2183 = vmatprep.mubr.bf16.mxu0 0
        %2184 = vmatmul.mubr.bf16.gmra.mxu0 %v2060
        %v2185 = vpop.f32.mrf.mxu0
        %v2186 = vadd.f32 1e-20, %v2185
        %v2187 = vpop.f32.mrf.mxu0
        %v2188 = vpop.f32.mrf.mxu0
        %v2189 = vadd.f32 1e-20, %v2188
        %v2190 = vpop.f32.mrf.mxu0
        %2191 = vmatprep.mubr.bf16.mxu0 0
        %2192 = vmatmul.mubr.bf16.gmra.mxu0 %v2061
        %v2193 = vpop.f32.mrf.mxu0
        %v2194 = vadd.f32 1e-20, %v2193
        %v2195 = vpop.f32.mrf.mxu0
        %v2196 = vpop.f32.mrf.mxu0
        %v2197 = vadd.f32 1e-20, %v2196
        %v2198 = vpop.f32.mrf.mxu0
        %2199 = vmatprep.mubr.bf16.mxu0 0
        %2200 = vmatmul.mubr.bf16.gmra.mxu0 %v2062
        %v2201 = vpop.f32.mrf.mxu0
        %v2202 = vadd.f32 1e-20, %v2201
        %v2203 = vpop.f32.mrf.mxu0
        %v2204 = vpop.f32.mrf.mxu0
        %v2205 = vadd.f32 1e-20, %v2204
        %v2206 = vpop.f32.mrf.mxu0
        %2207 = vdwg.mxu0
        %v2208 = vrcp.pop %v2146
        %v2209 = vrcp.pop %v2149
        %v2210 = vrcp.pop %v2154
        %v2211 = vrcp.pop %v2157
        %v2212 = vrcp.pop %v2162
        %v2213 = vrcp.pop %v2165
        %v2214 = vrcp.pop %v2170
        %v2215 = vrcp.pop %v2173
        %v2216 = vrcp.pop %v2178
        %v2217 = vrcp.pop %v2181
        %v2218 = vrcp.pop %v2186
        %v2219 = vrcp.pop %v2189
        %v2220 = vrcp.pop %v2194
        %v2221 = vrcp.pop %v2197
        %v2222 = vrcp.pop %v2202
        %v2223 = vrcp.pop %v2205
        %v2224 = vmul.f32 %v2008, %v2208
        %v2225 = vmul.f32 %v2010, %v2209
        %v2226 = vmul.f32 %v2012, %v2210
        %v2227 = vmul.f32 %v2014, %v2211
        %v2228 = vmul.f32 %v2016, %v2212
        %v2229 = vmul.f32 %v2018, %v2213
        %v2230 = vmul.f32 %v2020, %v2214
        %v2231 = vmul.f32 %v2022, %v2215
        %v2232 = vmul.f32 %v2024, %v2216
        %v2233 = vmul.f32 %v2026, %v2217
        %v2234 = vmul.f32 %v2028, %v2218
        %v2235 = vmul.f32 %v2030, %v2219
        %v2236 = vmul.f32 %v2032, %v2220
        %v2237 = vmul.f32 %v2034, %v2221
        %v2238 = vmul.f32 %v2036, %v2222
        %v2239 = vmul.f32 %v2038, %v2223
        %v2240 = vld [vmem:[#allocation5 + $0x2b8] sm:$0xf]
        %v2241 = vld [vmem:[#allocation5 + $0x2bc] sm:$0xf]
        %v2242 = vld [vmem:[#allocation5 + $0x2c0] sm:$0xf]
        %v2243 = vld [vmem:[#allocation5 + $0x2c4] sm:$0xf]
        %v2244 = vld [vmem:[#allocation5 + $0x2c8] sm:$0xf]
        %v2245 = vld [vmem:[#allocation5 + $0x2cc] sm:$0xf]
        %v2246 = vld [vmem:[#allocation5 + $0x2d0] sm:$0xf]
        %v2247 = vld [vmem:[#allocation5 + $0x2d4] sm:$0xf]
        %v2248 = vld [vmem:[#allocation5 + $0x2d8] sm:$0xf]
        %v2249 = vld [vmem:[#allocation5 + $0x2dc] sm:$0xf]
        %v2250 = vld [vmem:[#allocation5 + $0x2e0] sm:$0xf]
        %v2251 = vld [vmem:[#allocation5 + $0x2e4] sm:$0xf]
        %v2252 = vld [vmem:[#allocation5 + $0x2e8] sm:$0xf]
        %v2253 = vld [vmem:[#allocation5 + $0x2ec] sm:$0xf]
        %v2254 = vld [vmem:[#allocation5 + $0x2f0] sm:$0xf]
        %v2255 = vld [vmem:[#allocation5 + $0x2f4] sm:$0xf]
        %v2256 = vpack.c.bf16 %v2225, %v2224
        %v2257 = vpack.c.bf16 %v2227, %v2226
        %v2258 = vpack.c.bf16 %v2229, %v2228
        %v2259 = vpack.c.bf16 %v2231, %v2230
        %v2260 = vpack.c.bf16 %v2233, %v2232
        %v2261 = vpack.c.bf16 %v2235, %v2234
        %v2262 = vpack.c.bf16 %v2237, %v2236
        %v2263 = vpack.c.bf16 %v2239, %v2238
        %v2280 = vunpack.c.l.b16 %v2240
        %v2281 = vunpack.c.l.b16 %v2241
        %v2282 = vunpack.c.l.b16 %v2242
        %v2283 = vunpack.c.l.b16 %v2243
        %v2284 = vunpack.c.l.b16 %v2244
        %v2285 = vunpack.c.l.b16 %v2245
        %v2286 = vunpack.c.l.b16 %v2246
        %v2287 = vunpack.c.l.b16 %v2247
        %v2288 = vunpack.c.l.b16 %v2248
        %v2289 = vunpack.c.l.b16 %v2249
        %v2290 = vunpack.c.l.b16 %v2250
        %v2291 = vunpack.c.l.b16 %v2251
        %v2292 = vunpack.c.l.b16 %v2252
        %v2293 = vunpack.c.l.b16 %v2253
        %v2294 = vunpack.c.l.b16 %v2254
        %v2295 = vunpack.c.l.b16 %v2255
        %v2296 = vpack.c.b16 %v2281, %v2280
        %v2297 = vpack.c.b16 %v2283, %v2282
        %v2298 = vpack.c.b16 %v2285, %v2284
        %v2299 = vpack.c.b16 %v2287, %v2286
        %v2300 = vpack.c.b16 %v2289, %v2288
        %v2301 = vpack.c.b16 %v2291, %v2290
        %v2302 = vpack.c.b16 %v2293, %v2292
        %v2303 = vpack.c.b16 %v2295, %v2294
        %2312 = vmatprep.subr.bf16.mxu0 0
        %2313 = vmatpush1.bf16.msra.mxu0 %v2303
        %2314 = vmatprep.subr.bf16.mxu0 0
        %2315 = vmatpush1.bf16.msra.mxu0 %v2302
        %2316 = vmatprep.subr.bf16.mxu0 0
        %2317 = vmatpush1.bf16.msra.mxu0 %v2301
        %2318 = vmatprep.subr.bf16.mxu0 0
        %2319 = vmatpush1.bf16.msra.mxu0 %v2300
        %2320 = vmatprep.subr.bf16.mxu0 0
        %2321 = vmatpush1.bf16.msra.mxu0 %v2299
        %2322 = vmatprep.subr.bf16.mxu0 0
        %2323 = vmatpush1.bf16.msra.mxu0 %v2298
        %2324 = vmatprep.subr.bf16.mxu0 0
        %2325 = vmatpush1.bf16.msra.mxu0 %v2297
        %2326 = vmatprep.subr.bf16.mxu0 0
        %2327 = vmatpush1.bf16.msra.mxu0 %v2296
        %2328 = vmatprep.subr.bf16.mxu0 0
        %2329 = vmatpush2.bf16.msra.mxu0 0
        %2330 = vmatprep.subr.bf16.mxu0 0
        %2331 = vmatpush2.bf16.msra.mxu0 0
        %2332 = vmatprep.subr.bf16.mxu0 0
        %2333 = vmatpush2.bf16.msra.mxu0 0
        %2334 = vmatprep.subr.bf16.mxu0 0
        %2335 = vmatpush2.bf16.msra.mxu0 0
        %2336 = vmatprep.subr.bf16.mxu0 0
        %2337 = vmatpush2.bf16.msra.mxu0 0
        %2338 = vmatprep.subr.bf16.mxu0 0
        %2339 = vmatpush2.bf16.msra.mxu0 0
        %2340 = vmatprep.subr.bf16.mxu0 0
        %2341 = vmatpush2.bf16.msra.mxu0 0
        %2342 = vmatprep.subr.bf16.mxu0 0
        %2343 = vmatpush2.bf16.msra.mxu0 0
        %2344 = vmatprep.mubr.bf16.mxu0 0
        %2345 = vmatmul.mubr.bf16.gmra.mxu0 %v2256
        %v2346 = vpop.f32.mrf.mxu0
        %v2347 = vadd.f32 0.0, %v2346
        %v2348 = vpop.f32.mrf.mxu0
        %v2349 = vpop.f32.mrf.mxu0
        %v2350 = vadd.f32 0.0, %v2349
        %v2351 = vpop.f32.mrf.mxu0
        %2352 = vmatprep.mubr.bf16.mxu0 0
        %2353 = vmatmul.mubr.bf16.gmra.mxu0 %v2257
        %v2354 = vpop.f32.mrf.mxu0
        %v2355 = vadd.f32 0.0, %v2354
        %v2356 = vpop.f32.mrf.mxu0
        %v2357 = vpop.f32.mrf.mxu0
        %v2358 = vadd.f32 0.0, %v2357
        %v2359 = vpop.f32.mrf.mxu0
        %2360 = vmatprep.mubr.bf16.mxu0 0
        %2361 = vmatmul.mubr.bf16.gmra.mxu0 %v2258
        %v2362 = vpop.f32.mrf.mxu0
        %v2363 = vadd.f32 0.0, %v2362
        %v2364 = vpop.f32.mrf.mxu0
        %v2365 = vpop.f32.mrf.mxu0
        %v2366 = vadd.f32 0.0, %v2365
        %v2367 = vpop.f32.mrf.mxu0
        %2368 = vmatprep.mubr.bf16.mxu0 0
        %2369 = vmatmul.mubr.bf16.gmra.mxu0 %v2259
        %v2370 = vpop.f32.mrf.mxu0
        %v2371 = vadd.f32 0.0, %v2370
        %v2372 = vpop.f32.mrf.mxu0
        %v2373 = vpop.f32.mrf.mxu0
        %v2374 = vadd.f32 0.0, %v2373
        %v2375 = vpop.f32.mrf.mxu0
        %2376 = vmatprep.mubr.bf16.mxu0 0
        %2377 = vmatmul.mubr.bf16.gmra.mxu0 %v2260
        %v2378 = vpop.f32.mrf.mxu0
        %v2379 = vadd.f32 0.0, %v2378
        %v2380 = vpop.f32.mrf.mxu0
        %v2381 = vpop.f32.mrf.mxu0
        %v2382 = vadd.f32 0.0, %v2381
        %v2383 = vpop.f32.mrf.mxu0
        %2384 = vmatprep.mubr.bf16.mxu0 0
        %2385 = vmatmul.mubr.bf16.gmra.mxu0 %v2261
        %v2386 = vpop.f32.mrf.mxu0
        %v2387 = vadd.f32 0.0, %v2386
        %v2388 = vpop.f32.mrf.mxu0
        %v2389 = vpop.f32.mrf.mxu0
        %v2390 = vadd.f32 0.0, %v2389
        %v2391 = vpop.f32.mrf.mxu0
        %2392 = vmatprep.mubr.bf16.mxu0 0
        %2393 = vmatmul.mubr.bf16.gmra.mxu0 %v2262
        %v2394 = vpop.f32.mrf.mxu0
        %v2395 = vadd.f32 0.0, %v2394
        %v2396 = vpop.f32.mrf.mxu0
        %v2397 = vpop.f32.mrf.mxu0
        %v2398 = vadd.f32 0.0, %v2397
        %v2399 = vpop.f32.mrf.mxu0
        %2400 = vmatprep.mubr.bf16.mxu0 0
        %2401 = vmatmul.mubr.bf16.gmra.mxu0 %v2263
        %v2402 = vpop.f32.mrf.mxu0
        %v2403 = vadd.f32 0.0, %v2402
        %v2404 = vpop.f32.mrf.mxu0
        %v2405 = vpop.f32.mrf.mxu0
        %v2406 = vadd.f32 0.0, %v2405
        %v2407 = vpop.f32.mrf.mxu0
        %2408 = vdwg.mxu0
        %v2409 = vld [vmem:[#allocation5 + $0x3f8] sm:$0xf]
        %v2410 = vld [vmem:[#allocation5 + $0x3fc] sm:$0xf]
        %v2411 = vld [vmem:[#allocation5 + $0x400] sm:$0xf]
        %v2412 = vld [vmem:[#allocation5 + $0x404] sm:$0xf]
        %v2413 = vld [vmem:[#allocation5 + $0x408] sm:$0xf]
        %v2414 = vld [vmem:[#allocation5 + $0x40c] sm:$0xf]
        %v2415 = vld [vmem:[#allocation5 + $0x410] sm:$0xf]
        %v2416 = vld [vmem:[#allocation5 + $0x414] sm:$0xf]
        %v2417 = vld [vmem:[#allocation5 + $0x418] sm:$0xf]
        %v2418 = vld [vmem:[#allocation5 + $0x41c] sm:$0xf]
        %v2419 = vld [vmem:[#allocation5 + $0x420] sm:$0xf]
        %v2420 = vld [vmem:[#allocation5 + $0x424] sm:$0xf]
        %v2421 = vld [vmem:[#allocation5 + $0x428] sm:$0xf]
        %v2422 = vld [vmem:[#allocation5 + $0x42c] sm:$0xf]
        %v2423 = vld [vmem:[#allocation5 + $0x430] sm:$0xf]
        %v2424 = vld [vmem:[#allocation5 + $0x434] sm:$0xf]
        %v2425 = vld [vmem:[#allocation5 + $0x438] sm:$0x1]
        %v2426 = vunpack.c.l.bf16 %v2425
        %v2427 = vlaneseq
        %v2428 = vshrl.u32 %v2427, 7
        %v2429 = vsub.s32 0, %v2428
        %v2430 = vrot.slane %v2426, %v2429
        %v2447 = vunpack.c.l.b16 %v2409
        %v2448 = vunpack.c.l.b16 %v2410
        %v2449 = vunpack.c.l.b16 %v2411
        %v2450 = vunpack.c.l.b16 %v2412
        %v2451 = vunpack.c.l.b16 %v2413
        %v2452 = vunpack.c.l.b16 %v2414
        %v2453 = vunpack.c.l.b16 %v2415
        %v2454 = vunpack.c.l.b16 %v2416
        %v2455 = vunpack.c.l.b16 %v2417
        %v2456 = vunpack.c.l.b16 %v2418
        %v2457 = vunpack.c.l.b16 %v2419
        %v2458 = vunpack.c.l.b16 %v2420
        %v2459 = vunpack.c.l.b16 %v2421
        %v2460 = vunpack.c.l.b16 %v2422
        %v2461 = vunpack.c.l.b16 %v2423
        %v2462 = vunpack.c.l.b16 %v2424
        %v2463 = vpack.c.b16 %v2448, %v2447
        %v2464 = vpack.c.b16 %v2450, %v2449
        %v2465 = vpack.c.b16 %v2452, %v2451
        %v2466 = vpack.c.b16 %v2454, %v2453
        %v2467 = vpack.c.b16 %v2456, %v2455
        %v2468 = vpack.c.b16 %v2458, %v2457
        %v2469 = vpack.c.b16 %v2460, %v2459
        %v2470 = vpack.c.b16 %v2462, %v2461
        %2479 = vmatprep.subr.bf16.mxu0 0
        %2480 = vmatpush1.bf16.msra.mxu0 %v2470
        %2481 = vmatprep.subr.bf16.mxu0 0
        %2482 = vmatpush1.bf16.msra.mxu0 %v2469
        %2483 = vmatprep.subr.bf16.mxu0 0
        %2484 = vmatpush1.bf16.msra.mxu0 %v2468
        %2485 = vmatprep.subr.bf16.mxu0 0
        %2486 = vmatpush1.bf16.msra.mxu0 %v2467
        %2487 = vmatprep.subr.bf16.mxu0 0
        %2488 = vmatpush1.bf16.msra.mxu0 %v2466
        %2489 = vmatprep.subr.bf16.mxu0 0
        %2490 = vmatpush1.bf16.msra.mxu0 %v2465
        %2491 = vmatprep.subr.bf16.mxu0 0
        %2492 = vmatpush1.bf16.msra.mxu0 %v2464
        %2493 = vmatprep.subr.bf16.mxu0 0
        %2494 = vmatpush1.bf16.msra.mxu0 %v2463
        %2495 = vmatprep.subr.bf16.mxu0 0
        %2496 = vmatpush2.bf16.msra.mxu0 0
        %2497 = vmatprep.subr.bf16.mxu0 0
        %2498 = vmatpush2.bf16.msra.mxu0 0
        %2499 = vmatprep.subr.bf16.mxu0 0
        %2500 = vmatpush2.bf16.msra.mxu0 0
        %2501 = vmatprep.subr.bf16.mxu0 0
        %2502 = vmatpush2.bf16.msra.mxu0 0
        %2503 = vmatprep.subr.bf16.mxu0 0
        %2504 = vmatpush2.bf16.msra.mxu0 0
        %2505 = vmatprep.subr.bf16.mxu0 0
        %2506 = vmatpush2.bf16.msra.mxu0 0
        %2507 = vmatprep.subr.bf16.mxu0 0
        %2508 = vmatpush2.bf16.msra.mxu0 0
        %2509 = vmatprep.subr.bf16.mxu0 0
        %2510 = vmatpush2.bf16.msra.mxu0 0
        %2511 = vmatprep.mubr.bf16.mxu0 0
        %2512 = vmatmul.mubr.bf16.gmra.mxu0 %v594
        %v2513 = vpop.f32.mrf.mxu0
        %v2514 = vadd.f32 %v2430, %v2513
        %v2515 = vpop.f32.mrf.mxu0
        %v2516 = vpop.f32.mrf.mxu0
        %v2517 = vadd.f32 %v2430, %v2516
        %v2518 = vpop.f32.mrf.mxu0
        %2519 = vmatprep.mubr.bf16.mxu0 0
        %2520 = vmatmul.mubr.bf16.gmra.mxu0 %v595
        %v2521 = vpop.f32.mrf.mxu0
        %v2522 = vadd.f32 %v2430, %v2521
        %v2523 = vpop.f32.mrf.mxu0
        %v2524 = vpop.f32.mrf.mxu0
        %v2525 = vadd.f32 %v2430, %v2524
        %v2526 = vpop.f32.mrf.mxu0
        %2527 = vmatprep.mubr.bf16.mxu0 0
        %2528 = vmatmul.mubr.bf16.gmra.mxu0 %v596
        %v2529 = vpop.f32.mrf.mxu0
        %v2530 = vadd.f32 %v2430, %v2529
        %v2531 = vpop.f32.mrf.mxu0
        %v2532 = vpop.f32.mrf.mxu0
        %v2533 = vadd.f32 %v2430, %v2532
        %v2534 = vpop.f32.mrf.mxu0
        %2535 = vmatprep.mubr.bf16.mxu0 0
        %2536 = vmatmul.mubr.bf16.gmra.mxu0 %v597
        %v2537 = vpop.f32.mrf.mxu0
        %v2538 = vadd.f32 %v2430, %v2537
        %v2539 = vpop.f32.mrf.mxu0
        %v2540 = vpop.f32.mrf.mxu0
        %v2541 = vadd.f32 %v2430, %v2540
        %v2542 = vpop.f32.mrf.mxu0
        %2543 = vmatprep.mubr.bf16.mxu0 0
        %2544 = vmatmul.mubr.bf16.gmra.mxu0 %v598
        %v2545 = vpop.f32.mrf.mxu0
        %v2546 = vadd.f32 %v2430, %v2545
        %v2547 = vpop.f32.mrf.mxu0
        %v2548 = vpop.f32.mrf.mxu0
        %v2549 = vadd.f32 %v2430, %v2548
        %v2550 = vpop.f32.mrf.mxu0
        %2551 = vmatprep.mubr.bf16.mxu0 0
        %2552 = vmatmul.mubr.bf16.gmra.mxu0 %v599
        %v2553 = vpop.f32.mrf.mxu0
        %v2554 = vadd.f32 %v2430, %v2553
        %v2555 = vpop.f32.mrf.mxu0
        %v2556 = vpop.f32.mrf.mxu0
        %v2557 = vadd.f32 %v2430, %v2556
        %v2558 = vpop.f32.mrf.mxu0
        %2559 = vmatprep.mubr.bf16.mxu0 0
        %2560 = vmatmul.mubr.bf16.gmra.mxu0 %v600
        %v2561 = vpop.f32.mrf.mxu0
        %v2562 = vadd.f32 %v2430, %v2561
        %v2563 = vpop.f32.mrf.mxu0
        %v2564 = vpop.f32.mrf.mxu0
        %v2565 = vadd.f32 %v2430, %v2564
        %v2566 = vpop.f32.mrf.mxu0
        %2567 = vmatprep.mubr.bf16.mxu0 0
        %2568 = vmatmul.mubr.bf16.gmra.mxu0 %v601
        %v2569 = vpop.f32.mrf.mxu0
        %v2570 = vadd.f32 %v2430, %v2569
        %v2571 = vpop.f32.mrf.mxu0
        %v2572 = vpop.f32.mrf.mxu0
        %v2573 = vadd.f32 %v2430, %v2572
        %v2574 = vpop.f32.mrf.mxu0
        %2575 = vdwg.mxu0
        %v2576 = vadd.f32 %v2514, 0.0
        %v2577 = vadd.f32 %v2517, 0.0
        %v2578 = vadd.f32 %v2522, 0.0
        %v2579 = vadd.f32 %v2525, 0.0
        %v2580 = vadd.f32 %v2530, 0.0
        %v2581 = vadd.f32 %v2533, 0.0
        %v2582 = vadd.f32 %v2538, 0.0
        %v2583 = vadd.f32 %v2541, 0.0
        %v2584 = vadd.f32 %v2546, 0.0
        %v2585 = vadd.f32 %v2549, 0.0
        %v2586 = vadd.f32 %v2554, 0.0
        %v2587 = vadd.f32 %v2557, 0.0
        %v2588 = vadd.f32 %v2562, 0.0
        %v2589 = vadd.f32 %v2565, 0.0
        %v2590 = vadd.f32 %v2570, 0.0
        %v2591 = vadd.f32 %v2573, 0.0
        %2608 = vrot.lane.b32.xlu0 %v2514, 96
        %v2609 = vpop.permute.xlu0 %2608
        %2610 = vrot.lane.b32.xlu0 %v2517, 96
        %v2611 = vpop.permute.xlu0 %2610
        %2612 = vrot.lane.b32.xlu0 %v2522, 96
        %v2613 = vpop.permute.xlu0 %2612
        %2614 = vrot.lane.b32.xlu0 %v2525, 96
        %v2615 = vpop.permute.xlu0 %2614
        %2616 = vrot.lane.b32.xlu0 %v2530, 96
        %v2617 = vpop.permute.xlu0 %2616
        %2618 = vrot.lane.b32.xlu0 %v2533, 96
        %v2619 = vpop.permute.xlu0 %2618
        %2620 = vrot.lane.b32.xlu0 %v2538, 96
        %v2621 = vpop.permute.xlu0 %2620
        %2622 = vrot.lane.b32.xlu0 %v2541, 96
        %v2623 = vpop.permute.xlu0 %2622
        %2624 = vrot.lane.b32.xlu0 %v2546, 96
        %v2625 = vpop.permute.xlu0 %2624
        %2626 = vrot.lane.b32.xlu0 %v2549, 96
        %v2627 = vpop.permute.xlu0 %2626
        %2628 = vrot.lane.b32.xlu0 %v2554, 96
        %v2629 = vpop.permute.xlu0 %2628
        %2630 = vrot.lane.b32.xlu0 %v2557, 96
        %v2631 = vpop.permute.xlu0 %2630
        %2632 = vrot.lane.b32.xlu0 %v2562, 96
        %v2633 = vpop.permute.xlu0 %2632
        %2634 = vrot.lane.b32.xlu0 %v2565, 96
        %v2635 = vpop.permute.xlu0 %2634
        %2636 = vrot.lane.b32.xlu0 %v2570, 96
        %v2637 = vpop.permute.xlu0 %2636
        %2638 = vrot.lane.b32.xlu0 %v2573, 96
        %v2639 = vpop.permute.xlu0 %2638
        %v2656 = vadd.f32 %v2576, %v2609
        %v2657 = vadd.f32 %v2577, %v2611
        %v2658 = vadd.f32 %v2578, %v2613
        %v2659 = vadd.f32 %v2579, %v2615
        %v2660 = vadd.f32 %v2580, %v2617
        %v2661 = vadd.f32 %v2581, %v2619
        %v2662 = vadd.f32 %v2582, %v2621
        %v2663 = vadd.f32 %v2583, %v2623
        %v2664 = vadd.f32 %v2584, %v2625
        %v2665 = vadd.f32 %v2585, %v2627
        %v2666 = vadd.f32 %v2586, %v2629
        %v2667 = vadd.f32 %v2587, %v2631
        %v2668 = vadd.f32 %v2588, %v2633
        %v2669 = vadd.f32 %v2589, %v2635
        %v2670 = vadd.f32 %v2590, %v2637
        %v2671 = vadd.f32 %v2591, %v2639
        %2672 = vrot.lane.b32.xlu0 %v2514, 64
        %v2673 = vpop.permute.xlu0 %2672
        %2674 = vrot.lane.b32.xlu0 %v2517, 64
        %v2675 = vpop.permute.xlu0 %2674
        %2676 = vrot.lane.b32.xlu0 %v2522, 64
        %v2677 = vpop.permute.xlu0 %2676
        %2678 = vrot.lane.b32.xlu0 %v2525, 64
        %v2679 = vpop.permute.xlu0 %2678
        %2680 = vrot.lane.b32.xlu0 %v2530, 64
        %v2681 = vpop.permute.xlu0 %2680
        %2682 = vrot.lane.b32.xlu0 %v2533, 64
        %v2683 = vpop.permute.xlu0 %2682
        %2684 = vrot.lane.b32.xlu0 %v2538, 64
        %v2685 = vpop.permute.xlu0 %2684
        %2686 = vrot.lane.b32.xlu0 %v2541, 64
        %v2687 = vpop.permute.xlu0 %2686
        %2688 = vrot.lane.b32.xlu0 %v2546, 64
        %v2689 = vpop.permute.xlu0 %2688
        %2690 = vrot.lane.b32.xlu0 %v2549, 64
        %v2691 = vpop.permute.xlu0 %2690
        %2692 = vrot.lane.b32.xlu0 %v2554, 64
        %v2693 = vpop.permute.xlu0 %2692
        %2694 = vrot.lane.b32.xlu0 %v2557, 64
        %v2695 = vpop.permute.xlu0 %2694
        %2696 = vrot.lane.b32.xlu0 %v2562, 64
        %v2697 = vpop.permute.xlu0 %2696
        %2698 = vrot.lane.b32.xlu0 %v2565, 64
        %v2699 = vpop.permute.xlu0 %2698
        %2700 = vrot.lane.b32.xlu0 %v2570, 64
        %v2701 = vpop.permute.xlu0 %2700
        %2702 = vrot.lane.b32.xlu0 %v2573, 64
        %v2703 = vpop.permute.xlu0 %2702
        %v2720 = vadd.f32 %v2656, %v2673
        %v2721 = vadd.f32 %v2657, %v2675
        %v2722 = vadd.f32 %v2658, %v2677
        %v2723 = vadd.f32 %v2659, %v2679
        %v2724 = vadd.f32 %v2660, %v2681
        %v2725 = vadd.f32 %v2661, %v2683
        %v2726 = vadd.f32 %v2662, %v2685
        %v2727 = vadd.f32 %v2663, %v2687
        %v2728 = vadd.f32 %v2664, %v2689
        %v2729 = vadd.f32 %v2665, %v2691
        %v2730 = vadd.f32 %v2666, %v2693
        %v2731 = vadd.f32 %v2667, %v2695
        %v2732 = vadd.f32 %v2668, %v2697
        %v2733 = vadd.f32 %v2669, %v2699
        %v2734 = vadd.f32 %v2670, %v2701
        %v2735 = vadd.f32 %v2671, %v2703
        %2736 = vrot.lane.b32.xlu0 %v2514, 32
        %v2737 = vpop.permute.xlu0 %2736
        %2738 = vrot.lane.b32.xlu0 %v2517, 32
        %v2739 = vpop.permute.xlu0 %2738
        %2740 = vrot.lane.b32.xlu0 %v2522, 32
        %v2741 = vpop.permute.xlu0 %2740
        %2742 = vrot.lane.b32.xlu0 %v2525, 32
        %v2743 = vpop.permute.xlu0 %2742
        %2744 = vrot.lane.b32.xlu0 %v2530, 32
        %v2745 = vpop.permute.xlu0 %2744
        %2746 = vrot.lane.b32.xlu0 %v2533, 32
        %v2747 = vpop.permute.xlu0 %2746
        %2748 = vrot.lane.b32.xlu0 %v2538, 32
        %v2749 = vpop.permute.xlu0 %2748
        %2750 = vrot.lane.b32.xlu0 %v2541, 32
        %v2751 = vpop.permute.xlu0 %2750
        %2752 = vrot.lane.b32.xlu0 %v2546, 32
        %v2753 = vpop.permute.xlu0 %2752
        %2754 = vrot.lane.b32.xlu0 %v2549, 32
        %v2755 = vpop.permute.xlu0 %2754
        %2756 = vrot.lane.b32.xlu0 %v2554, 32
        %v2757 = vpop.permute.xlu0 %2756
        %2758 = vrot.lane.b32.xlu0 %v2557, 32
        %v2759 = vpop.permute.xlu0 %2758
        %2760 = vrot.lane.b32.xlu0 %v2562, 32
        %v2761 = vpop.permute.xlu0 %2760
        %2762 = vrot.lane.b32.xlu0 %v2565, 32
        %v2763 = vpop.permute.xlu0 %2762
        %2764 = vrot.lane.b32.xlu0 %v2570, 32
        %v2765 = vpop.permute.xlu0 %2764
        %2766 = vrot.lane.b32.xlu0 %v2573, 32
        %v2767 = vpop.permute.xlu0 %2766
        %v2784 = vadd.f32 %v2720, %v2737
        %v2785 = vadd.f32 %v2721, %v2739
        %v2786 = vadd.f32 %v2722, %v2741
        %v2787 = vadd.f32 %v2723, %v2743
        %v2788 = vadd.f32 %v2724, %v2745
        %v2789 = vadd.f32 %v2725, %v2747
        %v2790 = vadd.f32 %v2726, %v2749
        %v2791 = vadd.f32 %v2727, %v2751
        %v2792 = vadd.f32 %v2728, %v2753
        %v2793 = vadd.f32 %v2729, %v2755
        %v2794 = vadd.f32 %v2730, %v2757
        %v2795 = vadd.f32 %v2731, %v2759
        %v2796 = vadd.f32 %v2732, %v2761
        %v2797 = vadd.f32 %v2733, %v2763
        %v2798 = vadd.f32 %v2734, %v2765
        %v2799 = vadd.f32 %v2735, %v2767
        %v2800 = vmul.f32 %v2784, 0.25
        %v2801 = vmul.f32 %v2785, 0.25
        %v2802 = vmul.f32 %v2786, 0.25
        %v2803 = vmul.f32 %v2787, 0.25
        %v2804 = vmul.f32 %v2788, 0.25
        %v2805 = vmul.f32 %v2789, 0.25
        %v2806 = vmul.f32 %v2790, 0.25
        %v2807 = vmul.f32 %v2791, 0.25
        %v2808 = vmul.f32 %v2792, 0.25
        %v2809 = vmul.f32 %v2793, 0.25
        %v2810 = vmul.f32 %v2794, 0.25
        %v2811 = vmul.f32 %v2795, 0.25
        %v2812 = vmul.f32 %v2796, 0.25
        %v2813 = vmul.f32 %v2797, 0.25
        %v2814 = vmul.f32 %v2798, 0.25
        %v2815 = vmul.f32 %v2799, 0.25
        %v2816 = vmax.f32 %v2800, 0.0
        %v2817 = vmax.f32 %v2801, 0.0
        %v2818 = vmax.f32 %v2802, 0.0
        %v2819 = vmax.f32 %v2803, 0.0
        %v2820 = vmax.f32 %v2804, 0.0
        %v2821 = vmax.f32 %v2805, 0.0
        %v2822 = vmax.f32 %v2806, 0.0
        %v2823 = vmax.f32 %v2807, 0.0
        %v2824 = vmax.f32 %v2808, 0.0
        %v2825 = vmax.f32 %v2809, 0.0
        %v2826 = vmax.f32 %v2810, 0.0
        %v2827 = vmax.f32 %v2811, 0.0
        %v2828 = vmax.f32 %v2812, 0.0
        %v2829 = vmax.f32 %v2813, 0.0
        %v2830 = vmax.f32 %v2814, 0.0
        %v2831 = vmax.f32 %v2815, 0.0
        %v2832 = vld [vmem:[#allocation5 + $0x440] sm:$0xf]
        %v2833 = vld [vmem:[#allocation5 + $0x444] sm:$0xf]
        %v2834 = vld [vmem:[#allocation5 + $0x448] sm:$0xf]
        %v2835 = vld [vmem:[#allocation5 + $0x44c] sm:$0xf]
        %v2836 = vpack.c.bf16 %v2817, %v2816
        %v2837 = vpack.c.bf16 %v2819, %v2818
        %v2838 = vpack.c.bf16 %v2821, %v2820
        %v2839 = vpack.c.bf16 %v2823, %v2822
        %v2840 = vpack.c.bf16 %v2825, %v2824
        %v2841 = vpack.c.bf16 %v2827, %v2826
        %v2842 = vpack.c.bf16 %v2829, %v2828
        %v2843 = vpack.c.bf16 %v2831, %v2830
        %v2844 = vld [vmem:[#allocation5 + $0x450] sm:$0x1]
        %v2845 = vunpack.c.l.bf16 %v2844
        %v2846 = vlaneseq
        %v2847 = vshrl.u32 %v2846, 7
        %v2848 = vsub.s32 0, %v2847
        %v2849 = vrot.slane %v2845, %v2848
        %v2854 = vunpack.c.l.b16 %v2832
        %v2855 = vunpack.c.l.b16 %v2833
        %v2856 = vunpack.c.l.b16 %v2834
        %v2857 = vunpack.c.l.b16 %v2835
        %v2858 = vpack.c.b16 %v2855, %v2854
        %v2859 = vpack.c.b16 %v2857, %v2856
        %vm2862 = vcmask 261120
        %v2864 = vsel %vm2862, %v2836, 0
        %v2867 = vsel %vm2862, %v2837, 0
        %v2870 = vsel %vm2862, %v2838, 0
        %v2873 = vsel %vm2862, %v2839, 0
        %v2876 = vsel %vm2862, %v2840, 0
        %v2879 = vsel %vm2862, %v2841, 0
        %v2882 = vsel %vm2862, %v2842, 0
        %v2885 = vsel %vm2862, %v2843, 0
        %2887 = vmatprep.subr.bf16.mxu0 0
        %2888 = vmatpush1.bf16.msra.mxu0 0
        %2889 = vmatprep.subr.bf16.mxu0 0
        %2890 = vmatpush1.bf16.msra.mxu0 0
        %2891 = vmatprep.subr.bf16.mxu0 0
        %2892 = vmatpush1.bf16.msra.mxu0 0
        %2893 = vmatprep.subr.bf16.mxu0 0
        %2894 = vmatpush1.bf16.msra.mxu0 0
        %2895 = vmatprep.subr.bf16.mxu0 0
        %2896 = vmatpush1.bf16.msra.mxu0 0
        %2897 = vmatprep.subr.bf16.mxu0 0
        %2898 = vmatpush1.bf16.msra.mxu0 0
        %2899 = vmatprep.subr.bf16.mxu0 0
        %2900 = vmatpush1.bf16.msra.mxu0 %v2859
        %2901 = vmatprep.subr.bf16.mxu0 0
        %2902 = vmatpush1.bf16.msra.mxu0 %v2858
        %2903 = vmatprep.subr.bf16.mxu0 0
        %2904 = vmatpush2.bf16.msra.mxu0 0
        %2905 = vmatprep.subr.bf16.mxu0 0
        %2906 = vmatpush2.bf16.msra.mxu0 0
        %2907 = vmatprep.subr.bf16.mxu0 0
        %2908 = vmatpush2.bf16.msra.mxu0 0
        %2909 = vmatprep.subr.bf16.mxu0 0
        %2910 = vmatpush2.bf16.msra.mxu0 0
        %2911 = vmatprep.subr.bf16.mxu0 0
        %2912 = vmatpush2.bf16.msra.mxu0 0
        %2913 = vmatprep.subr.bf16.mxu0 0
        %2914 = vmatpush2.bf16.msra.mxu0 0
        %2915 = vmatprep.subr.bf16.mxu0 0
        %2916 = vmatpush2.bf16.msra.mxu0 0
        %2917 = vmatprep.subr.bf16.mxu0 0
        %2918 = vmatpush2.bf16.msra.mxu0 0
        %2919 = vmatprep.mubr.bf16.mxu0 0
        %2920 = vmatmul.mubr.bf16.gmra.mxu0 %v2864
        %v2921 = vpop.f32.mrf.mxu0
        %v2922 = vadd.f32 %v2849, %v2921
        %v2923 = vpop.f32.mrf.mxu0
        %v2924 = vpop.f32.mrf.mxu0
        %v2925 = vadd.f32 %v2849, %v2924
        %v2926 = vpop.f32.mrf.mxu0
        %2927 = vmatprep.mubr.bf16.mxu0 0
        %2928 = vmatmul.mubr.bf16.gmra.mxu0 %v2867
        %v2929 = vpop.f32.mrf.mxu0
        %v2930 = vadd.f32 %v2849, %v2929
        %v2931 = vpop.f32.mrf.mxu0
        %v2932 = vpop.f32.mrf.mxu0
        %v2933 = vadd.f32 %v2849, %v2932
        %v2934 = vpop.f32.mrf.mxu0
        %2935 = vmatprep.mubr.bf16.mxu0 0
        %2936 = vmatmul.mubr.bf16.gmra.mxu0 %v2870
        %v2937 = vpop.f32.mrf.mxu0
        %v2938 = vadd.f32 %v2849, %v2937
        %v2939 = vpop.f32.mrf.mxu0
        %v2940 = vpop.f32.mrf.mxu0
        %v2941 = vadd.f32 %v2849, %v2940
        %v2942 = vpop.f32.mrf.mxu0
        %2943 = vmatprep.mubr.bf16.mxu0 0
        %2944 = vmatmul.mubr.bf16.gmra.mxu0 %v2873
        %v2945 = vpop.f32.mrf.mxu0
        %v2946 = vadd.f32 %v2849, %v2945
        %v2947 = vpop.f32.mrf.mxu0
        %v2948 = vpop.f32.mrf.mxu0
        %v2949 = vadd.f32 %v2849, %v2948
        %v2950 = vpop.f32.mrf.mxu0
        %2951 = vmatprep.mubr.bf16.mxu0 0
        %2952 = vmatmul.mubr.bf16.gmra.mxu0 %v2876
        %v2953 = vpop.f32.mrf.mxu0
        %v2954 = vadd.f32 %v2849, %v2953
        %v2955 = vpop.f32.mrf.mxu0
        %v2956 = vpop.f32.mrf.mxu0
        %v2957 = vadd.f32 %v2849, %v2956
        %v2958 = vpop.f32.mrf.mxu0
        %2959 = vmatprep.mubr.bf16.mxu0 0
        %2960 = vmatmul.mubr.bf16.gmra.mxu0 %v2879
        %v2961 = vpop.f32.mrf.mxu0
        %v2962 = vadd.f32 %v2849, %v2961
        %v2963 = vpop.f32.mrf.mxu0
        %v2964 = vpop.f32.mrf.mxu0
        %v2965 = vadd.f32 %v2849, %v2964
        %v2966 = vpop.f32.mrf.mxu0
        %2967 = vmatprep.mubr.bf16.mxu0 0
        %2968 = vmatmul.mubr.bf16.gmra.mxu0 %v2882
        %v2969 = vpop.f32.mrf.mxu0
        %v2970 = vadd.f32 %v2849, %v2969
        %v2971 = vpop.f32.mrf.mxu0
        %v2972 = vpop.f32.mrf.mxu0
        %v2973 = vadd.f32 %v2849, %v2972
        %v2974 = vpop.f32.mrf.mxu0
        %2975 = vmatprep.mubr.bf16.mxu0 0
        %2976 = vmatmul.mubr.bf16.gmra.mxu0 %v2885
        %v2977 = vpop.f32.mrf.mxu0
        %v2978 = vadd.f32 %v2849, %v2977
        %v2979 = vpop.f32.mrf.mxu0
        %v2980 = vpop.f32.mrf.mxu0
        %v2981 = vadd.f32 %v2849, %v2980
        %v2982 = vpop.f32.mrf.mxu0
        %2983 = vdwg.mxu0
        %v2984 = vld [vmem:[#allocation5 + $0x498] sm:$0x1]
        %v2985 = vunpack.c.l.bf16 %v2984
        %v2986 = vld [vmem:[#allocation5 + $0x2f8] sm:$0xf]
        %v2987 = vld [vmem:[#allocation5 + $0x2fc] sm:$0xf]
        %v2988 = vld [vmem:[#allocation5 + $0x300] sm:$0xf]
        %v2989 = vld [vmem:[#allocation5 + $0x304] sm:$0xf]
        %v2990 = vld [vmem:[#allocation5 + $0x308] sm:$0xf]
        %v2991 = vld [vmem:[#allocation5 + $0x30c] sm:$0xf]
        %v2992 = vld [vmem:[#allocation5 + $0x310] sm:$0xf]
        %v2993 = vld [vmem:[#allocation5 + $0x314] sm:$0xf]
        %v2994 = vld [vmem:[#allocation5 + $0x318] sm:$0xf]
        %v2995 = vld [vmem:[#allocation5 + $0x31c] sm:$0xf]
        %v2996 = vld [vmem:[#allocation5 + $0x320] sm:$0xf]
        %v2997 = vld [vmem:[#allocation5 + $0x324] sm:$0xf]
        %v2998 = vld [vmem:[#allocation5 + $0x328] sm:$0xf]
        %v2999 = vld [vmem:[#allocation5 + $0x32c] sm:$0xf]
        %v3000 = vld [vmem:[#allocation5 + $0x330] sm:$0xf]
        %v3001 = vld [vmem:[#allocation5 + $0x334] sm:$0xf]
        %v3002 = vpack.c.bf16 %v1769, %v1768
        %v3003 = vpack.c.bf16 %v1771, %v1770
        %v3004 = vpack.c.bf16 %v1773, %v1772
        %v3005 = vpack.c.bf16 %v1775, %v1774
        %v3006 = vpack.c.bf16 %v1777, %v1776
        %v3007 = vpack.c.bf16 %v1779, %v1778
        %v3008 = vpack.c.bf16 %v1781, %v1780
        %v3009 = vpack.c.bf16 %v1783, %v1782
        %v3026 = vunpack.c.l.b16 %v2986
        %v3027 = vunpack.c.l.b16 %v2987
        %v3028 = vunpack.c.l.b16 %v2988
        %v3029 = vunpack.c.l.b16 %v2989
        %v3030 = vunpack.c.l.b16 %v2990
        %v3031 = vunpack.c.l.b16 %v2991
        %v3032 = vunpack.c.l.b16 %v2992
        %v3033 = vunpack.c.l.b16 %v2993
        %v3034 = vunpack.c.l.b16 %v2994
        %v3035 = vunpack.c.l.b16 %v2995
        %v3036 = vunpack.c.l.b16 %v2996
        %v3037 = vunpack.c.l.b16 %v2997
        %v3038 = vunpack.c.l.b16 %v2998
        %v3039 = vunpack.c.l.b16 %v2999
        %v3040 = vunpack.c.l.b16 %v3000
        %v3041 = vunpack.c.l.b16 %v3001
        %v3042 = vpack.c.b16 %v3027, %v3026
        %v3043 = vpack.c.b16 %v3029, %v3028
        %v3044 = vpack.c.b16 %v3031, %v3030
        %v3045 = vpack.c.b16 %v3033, %v3032
        %v3046 = vpack.c.b16 %v3035, %v3034
        %v3047 = vpack.c.b16 %v3037, %v3036
        %v3048 = vpack.c.b16 %v3039, %v3038
        %v3049 = vpack.c.b16 %v3041, %v3040
        %3058 = vmatprep.subr.bf16.mxu0 0
        %3059 = vmatpush1.bf16.msra.mxu0 %v3049
        %3060 = vmatprep.subr.bf16.mxu0 0
        %3061 = vmatpush1.bf16.msra.mxu0 %v3048
        %3062 = vmatprep.subr.bf16.mxu0 0
        %3063 = vmatpush1.bf16.msra.mxu0 %v3047
        %3064 = vmatprep.subr.bf16.mxu0 0
        %3065 = vmatpush1.bf16.msra.mxu0 %v3046
        %3066 = vmatprep.subr.bf16.mxu0 0
        %3067 = vmatpush1.bf16.msra.mxu0 %v3045
        %3068 = vmatprep.subr.bf16.mxu0 0
        %3069 = vmatpush1.bf16.msra.mxu0 %v3044
        %3070 = vmatprep.subr.bf16.mxu0 0
        %3071 = vmatpush1.bf16.msra.mxu0 %v3043
        %3072 = vmatprep.subr.bf16.mxu0 0
        %3073 = vmatpush1.bf16.msra.mxu0 %v3042
        %3074 = vmatprep.subr.bf16.mxu0 0
        %3075 = vmatpush2.bf16.msra.mxu0 0
        %3076 = vmatprep.subr.bf16.mxu0 0
        %3077 = vmatpush2.bf16.msra.mxu0 0
        %3078 = vmatprep.subr.bf16.mxu0 0
        %3079 = vmatpush2.bf16.msra.mxu0 0
        %3080 = vmatprep.subr.bf16.mxu0 0
        %3081 = vmatpush2.bf16.msra.mxu0 0
        %3082 = vmatprep.subr.bf16.mxu0 0
        %3083 = vmatpush2.bf16.msra.mxu0 0
        %3084 = vmatprep.subr.bf16.mxu0 0
        %3085 = vmatpush2.bf16.msra.mxu0 0
        %3086 = vmatprep.subr.bf16.mxu0 0
        %3087 = vmatpush2.bf16.msra.mxu0 0
        %3088 = vmatprep.subr.bf16.mxu0 0
        %3089 = vmatpush2.bf16.msra.mxu0 0
        %3090 = vmatprep.mubr.bf16.mxu0 0
        %3091 = vmatmul.mubr.bf16.gmra.mxu0 %v3002
        %v3092 = vpop.f32.mrf.mxu0
        %v3093 = vadd.f32 0.0, %v3092
        %v3094 = vpop.f32.mrf.mxu0
        %v3095 = vpop.f32.mrf.mxu0
        %v3096 = vadd.f32 0.0, %v3095
        %v3097 = vpop.f32.mrf.mxu0
        %3098 = vmatprep.mubr.bf16.mxu0 0
        %3099 = vmatmul.mubr.bf16.gmra.mxu0 %v3003
        %v3100 = vpop.f32.mrf.mxu0
        %v3101 = vadd.f32 0.0, %v3100
        %v3102 = vpop.f32.mrf.mxu0
        %v3103 = vpop.f32.mrf.mxu0
        %v3104 = vadd.f32 0.0, %v3103
        %v3105 = vpop.f32.mrf.mxu0
        %3106 = vmatprep.mubr.bf16.mxu0 0
        %3107 = vmatmul.mubr.bf16.gmra.mxu0 %v3004
        %v3108 = vpop.f32.mrf.mxu0
        %v3109 = vadd.f32 0.0, %v3108
        %v3110 = vpop.f32.mrf.mxu0
        %v3111 = vpop.f32.mrf.mxu0
        %v3112 = vadd.f32 0.0, %v3111
        %v3113 = vpop.f32.mrf.mxu0
        %3114 = vmatprep.mubr.bf16.mxu0 0
        %3115 = vmatmul.mubr.bf16.gmra.mxu0 %v3005
        %v3116 = vpop.f32.mrf.mxu0
        %v3117 = vadd.f32 0.0, %v3116
        %v3118 = vpop.f32.mrf.mxu0
        %v3119 = vpop.f32.mrf.mxu0
        %v3120 = vadd.f32 0.0, %v3119
        %v3121 = vpop.f32.mrf.mxu0
        %3122 = vmatprep.mubr.bf16.mxu0 0
        %3123 = vmatmul.mubr.bf16.gmra.mxu0 %v3006
        %v3124 = vpop.f32.mrf.mxu0
        %v3125 = vadd.f32 0.0, %v3124
        %v3126 = vpop.f32.mrf.mxu0
        %v3127 = vpop.f32.mrf.mxu0
        %v3128 = vadd.f32 0.0, %v3127
        %v3129 = vpop.f32.mrf.mxu0
        %3130 = vmatprep.mubr.bf16.mxu0 0
        %3131 = vmatmul.mubr.bf16.gmra.mxu0 %v3007
        %v3132 = vpop.f32.mrf.mxu0
        %v3133 = vadd.f32 0.0, %v3132
        %v3134 = vpop.f32.mrf.mxu0
        %v3135 = vpop.f32.mrf.mxu0
        %v3136 = vadd.f32 0.0, %v3135
        %v3137 = vpop.f32.mrf.mxu0
        %3138 = vmatprep.mubr.bf16.mxu0 0
        %3139 = vmatmul.mubr.bf16.gmra.mxu0 %v3008
        %v3140 = vpop.f32.mrf.mxu0
        %v3141 = vadd.f32 0.0, %v3140
        %v3142 = vpop.f32.mrf.mxu0
        %v3143 = vpop.f32.mrf.mxu0
        %v3144 = vadd.f32 0.0, %v3143
        %v3145 = vpop.f32.mrf.mxu0
        %3146 = vmatprep.mubr.bf16.mxu0 0
        %3147 = vmatmul.mubr.bf16.gmra.mxu0 %v3009
        %v3148 = vpop.f32.mrf.mxu0
        %v3149 = vadd.f32 0.0, %v3148
        %v3150 = vpop.f32.mrf.mxu0
        %v3151 = vpop.f32.mrf.mxu0
        %v3152 = vadd.f32 0.0, %v3151
        %v3153 = vpop.f32.mrf.mxu0
        %3154 = vdwg.mxu0
        %v3155 = vmul.f32 %v3093, %v2922
        %v3156 = vmul.f32 %v3096, %v2925
        %v3157 = vmul.f32 %v3101, %v2930
        %v3158 = vmul.f32 %v3104, %v2933
        %v3159 = vmul.f32 %v3109, %v2938
        %v3160 = vmul.f32 %v3112, %v2941
        %v3161 = vmul.f32 %v3117, %v2946
        %v3162 = vmul.f32 %v3120, %v2949
        %v3163 = vmul.f32 %v3125, %v2954
        %v3164 = vmul.f32 %v3128, %v2957
        %v3165 = vmul.f32 %v3133, %v2962
        %v3166 = vmul.f32 %v3136, %v2965
        %v3167 = vmul.f32 %v3141, %v2970
        %v3168 = vmul.f32 %v3144, %v2973
        %v3169 = vmul.f32 %v3149, %v2978
        %v3170 = vmul.f32 %v3152, %v2981
        %v3171 = vadd.f32 %v3155, 0.0
        %v3172 = vadd.f32 %v3156, 0.0
        %v3173 = vadd.f32 %v3157, 0.0
        %v3174 = vadd.f32 %v3158, 0.0
        %v3175 = vadd.f32 %v3159, 0.0
        %v3176 = vadd.f32 %v3160, 0.0
        %v3177 = vadd.f32 %v3161, 0.0
        %v3178 = vadd.f32 %v3162, 0.0
        %v3179 = vadd.f32 %v3163, 0.0
        %v3180 = vadd.f32 %v3164, 0.0
        %v3181 = vadd.f32 %v3165, 0.0
        %v3182 = vadd.f32 %v3166, 0.0
        %v3183 = vadd.f32 %v3167, 0.0
        %v3184 = vadd.f32 %v3168, 0.0
        %v3185 = vadd.f32 %v3169, 0.0
        %v3186 = vadd.f32 %v3170, 0.0
        %3203 = vrot.lane.b32.xlu0 %v3155, 96
        %v3204 = vpop.permute.xlu0 %3203
        %3205 = vrot.lane.b32.xlu0 %v3156, 96
        %v3206 = vpop.permute.xlu0 %3205
        %3207 = vrot.lane.b32.xlu0 %v3157, 96
        %v3208 = vpop.permute.xlu0 %3207
        %3209 = vrot.lane.b32.xlu0 %v3158, 96
        %v3210 = vpop.permute.xlu0 %3209
        %3211 = vrot.lane.b32.xlu0 %v3159, 96
        %v3212 = vpop.permute.xlu0 %3211
        %3213 = vrot.lane.b32.xlu0 %v3160, 96
        %v3214 = vpop.permute.xlu0 %3213
        %3215 = vrot.lane.b32.xlu0 %v3161, 96
        %v3216 = vpop.permute.xlu0 %3215
        %3217 = vrot.lane.b32.xlu0 %v3162, 96
        %v3218 = vpop.permute.xlu0 %3217
        %3219 = vrot.lane.b32.xlu0 %v3163, 96
        %v3220 = vpop.permute.xlu0 %3219
        %3221 = vrot.lane.b32.xlu0 %v3164, 96
        %v3222 = vpop.permute.xlu0 %3221
        %3223 = vrot.lane.b32.xlu0 %v3165, 96
        %v3224 = vpop.permute.xlu0 %3223
        %3225 = vrot.lane.b32.xlu0 %v3166, 96
        %v3226 = vpop.permute.xlu0 %3225
        %3227 = vrot.lane.b32.xlu0 %v3167, 96
        %v3228 = vpop.permute.xlu0 %3227
        %3229 = vrot.lane.b32.xlu0 %v3168, 96
        %v3230 = vpop.permute.xlu0 %3229
        %3231 = vrot.lane.b32.xlu0 %v3169, 96
        %v3232 = vpop.permute.xlu0 %3231
        %3233 = vrot.lane.b32.xlu0 %v3170, 96
        %v3234 = vpop.permute.xlu0 %3233
        %v3251 = vadd.f32 %v3171, %v3204
        %v3252 = vadd.f32 %v3172, %v3206
        %v3253 = vadd.f32 %v3173, %v3208
        %v3254 = vadd.f32 %v3174, %v3210
        %v3255 = vadd.f32 %v3175, %v3212
        %v3256 = vadd.f32 %v3176, %v3214
        %v3257 = vadd.f32 %v3177, %v3216
        %v3258 = vadd.f32 %v3178, %v3218
        %v3259 = vadd.f32 %v3179, %v3220
        %v3260 = vadd.f32 %v3180, %v3222
        %v3261 = vadd.f32 %v3181, %v3224
        %v3262 = vadd.f32 %v3182, %v3226
        %v3263 = vadd.f32 %v3183, %v3228
        %v3264 = vadd.f32 %v3184, %v3230
        %v3265 = vadd.f32 %v3185, %v3232
        %v3266 = vadd.f32 %v3186, %v3234
        %3267 = vrot.lane.b32.xlu0 %v3155, 64
        %v3268 = vpop.permute.xlu0 %3267
        %3269 = vrot.lane.b32.xlu0 %v3156, 64
        %v3270 = vpop.permute.xlu0 %3269
        %3271 = vrot.lane.b32.xlu0 %v3157, 64
        %v3272 = vpop.permute.xlu0 %3271
        %3273 = vrot.lane.b32.xlu0 %v3158, 64
        %v3274 = vpop.permute.xlu0 %3273
        %3275 = vrot.lane.b32.xlu0 %v3159, 64
        %v3276 = vpop.permute.xlu0 %3275
        %3277 = vrot.lane.b32.xlu0 %v3160, 64
        %v3278 = vpop.permute.xlu0 %3277
        %3279 = vrot.lane.b32.xlu0 %v3161, 64
        %v3280 = vpop.permute.xlu0 %3279
        %3281 = vrot.lane.b32.xlu0 %v3162, 64
        %v3282 = vpop.permute.xlu0 %3281
        %3283 = vrot.lane.b32.xlu0 %v3163, 64
        %v3284 = vpop.permute.xlu0 %3283
        %3285 = vrot.lane.b32.xlu0 %v3164, 64
        %v3286 = vpop.permute.xlu0 %3285
        %3287 = vrot.lane.b32.xlu0 %v3165, 64
        %v3288 = vpop.permute.xlu0 %3287
        %3289 = vrot.lane.b32.xlu0 %v3166, 64
        %v3290 = vpop.permute.xlu0 %3289
        %3291 = vrot.lane.b32.xlu0 %v3167, 64
        %v3292 = vpop.permute.xlu0 %3291
        %3293 = vrot.lane.b32.xlu0 %v3168, 64
        %v3294 = vpop.permute.xlu0 %3293
        %3295 = vrot.lane.b32.xlu0 %v3169, 64
        %v3296 = vpop.permute.xlu0 %3295
        %3297 = vrot.lane.b32.xlu0 %v3170, 64
        %v3298 = vpop.permute.xlu0 %3297
        %v3315 = vadd.f32 %v3251, %v3268
        %v3316 = vadd.f32 %v3252, %v3270
        %v3317 = vadd.f32 %v3253, %v3272
        %v3318 = vadd.f32 %v3254, %v3274
        %v3319 = vadd.f32 %v3255, %v3276
        %v3320 = vadd.f32 %v3256, %v3278
        %v3321 = vadd.f32 %v3257, %v3280
        %v3322 = vadd.f32 %v3258, %v3282
        %v3323 = vadd.f32 %v3259, %v3284
        %v3324 = vadd.f32 %v3260, %v3286
        %v3325 = vadd.f32 %v3261, %v3288
        %v3326 = vadd.f32 %v3262, %v3290
        %v3327 = vadd.f32 %v3263, %v3292
        %v3328 = vadd.f32 %v3264, %v3294
        %v3329 = vadd.f32 %v3265, %v3296
        %v3330 = vadd.f32 %v3266, %v3298
        %3331 = vrot.lane.b32.xlu0 %v3155, 32
        %v3332 = vpop.permute.xlu0 %3331
        %3333 = vrot.lane.b32.xlu0 %v3156, 32
        %v3334 = vpop.permute.xlu0 %3333
        %3335 = vrot.lane.b32.xlu0 %v3157, 32
        %v3336 = vpop.permute.xlu0 %3335
        %3337 = vrot.lane.b32.xlu0 %v3158, 32
        %v3338 = vpop.permute.xlu0 %3337
        %3339 = vrot.lane.b32.xlu0 %v3159, 32
        %v3340 = vpop.permute.xlu0 %3339
        %3341 = vrot.lane.b32.xlu0 %v3160, 32
        %v3342 = vpop.permute.xlu0 %3341
        %3343 = vrot.lane.b32.xlu0 %v3161, 32
        %v3344 = vpop.permute.xlu0 %3343
        %3345 = vrot.lane.b32.xlu0 %v3162, 32
        %v3346 = vpop.permute.xlu0 %3345
        %3347 = vrot.lane.b32.xlu0 %v3163, 32
        %v3348 = vpop.permute.xlu0 %3347
        %3349 = vrot.lane.b32.xlu0 %v3164, 32
        %v3350 = vpop.permute.xlu0 %3349
        %3351 = vrot.lane.b32.xlu0 %v3165, 32
        %v3352 = vpop.permute.xlu0 %3351
        %3353 = vrot.lane.b32.xlu0 %v3166, 32
        %v3354 = vpop.permute.xlu0 %3353
        %3355 = vrot.lane.b32.xlu0 %v3167, 32
        %v3356 = vpop.permute.xlu0 %3355
        %3357 = vrot.lane.b32.xlu0 %v3168, 32
        %v3358 = vpop.permute.xlu0 %3357
        %3359 = vrot.lane.b32.xlu0 %v3169, 32
        %v3360 = vpop.permute.xlu0 %3359
        %3361 = vrot.lane.b32.xlu0 %v3170, 32
        %v3362 = vpop.permute.xlu0 %3361
        %v3379 = vadd.f32 %v3315, %v3332
        %v3380 = vadd.f32 %v3316, %v3334
        %v3381 = vadd.f32 %v3317, %v3336
        %v3382 = vadd.f32 %v3318, %v3338
        %v3383 = vadd.f32 %v3319, %v3340
        %v3384 = vadd.f32 %v3320, %v3342
        %v3385 = vadd.f32 %v3321, %v3344
        %v3386 = vadd.f32 %v3322, %v3346
        %v3387 = vadd.f32 %v3323, %v3348
        %v3388 = vadd.f32 %v3324, %v3350
        %v3389 = vadd.f32 %v3325, %v3352
        %v3390 = vadd.f32 %v3326, %v3354
        %v3391 = vadd.f32 %v3327, %v3356
        %v3392 = vadd.f32 %v3328, %v3358
        %v3393 = vadd.f32 %v3329, %v3360
        %v3394 = vadd.f32 %v3330, %v3362
        %v3395 = vmax.f32 %v3379, 0.0
        %v3396 = vmax.f32 %v3380, 0.0
        %v3397 = vmax.f32 %v3381, 0.0
        %v3398 = vmax.f32 %v3382, 0.0
        %v3399 = vmax.f32 %v3383, 0.0
        %v3400 = vmax.f32 %v3384, 0.0
        %v3401 = vmax.f32 %v3385, 0.0
        %v3402 = vmax.f32 %v3386, 0.0
        %v3403 = vmax.f32 %v3387, 0.0
        %v3404 = vmax.f32 %v3388, 0.0
        %v3405 = vmax.f32 %v3389, 0.0
        %v3406 = vmax.f32 %v3390, 0.0
        %v3407 = vmax.f32 %v3391, 0.0
        %v3408 = vmax.f32 %v3392, 0.0
        %v3409 = vmax.f32 %v3393, 0.0
        %v3410 = vmax.f32 %v3394, 0.0
        %v3411 = vld [vmem:[#allocation5 + $0x458] sm:$0xf]
        %v3412 = vld [vmem:[#allocation5 + $0x45c] sm:$0xf]
        %v3413 = vld [vmem:[#allocation5 + $0x460] sm:$0xf]
        %v3414 = vld [vmem:[#allocation5 + $0x464] sm:$0xf]
        %v3415 = vpack.c.bf16 %v3396, %v3395
        %v3416 = vpack.c.bf16 %v3398, %v3397
        %v3417 = vpack.c.bf16 %v3400, %v3399
        %v3418 = vpack.c.bf16 %v3402, %v3401
        %v3419 = vpack.c.bf16 %v3404, %v3403
        %v3420 = vpack.c.bf16 %v3406, %v3405
        %v3421 = vpack.c.bf16 %v3408, %v3407
        %v3422 = vpack.c.bf16 %v3410, %v3409
        %v3427 = vunpack.c.l.b16 %v3411
        %v3428 = vunpack.c.l.b16 %v3412
        %v3429 = vunpack.c.l.b16 %v3413
        %v3430 = vunpack.c.l.b16 %v3414
        %v3431 = vpack.c.b16 %v3428, %v3427
        %v3432 = vpack.c.b16 %v3430, %v3429
        %v3436 = vsel %vm2862, %v3415, 0
        %v3439 = vsel %vm2862, %v3416, 0
        %v3442 = vsel %vm2862, %v3417, 0
        %v3445 = vsel %vm2862, %v3418, 0
        %v3448 = vsel %vm2862, %v3419, 0
        %v3451 = vsel %vm2862, %v3420, 0
        %v3454 = vsel %vm2862, %v3421, 0
        %v3457 = vsel %vm2862, %v3422, 0
        %3459 = vmatprep.subr.bf16.mxu0 0
        %3460 = vmatpush1.bf16.msra.mxu0 0
        %3461 = vmatprep.subr.bf16.mxu0 0
        %3462 = vmatpush1.bf16.msra.mxu0 0
        %3463 = vmatprep.subr.bf16.mxu0 0
        %3464 = vmatpush1.bf16.msra.mxu0 0
        %3465 = vmatprep.subr.bf16.mxu0 0
        %3466 = vmatpush1.bf16.msra.mxu0 0
        %3467 = vmatprep.subr.bf16.mxu0 0
        %3468 = vmatpush1.bf16.msra.mxu0 0
        %3469 = vmatprep.subr.bf16.mxu0 0
        %3470 = vmatpush1.bf16.msra.mxu0 0
        %3471 = vmatprep.subr.bf16.mxu0 0
        %3472 = vmatpush1.bf16.msra.mxu0 %v3432
        %3473 = vmatprep.subr.bf16.mxu0 0
        %3474 = vmatpush1.bf16.msra.mxu0 %v3431
        %3475 = vmatprep.subr.bf16.mxu0 0
        %3476 = vmatpush2.bf16.msra.mxu0 0
        %3477 = vmatprep.subr.bf16.mxu0 0
        %3478 = vmatpush2.bf16.msra.mxu0 0
        %3479 = vmatprep.subr.bf16.mxu0 0
        %3480 = vmatpush2.bf16.msra.mxu0 0
        %3481 = vmatprep.subr.bf16.mxu0 0
        %3482 = vmatpush2.bf16.msra.mxu0 0
        %3483 = vmatprep.subr.bf16.mxu0 0
        %3484 = vmatpush2.bf16.msra.mxu0 0
        %3485 = vmatprep.subr.bf16.mxu0 0
        %3486 = vmatpush2.bf16.msra.mxu0 0
        %3487 = vmatprep.subr.bf16.mxu0 0
        %3488 = vmatpush2.bf16.msra.mxu0 0
        %3489 = vmatprep.subr.bf16.mxu0 0
        %3490 = vmatpush2.bf16.msra.mxu0 0
        %3491 = vmatprep.mubr.bf16.mxu0 0
        %3492 = vmatmul.mubr.bf16.gmra.mxu0 %v3436
        %v3493 = vpop.f32.mrf.mxu0
        %v3494 = vadd.f32 0.0, %v3493
        %v3495 = vpop.f32.mrf.mxu0
        %v3496 = vpop.f32.mrf.mxu0
        %v3497 = vadd.f32 0.0, %v3496
        %v3498 = vpop.f32.mrf.mxu0
        %3499 = vmatprep.mubr.bf16.mxu0 0
        %3500 = vmatmul.mubr.bf16.gmra.mxu0 %v3439
        %v3501 = vpop.f32.mrf.mxu0
        %v3502 = vadd.f32 0.0, %v3501
        %v3503 = vpop.f32.mrf.mxu0
        %v3504 = vpop.f32.mrf.mxu0
        %v3505 = vadd.f32 0.0, %v3504
        %v3506 = vpop.f32.mrf.mxu0
        %3507 = vmatprep.mubr.bf16.mxu0 0
        %3508 = vmatmul.mubr.bf16.gmra.mxu0 %v3442
        %v3509 = vpop.f32.mrf.mxu0
        %v3510 = vadd.f32 0.0, %v3509
        %v3511 = vpop.f32.mrf.mxu0
        %v3512 = vpop.f32.mrf.mxu0
        %v3513 = vadd.f32 0.0, %v3512
        %v3514 = vpop.f32.mrf.mxu0
        %3515 = vmatprep.mubr.bf16.mxu0 0
        %3516 = vmatmul.mubr.bf16.gmra.mxu0 %v3445
        %v3517 = vpop.f32.mrf.mxu0
        %v3518 = vadd.f32 0.0, %v3517
        %v3519 = vpop.f32.mrf.mxu0
        %v3520 = vpop.f32.mrf.mxu0
        %v3521 = vadd.f32 0.0, %v3520
        %v3522 = vpop.f32.mrf.mxu0
        %3523 = vmatprep.mubr.bf16.mxu0 0
        %3524 = vmatmul.mubr.bf16.gmra.mxu0 %v3448
        %v3525 = vpop.f32.mrf.mxu0
        %v3526 = vadd.f32 0.0, %v3525
        %v3527 = vpop.f32.mrf.mxu0
        %v3528 = vpop.f32.mrf.mxu0
        %v3529 = vadd.f32 0.0, %v3528
        %v3530 = vpop.f32.mrf.mxu0
        %3531 = vmatprep.mubr.bf16.mxu0 0
        %3532 = vmatmul.mubr.bf16.gmra.mxu0 %v3451
        %v3533 = vpop.f32.mrf.mxu0
        %v3534 = vadd.f32 0.0, %v3533
        %v3535 = vpop.f32.mrf.mxu0
        %v3536 = vpop.f32.mrf.mxu0
        %v3537 = vadd.f32 0.0, %v3536
        %v3538 = vpop.f32.mrf.mxu0
        %3539 = vmatprep.mubr.bf16.mxu0 0
        %3540 = vmatmul.mubr.bf16.gmra.mxu0 %v3454
        %v3541 = vpop.f32.mrf.mxu0
        %v3542 = vadd.f32 0.0, %v3541
        %v3543 = vpop.f32.mrf.mxu0
        %v3544 = vpop.f32.mrf.mxu0
        %v3545 = vadd.f32 0.0, %v3544
        %v3546 = vpop.f32.mrf.mxu0
        %3547 = vmatprep.mubr.bf16.mxu0 0
        %3548 = vmatmul.mubr.bf16.gmra.mxu0 %v3457
        %v3549 = vpop.f32.mrf.mxu0
        %v3550 = vadd.f32 0.0, %v3549
        %v3551 = vpop.f32.mrf.mxu0
        %v3552 = vpop.f32.mrf.mxu0
        %v3553 = vadd.f32 0.0, %v3552
        %v3554 = vpop.f32.mrf.mxu0
        %3555 = vdwg.mxu0
        %v3556 = vlaneseq
        %v3557 = vshrl.u32 %v3556, 7
        %v3558 = vsub.s32 0, %v3557
        %v3559 = vrot.slane %v2985, %v3558
        %v3560 = vadd.f32 %v3559, %v3494
        %v3561 = vadd.f32 %v3559, %v3497
        %v3562 = vadd.f32 %v3559, %v3502
        %v3563 = vadd.f32 %v3559, %v3505
        %v3564 = vadd.f32 %v3559, %v3510
        %v3565 = vadd.f32 %v3559, %v3513
        %v3566 = vadd.f32 %v3559, %v3518
        %v3567 = vadd.f32 %v3559, %v3521
        %v3568 = vadd.f32 %v3559, %v3526
        %v3569 = vadd.f32 %v3559, %v3529
        %v3570 = vadd.f32 %v3559, %v3534
        %v3571 = vadd.f32 %v3559, %v3537
        %v3572 = vadd.f32 %v3559, %v3542
        %v3573 = vadd.f32 %v3559, %v3545
        %v3574 = vadd.f32 %v3559, %v3550
        %v3575 = vadd.f32 %v3559, %v3553
        %v3576 = vld [vmem:[#allocation5 + $0x338] sm:$0xf]
        %v3577 = vld [vmem:[#allocation5 + $0x33c] sm:$0xf]
        %v3578 = vld [vmem:[#allocation5 + $0x340] sm:$0xf]
        %v3579 = vld [vmem:[#allocation5 + $0x344] sm:$0xf]
        %v3580 = vld [vmem:[#allocation5 + $0x348] sm:$0xf]
        %v3581 = vld [vmem:[#allocation5 + $0x34c] sm:$0xf]
        %v3582 = vld [vmem:[#allocation5 + $0x350] sm:$0xf]
        %v3583 = vld [vmem:[#allocation5 + $0x354] sm:$0xf]
        %v3584 = vld [vmem:[#allocation5 + $0x358] sm:$0xf]
        %v3585 = vld [vmem:[#allocation5 + $0x35c] sm:$0xf]
        %v3586 = vld [vmem:[#allocation5 + $0x360] sm:$0xf]
        %v3587 = vld [vmem:[#allocation5 + $0x364] sm:$0xf]
        %v3588 = vld [vmem:[#allocation5 + $0x368] sm:$0xf]
        %v3589 = vld [vmem:[#allocation5 + $0x36c] sm:$0xf]
        %v3590 = vld [vmem:[#allocation5 + $0x370] sm:$0xf]
        %v3591 = vld [vmem:[#allocation5 + $0x374] sm:$0xf]
        %v3608 = vunpack.c.l.b16 %v3576
        %v3609 = vunpack.c.l.b16 %v3577
        %v3610 = vunpack.c.l.b16 %v3578
        %v3611 = vunpack.c.l.b16 %v3579
        %v3612 = vunpack.c.l.b16 %v3580
        %v3613 = vunpack.c.l.b16 %v3581
        %v3614 = vunpack.c.l.b16 %v3582
        %v3615 = vunpack.c.l.b16 %v3583
        %v3616 = vunpack.c.l.b16 %v3584
        %v3617 = vunpack.c.l.b16 %v3585
        %v3618 = vunpack.c.l.b16 %v3586
        %v3619 = vunpack.c.l.b16 %v3587
        %v3620 = vunpack.c.l.b16 %v3588
        %v3621 = vunpack.c.l.b16 %v3589
        %v3622 = vunpack.c.l.b16 %v3590
        %v3623 = vunpack.c.l.b16 %v3591
        %v3624 = vpack.c.b16 %v3609, %v3608
        %v3625 = vpack.c.b16 %v3611, %v3610
        %v3626 = vpack.c.b16 %v3613, %v3612
        %v3627 = vpack.c.b16 %v3615, %v3614
        %v3628 = vpack.c.b16 %v3617, %v3616
        %v3629 = vpack.c.b16 %v3619, %v3618
        %v3630 = vpack.c.b16 %v3621, %v3620
        %v3631 = vpack.c.b16 %v3623, %v3622
        %3640 = vmatprep.subr.bf16.mxu0 0
        %3641 = vmatpush1.bf16.msra.mxu0 %v3631
        %3642 = vmatprep.subr.bf16.mxu0 0
        %3643 = vmatpush1.bf16.msra.mxu0 %v3630
        %3644 = vmatprep.subr.bf16.mxu0 0
        %3645 = vmatpush1.bf16.msra.mxu0 %v3629
        %3646 = vmatprep.subr.bf16.mxu0 0
        %3647 = vmatpush1.bf16.msra.mxu0 %v3628
        %3648 = vmatprep.subr.bf16.mxu0 0
        %3649 = vmatpush1.bf16.msra.mxu0 %v3627
        %3650 = vmatprep.subr.bf16.mxu0 0
        %3651 = vmatpush1.bf16.msra.mxu0 %v3626
        %3652 = vmatprep.subr.bf16.mxu0 0
        %3653 = vmatpush1.bf16.msra.mxu0 %v3625
        %3654 = vmatprep.subr.bf16.mxu0 0
        %3655 = vmatpush1.bf16.msra.mxu0 %v3624
        %3656 = vmatprep.subr.bf16.mxu0 0
        %3657 = vmatpush2.bf16.msra.mxu0 0
        %3658 = vmatprep.subr.bf16.mxu0 0
        %3659 = vmatpush2.bf16.msra.mxu0 0
        %3660 = vmatprep.subr.bf16.mxu0 0
        %3661 = vmatpush2.bf16.msra.mxu0 0
        %3662 = vmatprep.subr.bf16.mxu0 0
        %3663 = vmatpush2.bf16.msra.mxu0 0
        %3664 = vmatprep.subr.bf16.mxu0 0
        %3665 = vmatpush2.bf16.msra.mxu0 0
        %3666 = vmatprep.subr.bf16.mxu0 0
        %3667 = vmatpush2.bf16.msra.mxu0 0
        %3668 = vmatprep.subr.bf16.mxu0 0
        %3669 = vmatpush2.bf16.msra.mxu0 0
        %3670 = vmatprep.subr.bf16.mxu0 0
        %3671 = vmatpush2.bf16.msra.mxu0 0
        %3672 = vmatprep.mubr.bf16.mxu0 0
        %3673 = vmatmul.mubr.bf16.gmra.mxu0 %v3002
        %v3674 = vpop.f32.mrf.mxu0
        %v3675 = vadd.f32 0.0, %v3674
        %v3676 = vpop.f32.mrf.mxu0
        %v3677 = vpop.f32.mrf.mxu0
        %v3678 = vadd.f32 0.0, %v3677
        %v3679 = vpop.f32.mrf.mxu0
        %3680 = vmatprep.mubr.bf16.mxu0 0
        %3681 = vmatmul.mubr.bf16.gmra.mxu0 %v3003
        %v3682 = vpop.f32.mrf.mxu0
        %v3683 = vadd.f32 0.0, %v3682
        %v3684 = vpop.f32.mrf.mxu0
        %v3685 = vpop.f32.mrf.mxu0
        %v3686 = vadd.f32 0.0, %v3685
        %v3687 = vpop.f32.mrf.mxu0
        %3688 = vmatprep.mubr.bf16.mxu0 0
        %3689 = vmatmul.mubr.bf16.gmra.mxu0 %v3004
        %v3690 = vpop.f32.mrf.mxu0
        %v3691 = vadd.f32 0.0, %v3690
        %v3692 = vpop.f32.mrf.mxu0
        %v3693 = vpop.f32.mrf.mxu0
        %v3694 = vadd.f32 0.0, %v3693
        %v3695 = vpop.f32.mrf.mxu0
        %3696 = vmatprep.mubr.bf16.mxu0 0
        %3697 = vmatmul.mubr.bf16.gmra.mxu0 %v3005
        %v3698 = vpop.f32.mrf.mxu0
        %v3699 = vadd.f32 0.0, %v3698
        %v3700 = vpop.f32.mrf.mxu0
        %v3701 = vpop.f32.mrf.mxu0
        %v3702 = vadd.f32 0.0, %v3701
        %v3703 = vpop.f32.mrf.mxu0
        %3704 = vmatprep.mubr.bf16.mxu0 0
        %3705 = vmatmul.mubr.bf16.gmra.mxu0 %v3006
        %v3706 = vpop.f32.mrf.mxu0
        %v3707 = vadd.f32 0.0, %v3706
        %v3708 = vpop.f32.mrf.mxu0
        %v3709 = vpop.f32.mrf.mxu0
        %v3710 = vadd.f32 0.0, %v3709
        %v3711 = vpop.f32.mrf.mxu0
        %3712 = vmatprep.mubr.bf16.mxu0 0
        %3713 = vmatmul.mubr.bf16.gmra.mxu0 %v3007
        %v3714 = vpop.f32.mrf.mxu0
        %v3715 = vadd.f32 0.0, %v3714
        %v3716 = vpop.f32.mrf.mxu0
        %v3717 = vpop.f32.mrf.mxu0
        %v3718 = vadd.f32 0.0, %v3717
        %v3719 = vpop.f32.mrf.mxu0
        %3720 = vmatprep.mubr.bf16.mxu0 0
        %3721 = vmatmul.mubr.bf16.gmra.mxu0 %v3008
        %v3722 = vpop.f32.mrf.mxu0
        %v3723 = vadd.f32 0.0, %v3722
        %v3724 = vpop.f32.mrf.mxu0
        %v3725 = vpop.f32.mrf.mxu0
        %v3726 = vadd.f32 0.0, %v3725
        %v3727 = vpop.f32.mrf.mxu0
        %3728 = vmatprep.mubr.bf16.mxu0 0
        %3729 = vmatmul.mubr.bf16.gmra.mxu0 %v3009
        %v3730 = vpop.f32.mrf.mxu0
        %v3731 = vadd.f32 0.0, %v3730
        %v3732 = vpop.f32.mrf.mxu0
        %v3733 = vpop.f32.mrf.mxu0
        %v3734 = vadd.f32 0.0, %v3733
        %v3735 = vpop.f32.mrf.mxu0
        %3736 = vdwg.mxu0
        %v3737 = vmul.f32 %v3675, %v2922
        %v3738 = vmul.f32 %v3678, %v2925
        %v3739 = vmul.f32 %v3683, %v2930
        %v3740 = vmul.f32 %v3686, %v2933
        %v3741 = vmul.f32 %v3691, %v2938
        %v3742 = vmul.f32 %v3694, %v2941
        %v3743 = vmul.f32 %v3699, %v2946
        %v3744 = vmul.f32 %v3702, %v2949
        %v3745 = vmul.f32 %v3707, %v2954
        %v3746 = vmul.f32 %v3710, %v2957
        %v3747 = vmul.f32 %v3715, %v2962
        %v3748 = vmul.f32 %v3718, %v2965
        %v3749 = vmul.f32 %v3723, %v2970
        %v3750 = vmul.f32 %v3726, %v2973
        %v3751 = vmul.f32 %v3731, %v2978
        %v3752 = vmul.f32 %v3734, %v2981
        %v3753 = vadd.f32 %v3737, 0.0
        %v3754 = vadd.f32 %v3738, 0.0
        %v3755 = vadd.f32 %v3739, 0.0
        %v3756 = vadd.f32 %v3740, 0.0
        %v3757 = vadd.f32 %v3741, 0.0
        %v3758 = vadd.f32 %v3742, 0.0
        %v3759 = vadd.f32 %v3743, 0.0
        %v3760 = vadd.f32 %v3744, 0.0
        %v3761 = vadd.f32 %v3745, 0.0
        %v3762 = vadd.f32 %v3746, 0.0
        %v3763 = vadd.f32 %v3747, 0.0
        %v3764 = vadd.f32 %v3748, 0.0
        %v3765 = vadd.f32 %v3749, 0.0
        %v3766 = vadd.f32 %v3750, 0.0
        %v3767 = vadd.f32 %v3751, 0.0
        %v3768 = vadd.f32 %v3752, 0.0
        %3785 = vrot.lane.b32.xlu0 %v3737, 96
        %v3786 = vpop.permute.xlu0 %3785
        %3787 = vrot.lane.b32.xlu0 %v3738, 96
        %v3788 = vpop.permute.xlu0 %3787
        %3789 = vrot.lane.b32.xlu0 %v3739, 96
        %v3790 = vpop.permute.xlu0 %3789
        %3791 = vrot.lane.b32.xlu0 %v3740, 96
        %v3792 = vpop.permute.xlu0 %3791
        %3793 = vrot.lane.b32.xlu0 %v3741, 96
        %v3794 = vpop.permute.xlu0 %3793
        %3795 = vrot.lane.b32.xlu0 %v3742, 96
        %v3796 = vpop.permute.xlu0 %3795
        %3797 = vrot.lane.b32.xlu0 %v3743, 96
        %v3798 = vpop.permute.xlu0 %3797
        %3799 = vrot.lane.b32.xlu0 %v3744, 96
        %v3800 = vpop.permute.xlu0 %3799
        %3801 = vrot.lane.b32.xlu0 %v3745, 96
        %v3802 = vpop.permute.xlu0 %3801
        %3803 = vrot.lane.b32.xlu0 %v3746, 96
        %v3804 = vpop.permute.xlu0 %3803
        %3805 = vrot.lane.b32.xlu0 %v3747, 96
        %v3806 = vpop.permute.xlu0 %3805
        %3807 = vrot.lane.b32.xlu0 %v3748, 96
        %v3808 = vpop.permute.xlu0 %3807
        %3809 = vrot.lane.b32.xlu0 %v3749, 96
        %v3810 = vpop.permute.xlu0 %3809
        %3811 = vrot.lane.b32.xlu0 %v3750, 96
        %v3812 = vpop.permute.xlu0 %3811
        %3813 = vrot.lane.b32.xlu0 %v3751, 96
        %v3814 = vpop.permute.xlu0 %3813
        %3815 = vrot.lane.b32.xlu0 %v3752, 96
        %v3816 = vpop.permute.xlu0 %3815
        %v3833 = vadd.f32 %v3753, %v3786
        %v3834 = vadd.f32 %v3754, %v3788
        %v3835 = vadd.f32 %v3755, %v3790
        %v3836 = vadd.f32 %v3756, %v3792
        %v3837 = vadd.f32 %v3757, %v3794
        %v3838 = vadd.f32 %v3758, %v3796
        %v3839 = vadd.f32 %v3759, %v3798
        %v3840 = vadd.f32 %v3760, %v3800
        %v3841 = vadd.f32 %v3761, %v3802
        %v3842 = vadd.f32 %v3762, %v3804
        %v3843 = vadd.f32 %v3763, %v3806
        %v3844 = vadd.f32 %v3764, %v3808
        %v3845 = vadd.f32 %v3765, %v3810
        %v3846 = vadd.f32 %v3766, %v3812
        %v3847 = vadd.f32 %v3767, %v3814
        %v3848 = vadd.f32 %v3768, %v3816
        %3849 = vrot.lane.b32.xlu0 %v3737, 64
        %v3850 = vpop.permute.xlu0 %3849
        %3851 = vrot.lane.b32.xlu0 %v3738, 64
        %v3852 = vpop.permute.xlu0 %3851
        %3853 = vrot.lane.b32.xlu0 %v3739, 64
        %v3854 = vpop.permute.xlu0 %3853
        %3855 = vrot.lane.b32.xlu0 %v3740, 64
        %v3856 = vpop.permute.xlu0 %3855
        %3857 = vrot.lane.b32.xlu0 %v3741, 64
        %v3858 = vpop.permute.xlu0 %3857
        %3859 = vrot.lane.b32.xlu0 %v3742, 64
        %v3860 = vpop.permute.xlu0 %3859
        %3861 = vrot.lane.b32.xlu0 %v3743, 64
        %v3862 = vpop.permute.xlu0 %3861
        %3863 = vrot.lane.b32.xlu0 %v3744, 64
        %v3864 = vpop.permute.xlu0 %3863
        %3865 = vrot.lane.b32.xlu0 %v3745, 64
        %v3866 = vpop.permute.xlu0 %3865
        %3867 = vrot.lane.b32.xlu0 %v3746, 64
        %v3868 = vpop.permute.xlu0 %3867
        %3869 = vrot.lane.b32.xlu0 %v3747, 64
        %v3870 = vpop.permute.xlu0 %3869
        %3871 = vrot.lane.b32.xlu0 %v3748, 64
        %v3872 = vpop.permute.xlu0 %3871
        %3873 = vrot.lane.b32.xlu0 %v3749, 64
        %v3874 = vpop.permute.xlu0 %3873
        %3875 = vrot.lane.b32.xlu0 %v3750, 64
        %v3876 = vpop.permute.xlu0 %3875
        %3877 = vrot.lane.b32.xlu0 %v3751, 64
        %v3878 = vpop.permute.xlu0 %3877
        %3879 = vrot.lane.b32.xlu0 %v3752, 64
        %v3880 = vpop.permute.xlu0 %3879
        %v3897 = vadd.f32 %v3833, %v3850
        %v3898 = vadd.f32 %v3834, %v3852
        %v3899 = vadd.f32 %v3835, %v3854
        %v3900 = vadd.f32 %v3836, %v3856
        %v3901 = vadd.f32 %v3837, %v3858
        %v3902 = vadd.f32 %v3838, %v3860
        %v3903 = vadd.f32 %v3839, %v3862
        %v3904 = vadd.f32 %v3840, %v3864
        %v3905 = vadd.f32 %v3841, %v3866
        %v3906 = vadd.f32 %v3842, %v3868
        %v3907 = vadd.f32 %v3843, %v3870
        %v3908 = vadd.f32 %v3844, %v3872
        %v3909 = vadd.f32 %v3845, %v3874
        %v3910 = vadd.f32 %v3846, %v3876
        %v3911 = vadd.f32 %v3847, %v3878
        %v3912 = vadd.f32 %v3848, %v3880
        %3913 = vrot.lane.b32.xlu0 %v3737, 32
        %v3914 = vpop.permute.xlu0 %3913
        %3915 = vrot.lane.b32.xlu0 %v3738, 32
        %v3916 = vpop.permute.xlu0 %3915
        %3917 = vrot.lane.b32.xlu0 %v3739, 32
        %v3918 = vpop.permute.xlu0 %3917
        %3919 = vrot.lane.b32.xlu0 %v3740, 32
        %v3920 = vpop.permute.xlu0 %3919
        %3921 = vrot.lane.b32.xlu0 %v3741, 32
        %v3922 = vpop.permute.xlu0 %3921
        %3923 = vrot.lane.b32.xlu0 %v3742, 32
        %v3924 = vpop.permute.xlu0 %3923
        %3925 = vrot.lane.b32.xlu0 %v3743, 32
        %v3926 = vpop.permute.xlu0 %3925
        %3927 = vrot.lane.b32.xlu0 %v3744, 32
        %v3928 = vpop.permute.xlu0 %3927
        %3929 = vrot.lane.b32.xlu0 %v3745, 32
        %v3930 = vpop.permute.xlu0 %3929
        %3931 = vrot.lane.b32.xlu0 %v3746, 32
        %v3932 = vpop.permute.xlu0 %3931
        %3933 = vrot.lane.b32.xlu0 %v3747, 32
        %v3934 = vpop.permute.xlu0 %3933
        %3935 = vrot.lane.b32.xlu0 %v3748, 32
        %v3936 = vpop.permute.xlu0 %3935
        %3937 = vrot.lane.b32.xlu0 %v3749, 32
        %v3938 = vpop.permute.xlu0 %3937
        %3939 = vrot.lane.b32.xlu0 %v3750, 32
        %v3940 = vpop.permute.xlu0 %3939
        %3941 = vrot.lane.b32.xlu0 %v3751, 32
        %v3942 = vpop.permute.xlu0 %3941
        %3943 = vrot.lane.b32.xlu0 %v3752, 32
        %v3944 = vpop.permute.xlu0 %3943
        %v3961 = vadd.f32 %v3897, %v3914
        %v3962 = vadd.f32 %v3898, %v3916
        %v3963 = vadd.f32 %v3899, %v3918
        %v3964 = vadd.f32 %v3900, %v3920
        %v3965 = vadd.f32 %v3901, %v3922
        %v3966 = vadd.f32 %v3902, %v3924
        %v3967 = vadd.f32 %v3903, %v3926
        %v3968 = vadd.f32 %v3904, %v3928
        %v3969 = vadd.f32 %v3905, %v3930
        %v3970 = vadd.f32 %v3906, %v3932
        %v3971 = vadd.f32 %v3907, %v3934
        %v3972 = vadd.f32 %v3908, %v3936
        %v3973 = vadd.f32 %v3909, %v3938
        %v3974 = vadd.f32 %v3910, %v3940
        %v3975 = vadd.f32 %v3911, %v3942
        %v3976 = vadd.f32 %v3912, %v3944
        %v3977 = vmax.f32 %v3961, 0.0
        %v3978 = vmax.f32 %v3962, 0.0
        %v3979 = vmax.f32 %v3963, 0.0
        %v3980 = vmax.f32 %v3964, 0.0
        %v3981 = vmax.f32 %v3965, 0.0
        %v3982 = vmax.f32 %v3966, 0.0
        %v3983 = vmax.f32 %v3967, 0.0
        %v3984 = vmax.f32 %v3968, 0.0
        %v3985 = vmax.f32 %v3969, 0.0
        %v3986 = vmax.f32 %v3970, 0.0
        %v3987 = vmax.f32 %v3971, 0.0
        %v3988 = vmax.f32 %v3972, 0.0
        %v3989 = vmax.f32 %v3973, 0.0
        %v3990 = vmax.f32 %v3974, 0.0
        %v3991 = vmax.f32 %v3975, 0.0
        %v3992 = vmax.f32 %v3976, 0.0
        %v3993 = vld [vmem:[#allocation5 + $0x468] sm:$0xf]
        %v3994 = vld [vmem:[#allocation5 + $0x46c] sm:$0xf]
        %v3995 = vld [vmem:[#allocation5 + $0x470] sm:$0xf]
        %v3996 = vld [vmem:[#allocation5 + $0x474] sm:$0xf]
        %v3997 = vpack.c.bf16 %v3978, %v3977
        %v3998 = vpack.c.bf16 %v3980, %v3979
        %v3999 = vpack.c.bf16 %v3982, %v3981
        %v4000 = vpack.c.bf16 %v3984, %v3983
        %v4001 = vpack.c.bf16 %v3986, %v3985
        %v4002 = vpack.c.bf16 %v3988, %v3987
        %v4003 = vpack.c.bf16 %v3990, %v3989
        %v4004 = vpack.c.bf16 %v3992, %v3991
        %v4009 = vunpack.c.l.b16 %v3993
        %v4010 = vunpack.c.l.b16 %v3994
        %v4011 = vunpack.c.l.b16 %v3995
        %v4012 = vunpack.c.l.b16 %v3996
        %v4013 = vpack.c.b16 %v4010, %v4009
        %v4014 = vpack.c.b16 %v4012, %v4011
        %v4018 = vsel %vm2862, %v3997, 0
        %v4021 = vsel %vm2862, %v3998, 0
        %v4024 = vsel %vm2862, %v3999, 0
        %v4027 = vsel %vm2862, %v4000, 0
        %v4030 = vsel %vm2862, %v4001, 0
        %v4033 = vsel %vm2862, %v4002, 0
        %v4036 = vsel %vm2862, %v4003, 0
        %v4039 = vsel %vm2862, %v4004, 0
        %4041 = vmatprep.subr.bf16.mxu0 0
        %4042 = vmatpush1.bf16.msra.mxu0 0
        %4043 = vmatprep.subr.bf16.mxu0 0
        %4044 = vmatpush1.bf16.msra.mxu0 0
        %4045 = vmatprep.subr.bf16.mxu0 0
        %4046 = vmatpush1.bf16.msra.mxu0 0
        %4047 = vmatprep.subr.bf16.mxu0 0
        %4048 = vmatpush1.bf16.msra.mxu0 0
        %4049 = vmatprep.subr.bf16.mxu0 0
        %4050 = vmatpush1.bf16.msra.mxu0 0
        %4051 = vmatprep.subr.bf16.mxu0 0
        %4052 = vmatpush1.bf16.msra.mxu0 0
        %4053 = vmatprep.subr.bf16.mxu0 0
        %4054 = vmatpush1.bf16.msra.mxu0 %v4014
        %4055 = vmatprep.subr.bf16.mxu0 0
        %4056 = vmatpush1.bf16.msra.mxu0 %v4013
        %4057 = vmatprep.subr.bf16.mxu0 0
        %4058 = vmatpush2.bf16.msra.mxu0 0
        %4059 = vmatprep.subr.bf16.mxu0 0
        %4060 = vmatpush2.bf16.msra.mxu0 0
        %4061 = vmatprep.subr.bf16.mxu0 0
        %4062 = vmatpush2.bf16.msra.mxu0 0
        %4063 = vmatprep.subr.bf16.mxu0 0
        %4064 = vmatpush2.bf16.msra.mxu0 0
        %4065 = vmatprep.subr.bf16.mxu0 0
        %4066 = vmatpush2.bf16.msra.mxu0 0
        %4067 = vmatprep.subr.bf16.mxu0 0
        %4068 = vmatpush2.bf16.msra.mxu0 0
        %4069 = vmatprep.subr.bf16.mxu0 0
        %4070 = vmatpush2.bf16.msra.mxu0 0
        %4071 = vmatprep.subr.bf16.mxu0 0
        %4072 = vmatpush2.bf16.msra.mxu0 0
        %4073 = vmatprep.mubr.bf16.mxu0 0
        %4074 = vmatmul.mubr.bf16.gmra.mxu0 %v4018
        %v4075 = vpop.f32.mrf.mxu0
        %v4076 = vadd.f32 0.0, %v4075
        %v4077 = vpop.f32.mrf.mxu0
        %v4078 = vpop.f32.mrf.mxu0
        %v4079 = vadd.f32 0.0, %v4078
        %v4080 = vpop.f32.mrf.mxu0
        %4081 = vmatprep.mubr.bf16.mxu0 0
        %4082 = vmatmul.mubr.bf16.gmra.mxu0 %v4021
        %v4083 = vpop.f32.mrf.mxu0
        %v4084 = vadd.f32 0.0, %v4083
        %v4085 = vpop.f32.mrf.mxu0
        %v4086 = vpop.f32.mrf.mxu0
        %v4087 = vadd.f32 0.0, %v4086
        %v4088 = vpop.f32.mrf.mxu0
        %4089 = vmatprep.mubr.bf16.mxu0 0
        %4090 = vmatmul.mubr.bf16.gmra.mxu0 %v4024
        %v4091 = vpop.f32.mrf.mxu0
        %v4092 = vadd.f32 0.0, %v4091
        %v4093 = vpop.f32.mrf.mxu0
        %v4094 = vpop.f32.mrf.mxu0
        %v4095 = vadd.f32 0.0, %v4094
        %v4096 = vpop.f32.mrf.mxu0
        %4097 = vmatprep.mubr.bf16.mxu0 0
        %4098 = vmatmul.mubr.bf16.gmra.mxu0 %v4027
        %v4099 = vpop.f32.mrf.mxu0
        %v4100 = vadd.f32 0.0, %v4099
        %v4101 = vpop.f32.mrf.mxu0
        %v4102 = vpop.f32.mrf.mxu0
        %v4103 = vadd.f32 0.0, %v4102
        %v4104 = vpop.f32.mrf.mxu0
        %4105 = vmatprep.mubr.bf16.mxu0 0
        %4106 = vmatmul.mubr.bf16.gmra.mxu0 %v4030
        %v4107 = vpop.f32.mrf.mxu0
        %v4108 = vadd.f32 0.0, %v4107
        %v4109 = vpop.f32.mrf.mxu0
        %v4110 = vpop.f32.mrf.mxu0
        %v4111 = vadd.f32 0.0, %v4110
        %v4112 = vpop.f32.mrf.mxu0
        %4113 = vmatprep.mubr.bf16.mxu0 0
        %4114 = vmatmul.mubr.bf16.gmra.mxu0 %v4033
        %v4115 = vpop.f32.mrf.mxu0
        %v4116 = vadd.f32 0.0, %v4115
        %v4117 = vpop.f32.mrf.mxu0
        %v4118 = vpop.f32.mrf.mxu0
        %v4119 = vadd.f32 0.0, %v4118
        %v4120 = vpop.f32.mrf.mxu0
        %4121 = vmatprep.mubr.bf16.mxu0 0
        %4122 = vmatmul.mubr.bf16.gmra.mxu0 %v4036
        %v4123 = vpop.f32.mrf.mxu0
        %v4124 = vadd.f32 0.0, %v4123
        %v4125 = vpop.f32.mrf.mxu0
        %v4126 = vpop.f32.mrf.mxu0
        %v4127 = vadd.f32 0.0, %v4126
        %v4128 = vpop.f32.mrf.mxu0
        %4129 = vmatprep.mubr.bf16.mxu0 0
        %4130 = vmatmul.mubr.bf16.gmra.mxu0 %v4039
        %v4131 = vpop.f32.mrf.mxu0
        %v4132 = vadd.f32 0.0, %v4131
        %v4133 = vpop.f32.mrf.mxu0
        %v4134 = vpop.f32.mrf.mxu0
        %v4135 = vadd.f32 0.0, %v4134
        %v4136 = vpop.f32.mrf.mxu0
        %4137 = vdwg.mxu0
        %v4138 = vadd.f32 %v3560, %v4076
        %v4139 = vadd.f32 %v3561, %v4079
        %v4140 = vadd.f32 %v3562, %v4084
        %v4141 = vadd.f32 %v3563, %v4087
        %v4142 = vadd.f32 %v3564, %v4092
        %v4143 = vadd.f32 %v3565, %v4095
        %v4144 = vadd.f32 %v3566, %v4100
        %v4145 = vadd.f32 %v3567, %v4103
        %v4146 = vadd.f32 %v3568, %v4108
        %v4147 = vadd.f32 %v3569, %v4111
        %v4148 = vadd.f32 %v3570, %v4116
        %v4149 = vadd.f32 %v3571, %v4119
        %v4150 = vadd.f32 %v3572, %v4124
        %v4151 = vadd.f32 %v3573, %v4127
        %v4152 = vadd.f32 %v3574, %v4132
        %v4153 = vadd.f32 %v3575, %v4135
        %v4154 = vld [vmem:[#allocation5 + $0x378] sm:$0xf]
        %v4155 = vld [vmem:[#allocation5 + $0x37c] sm:$0xf]
        %v4156 = vld [vmem:[#allocation5 + $0x380] sm:$0xf]
        %v4157 = vld [vmem:[#allocation5 + $0x384] sm:$0xf]
        %v4158 = vld [vmem:[#allocation5 + $0x388] sm:$0xf]
        %v4159 = vld [vmem:[#allocation5 + $0x38c] sm:$0xf]
        %v4160 = vld [vmem:[#allocation5 + $0x390] sm:$0xf]
        %v4161 = vld [vmem:[#allocation5 + $0x394] sm:$0xf]
        %v4162 = vld [vmem:[#allocation5 + $0x398] sm:$0xf]
        %v4163 = vld [vmem:[#allocation5 + $0x39c] sm:$0xf]
        %v4164 = vld [vmem:[#allocation5 + $0x3a0] sm:$0xf]
        %v4165 = vld [vmem:[#allocation5 + $0x3a4] sm:$0xf]
        %v4166 = vld [vmem:[#allocation5 + $0x3a8] sm:$0xf]
        %v4167 = vld [vmem:[#allocation5 + $0x3ac] sm:$0xf]
        %v4168 = vld [vmem:[#allocation5 + $0x3b0] sm:$0xf]
        %v4169 = vld [vmem:[#allocation5 + $0x3b4] sm:$0xf]
        %v4186 = vunpack.c.l.b16 %v4154
        %v4187 = vunpack.c.l.b16 %v4155
        %v4188 = vunpack.c.l.b16 %v4156
        %v4189 = vunpack.c.l.b16 %v4157
        %v4190 = vunpack.c.l.b16 %v4158
        %v4191 = vunpack.c.l.b16 %v4159
        %v4192 = vunpack.c.l.b16 %v4160
        %v4193 = vunpack.c.l.b16 %v4161
        %v4194 = vunpack.c.l.b16 %v4162
        %v4195 = vunpack.c.l.b16 %v4163
        %v4196 = vunpack.c.l.b16 %v4164
        %v4197 = vunpack.c.l.b16 %v4165
        %v4198 = vunpack.c.l.b16 %v4166
        %v4199 = vunpack.c.l.b16 %v4167
        %v4200 = vunpack.c.l.b16 %v4168
        %v4201 = vunpack.c.l.b16 %v4169
        %v4202 = vpack.c.b16 %v4187, %v4186
        %v4203 = vpack.c.b16 %v4189, %v4188
        %v4204 = vpack.c.b16 %v4191, %v4190
        %v4205 = vpack.c.b16 %v4193, %v4192
        %v4206 = vpack.c.b16 %v4195, %v4194
        %v4207 = vpack.c.b16 %v4197, %v4196
        %v4208 = vpack.c.b16 %v4199, %v4198
        %v4209 = vpack.c.b16 %v4201, %v4200
        %4218 = vmatprep.subr.bf16.mxu0 0
        %4219 = vmatpush1.bf16.msra.mxu0 %v4209
        %4220 = vmatprep.subr.bf16.mxu0 0
        %4221 = vmatpush1.bf16.msra.mxu0 %v4208
        %4222 = vmatprep.subr.bf16.mxu0 0
        %4223 = vmatpush1.bf16.msra.mxu0 %v4207
        %4224 = vmatprep.subr.bf16.mxu0 0
        %4225 = vmatpush1.bf16.msra.mxu0 %v4206
        %4226 = vmatprep.subr.bf16.mxu0 0
        %4227 = vmatpush1.bf16.msra.mxu0 %v4205
        %4228 = vmatprep.subr.bf16.mxu0 0
        %4229 = vmatpush1.bf16.msra.mxu0 %v4204
        %4230 = vmatprep.subr.bf16.mxu0 0
        %4231 = vmatpush1.bf16.msra.mxu0 %v4203
        %4232 = vmatprep.subr.bf16.mxu0 0
        %4233 = vmatpush1.bf16.msra.mxu0 %v4202
        %4234 = vmatprep.subr.bf16.mxu0 0
        %4235 = vmatpush2.bf16.msra.mxu0 0
        %4236 = vmatprep.subr.bf16.mxu0 0
        %4237 = vmatpush2.bf16.msra.mxu0 0
        %4238 = vmatprep.subr.bf16.mxu0 0
        %4239 = vmatpush2.bf16.msra.mxu0 0
        %4240 = vmatprep.subr.bf16.mxu0 0
        %4241 = vmatpush2.bf16.msra.mxu0 0
        %4242 = vmatprep.subr.bf16.mxu0 0
        %4243 = vmatpush2.bf16.msra.mxu0 0
        %4244 = vmatprep.subr.bf16.mxu0 0
        %4245 = vmatpush2.bf16.msra.mxu0 0
        %4246 = vmatprep.subr.bf16.mxu0 0
        %4247 = vmatpush2.bf16.msra.mxu0 0
        %4248 = vmatprep.subr.bf16.mxu0 0
        %4249 = vmatpush2.bf16.msra.mxu0 0
        %4250 = vmatprep.mubr.bf16.mxu0 0
        %4251 = vmatmul.mubr.bf16.gmra.mxu0 %v3002
        %v4252 = vpop.f32.mrf.mxu0
        %v4253 = vadd.f32 0.0, %v4252
        %v4254 = vpop.f32.mrf.mxu0
        %v4255 = vpop.f32.mrf.mxu0
        %v4256 = vadd.f32 0.0, %v4255
        %v4257 = vpop.f32.mrf.mxu0
        %4258 = vmatprep.mubr.bf16.mxu0 0
        %4259 = vmatmul.mubr.bf16.gmra.mxu0 %v3003
        %v4260 = vpop.f32.mrf.mxu0
        %v4261 = vadd.f32 0.0, %v4260
        %v4262 = vpop.f32.mrf.mxu0
        %v4263 = vpop.f32.mrf.mxu0
        %v4264 = vadd.f32 0.0, %v4263
        %v4265 = vpop.f32.mrf.mxu0
        %4266 = vmatprep.mubr.bf16.mxu0 0
        %4267 = vmatmul.mubr.bf16.gmra.mxu0 %v3004
        %v4268 = vpop.f32.mrf.mxu0
        %v4269 = vadd.f32 0.0, %v4268
        %v4270 = vpop.f32.mrf.mxu0
        %v4271 = vpop.f32.mrf.mxu0
        %v4272 = vadd.f32 0.0, %v4271
        %v4273 = vpop.f32.mrf.mxu0
        %4274 = vmatprep.mubr.bf16.mxu0 0
        %4275 = vmatmul.mubr.bf16.gmra.mxu0 %v3005
        %v4276 = vpop.f32.mrf.mxu0
        %v4277 = vadd.f32 0.0, %v4276
        %v4278 = vpop.f32.mrf.mxu0
        %v4279 = vpop.f32.mrf.mxu0
        %v4280 = vadd.f32 0.0, %v4279
        %v4281 = vpop.f32.mrf.mxu0
        %4282 = vmatprep.mubr.bf16.mxu0 0
        %4283 = vmatmul.mubr.bf16.gmra.mxu0 %v3006
        %v4284 = vpop.f32.mrf.mxu0
        %v4285 = vadd.f32 0.0, %v4284
        %v4286 = vpop.f32.mrf.mxu0
        %v4287 = vpop.f32.mrf.mxu0
        %v4288 = vadd.f32 0.0, %v4287
        %v4289 = vpop.f32.mrf.mxu0
        %4290 = vmatprep.mubr.bf16.mxu0 0
        %4291 = vmatmul.mubr.bf16.gmra.mxu0 %v3007
        %v4292 = vpop.f32.mrf.mxu0
        %v4293 = vadd.f32 0.0, %v4292
        %v4294 = vpop.f32.mrf.mxu0
        %v4295 = vpop.f32.mrf.mxu0
        %v4296 = vadd.f32 0.0, %v4295
        %v4297 = vpop.f32.mrf.mxu0
        %4298 = vmatprep.mubr.bf16.mxu0 0
        %4299 = vmatmul.mubr.bf16.gmra.mxu0 %v3008
        %v4300 = vpop.f32.mrf.mxu0
        %v4301 = vadd.f32 0.0, %v4300
        %v4302 = vpop.f32.mrf.mxu0
        %v4303 = vpop.f32.mrf.mxu0
        %v4304 = vadd.f32 0.0, %v4303
        %v4305 = vpop.f32.mrf.mxu0
        %4306 = vmatprep.mubr.bf16.mxu0 0
        %4307 = vmatmul.mubr.bf16.gmra.mxu0 %v3009
        %v4308 = vpop.f32.mrf.mxu0
        %v4309 = vadd.f32 0.0, %v4308
        %v4310 = vpop.f32.mrf.mxu0
        %v4311 = vpop.f32.mrf.mxu0
        %v4312 = vadd.f32 0.0, %v4311
        %v4313 = vpop.f32.mrf.mxu0
        %4314 = vdwg.mxu0
        %v4315 = vmul.f32 %v4253, %v2922
        %v4316 = vmul.f32 %v4256, %v2925
        %v4317 = vmul.f32 %v4261, %v2930
        %v4318 = vmul.f32 %v4264, %v2933
        %v4319 = vmul.f32 %v4269, %v2938
        %v4320 = vmul.f32 %v4272, %v2941
        %v4321 = vmul.f32 %v4277, %v2946
        %v4322 = vmul.f32 %v4280, %v2949
        %v4323 = vmul.f32 %v4285, %v2954
        %v4324 = vmul.f32 %v4288, %v2957
        %v4325 = vmul.f32 %v4293, %v2962
        %v4326 = vmul.f32 %v4296, %v2965
        %v4327 = vmul.f32 %v4301, %v2970
        %v4328 = vmul.f32 %v4304, %v2973
        %v4329 = vmul.f32 %v4309, %v2978
        %v4330 = vmul.f32 %v4312, %v2981
        %v4331 = vadd.f32 %v4315, 0.0
        %v4332 = vadd.f32 %v4316, 0.0
        %v4333 = vadd.f32 %v4317, 0.0
        %v4334 = vadd.f32 %v4318, 0.0
        %v4335 = vadd.f32 %v4319, 0.0
        %v4336 = vadd.f32 %v4320, 0.0
        %v4337 = vadd.f32 %v4321, 0.0
        %v4338 = vadd.f32 %v4322, 0.0
        %v4339 = vadd.f32 %v4323, 0.0
        %v4340 = vadd.f32 %v4324, 0.0
        %v4341 = vadd.f32 %v4325, 0.0
        %v4342 = vadd.f32 %v4326, 0.0
        %v4343 = vadd.f32 %v4327, 0.0
        %v4344 = vadd.f32 %v4328, 0.0
        %v4345 = vadd.f32 %v4329, 0.0
        %v4346 = vadd.f32 %v4330, 0.0
        %4363 = vrot.lane.b32.xlu0 %v4315, 96
        %v4364 = vpop.permute.xlu0 %4363
        %4365 = vrot.lane.b32.xlu0 %v4316, 96
        %v4366 = vpop.permute.xlu0 %4365
        %4367 = vrot.lane.b32.xlu0 %v4317, 96
        %v4368 = vpop.permute.xlu0 %4367
        %4369 = vrot.lane.b32.xlu0 %v4318, 96
        %v4370 = vpop.permute.xlu0 %4369
        %4371 = vrot.lane.b32.xlu0 %v4319, 96
        %v4372 = vpop.permute.xlu0 %4371
        %4373 = vrot.lane.b32.xlu0 %v4320, 96
        %v4374 = vpop.permute.xlu0 %4373
        %4375 = vrot.lane.b32.xlu0 %v4321, 96
        %v4376 = vpop.permute.xlu0 %4375
        %4377 = vrot.lane.b32.xlu0 %v4322, 96
        %v4378 = vpop.permute.xlu0 %4377
        %4379 = vrot.lane.b32.xlu0 %v4323, 96
        %v4380 = vpop.permute.xlu0 %4379
        %4381 = vrot.lane.b32.xlu0 %v4324, 96
        %v4382 = vpop.permute.xlu0 %4381
        %4383 = vrot.lane.b32.xlu0 %v4325, 96
        %v4384 = vpop.permute.xlu0 %4383
        %4385 = vrot.lane.b32.xlu0 %v4326, 96
        %v4386 = vpop.permute.xlu0 %4385
        %4387 = vrot.lane.b32.xlu0 %v4327, 96
        %v4388 = vpop.permute.xlu0 %4387
        %4389 = vrot.lane.b32.xlu0 %v4328, 96
        %v4390 = vpop.permute.xlu0 %4389
        %4391 = vrot.lane.b32.xlu0 %v4329, 96
        %v4392 = vpop.permute.xlu0 %4391
        %4393 = vrot.lane.b32.xlu0 %v4330, 96
        %v4394 = vpop.permute.xlu0 %4393
        %v4411 = vadd.f32 %v4331, %v4364
        %v4412 = vadd.f32 %v4332, %v4366
        %v4413 = vadd.f32 %v4333, %v4368
        %v4414 = vadd.f32 %v4334, %v4370
        %v4415 = vadd.f32 %v4335, %v4372
        %v4416 = vadd.f32 %v4336, %v4374
        %v4417 = vadd.f32 %v4337, %v4376
        %v4418 = vadd.f32 %v4338, %v4378
        %v4419 = vadd.f32 %v4339, %v4380
        %v4420 = vadd.f32 %v4340, %v4382
        %v4421 = vadd.f32 %v4341, %v4384
        %v4422 = vadd.f32 %v4342, %v4386
        %v4423 = vadd.f32 %v4343, %v4388
        %v4424 = vadd.f32 %v4344, %v4390
        %v4425 = vadd.f32 %v4345, %v4392
        %v4426 = vadd.f32 %v4346, %v4394
        %4427 = vrot.lane.b32.xlu0 %v4315, 64
        %v4428 = vpop.permute.xlu0 %4427
        %4429 = vrot.lane.b32.xlu0 %v4316, 64
        %v4430 = vpop.permute.xlu0 %4429
        %4431 = vrot.lane.b32.xlu0 %v4317, 64
        %v4432 = vpop.permute.xlu0 %4431
        %4433 = vrot.lane.b32.xlu0 %v4318, 64
        %v4434 = vpop.permute.xlu0 %4433
        %4435 = vrot.lane.b32.xlu0 %v4319, 64
        %v4436 = vpop.permute.xlu0 %4435
        %4437 = vrot.lane.b32.xlu0 %v4320, 64
        %v4438 = vpop.permute.xlu0 %4437
        %4439 = vrot.lane.b32.xlu0 %v4321, 64
        %v4440 = vpop.permute.xlu0 %4439
        %4441 = vrot.lane.b32.xlu0 %v4322, 64
        %v4442 = vpop.permute.xlu0 %4441
        %4443 = vrot.lane.b32.xlu0 %v4323, 64
        %v4444 = vpop.permute.xlu0 %4443
        %4445 = vrot.lane.b32.xlu0 %v4324, 64
        %v4446 = vpop.permute.xlu0 %4445
        %4447 = vrot.lane.b32.xlu0 %v4325, 64
        %v4448 = vpop.permute.xlu0 %4447
        %4449 = vrot.lane.b32.xlu0 %v4326, 64
        %v4450 = vpop.permute.xlu0 %4449
        %4451 = vrot.lane.b32.xlu0 %v4327, 64
        %v4452 = vpop.permute.xlu0 %4451
        %4453 = vrot.lane.b32.xlu0 %v4328, 64
        %v4454 = vpop.permute.xlu0 %4453
        %4455 = vrot.lane.b32.xlu0 %v4329, 64
        %v4456 = vpop.permute.xlu0 %4455
        %4457 = vrot.lane.b32.xlu0 %v4330, 64
        %v4458 = vpop.permute.xlu0 %4457
        %v4475 = vadd.f32 %v4411, %v4428
        %v4476 = vadd.f32 %v4412, %v4430
        %v4477 = vadd.f32 %v4413, %v4432
        %v4478 = vadd.f32 %v4414, %v4434
        %v4479 = vadd.f32 %v4415, %v4436
        %v4480 = vadd.f32 %v4416, %v4438
        %v4481 = vadd.f32 %v4417, %v4440
        %v4482 = vadd.f32 %v4418, %v4442
        %v4483 = vadd.f32 %v4419, %v4444
        %v4484 = vadd.f32 %v4420, %v4446
        %v4485 = vadd.f32 %v4421, %v4448
        %v4486 = vadd.f32 %v4422, %v4450
        %v4487 = vadd.f32 %v4423, %v4452
        %v4488 = vadd.f32 %v4424, %v4454
        %v4489 = vadd.f32 %v4425, %v4456
        %v4490 = vadd.f32 %v4426, %v4458
        %4491 = vrot.lane.b32.xlu0 %v4315, 32
        %v4492 = vpop.permute.xlu0 %4491
        %4493 = vrot.lane.b32.xlu0 %v4316, 32
        %v4494 = vpop.permute.xlu0 %4493
        %4495 = vrot.lane.b32.xlu0 %v4317, 32
        %v4496 = vpop.permute.xlu0 %4495
        %4497 = vrot.lane.b32.xlu0 %v4318, 32
        %v4498 = vpop.permute.xlu0 %4497
        %4499 = vrot.lane.b32.xlu0 %v4319, 32
        %v4500 = vpop.permute.xlu0 %4499
        %4501 = vrot.lane.b32.xlu0 %v4320, 32
        %v4502 = vpop.permute.xlu0 %4501
        %4503 = vrot.lane.b32.xlu0 %v4321, 32
        %v4504 = vpop.permute.xlu0 %4503
        %4505 = vrot.lane.b32.xlu0 %v4322, 32
        %v4506 = vpop.permute.xlu0 %4505
        %4507 = vrot.lane.b32.xlu0 %v4323, 32
        %v4508 = vpop.permute.xlu0 %4507
        %4509 = vrot.lane.b32.xlu0 %v4324, 32
        %v4510 = vpop.permute.xlu0 %4509
        %4511 = vrot.lane.b32.xlu0 %v4325, 32
        %v4512 = vpop.permute.xlu0 %4511
        %4513 = vrot.lane.b32.xlu0 %v4326, 32
        %v4514 = vpop.permute.xlu0 %4513
        %4515 = vrot.lane.b32.xlu0 %v4327, 32
        %v4516 = vpop.permute.xlu0 %4515
        %4517 = vrot.lane.b32.xlu0 %v4328, 32
        %v4518 = vpop.permute.xlu0 %4517
        %4519 = vrot.lane.b32.xlu0 %v4329, 32
        %v4520 = vpop.permute.xlu0 %4519
        %4521 = vrot.lane.b32.xlu0 %v4330, 32
        %v4522 = vpop.permute.xlu0 %4521
        %v4539 = vadd.f32 %v4475, %v4492
        %v4540 = vadd.f32 %v4476, %v4494
        %v4541 = vadd.f32 %v4477, %v4496
        %v4542 = vadd.f32 %v4478, %v4498
        %v4543 = vadd.f32 %v4479, %v4500
        %v4544 = vadd.f32 %v4480, %v4502
        %v4545 = vadd.f32 %v4481, %v4504
        %v4546 = vadd.f32 %v4482, %v4506
        %v4547 = vadd.f32 %v4483, %v4508
        %v4548 = vadd.f32 %v4484, %v4510
        %v4549 = vadd.f32 %v4485, %v4512
        %v4550 = vadd.f32 %v4486, %v4514
        %v4551 = vadd.f32 %v4487, %v4516
        %v4552 = vadd.f32 %v4488, %v4518
        %v4553 = vadd.f32 %v4489, %v4520
        %v4554 = vadd.f32 %v4490, %v4522
        %v4555 = vmax.f32 %v4539, 0.0
        %v4556 = vmax.f32 %v4540, 0.0
        %v4557 = vmax.f32 %v4541, 0.0
        %v4558 = vmax.f32 %v4542, 0.0
        %v4559 = vmax.f32 %v4543, 0.0
        %v4560 = vmax.f32 %v4544, 0.0
        %v4561 = vmax.f32 %v4545, 0.0
        %v4562 = vmax.f32 %v4546, 0.0
        %v4563 = vmax.f32 %v4547, 0.0
        %v4564 = vmax.f32 %v4548, 0.0
        %v4565 = vmax.f32 %v4549, 0.0
        %v4566 = vmax.f32 %v4550, 0.0
        %v4567 = vmax.f32 %v4551, 0.0
        %v4568 = vmax.f32 %v4552, 0.0
        %v4569 = vmax.f32 %v4553, 0.0
        %v4570 = vmax.f32 %v4554, 0.0
        %v4571 = vld [vmem:[#allocation5 + $0x478] sm:$0xf]
        %v4572 = vld [vmem:[#allocation5 + $0x47c] sm:$0xf]
        %v4573 = vld [vmem:[#allocation5 + $0x480] sm:$0xf]
        %v4574 = vld [vmem:[#allocation5 + $0x484] sm:$0xf]
        %v4575 = vpack.c.bf16 %v4556, %v4555
        %v4576 = vpack.c.bf16 %v4558, %v4557
        %v4577 = vpack.c.bf16 %v4560, %v4559
        %v4578 = vpack.c.bf16 %v4562, %v4561
        %v4579 = vpack.c.bf16 %v4564, %v4563
        %v4580 = vpack.c.bf16 %v4566, %v4565
        %v4581 = vpack.c.bf16 %v4568, %v4567
        %v4582 = vpack.c.bf16 %v4570, %v4569
        %v4587 = vunpack.c.l.b16 %v4571
        %v4588 = vunpack.c.l.b16 %v4572
        %v4589 = vunpack.c.l.b16 %v4573
        %v4590 = vunpack.c.l.b16 %v4574
        %v4591 = vpack.c.b16 %v4588, %v4587
        %v4592 = vpack.c.b16 %v4590, %v4589
        %v4596 = vsel %vm2862, %v4575, 0
        %v4599 = vsel %vm2862, %v4576, 0
        %v4602 = vsel %vm2862, %v4577, 0
        %v4605 = vsel %vm2862, %v4578, 0
        %v4608 = vsel %vm2862, %v4579, 0
        %v4611 = vsel %vm2862, %v4580, 0
        %v4614 = vsel %vm2862, %v4581, 0
        %v4617 = vsel %vm2862, %v4582, 0
        %4619 = vmatprep.subr.bf16.mxu0 0
        %4620 = vmatpush1.bf16.msra.mxu0 0
        %4621 = vmatprep.subr.bf16.mxu0 0
        %4622 = vmatpush1.bf16.msra.mxu0 0
        %4623 = vmatprep.subr.bf16.mxu0 0
        %4624 = vmatpush1.bf16.msra.mxu0 0
        %4625 = vmatprep.subr.bf16.mxu0 0
        %4626 = vmatpush1.bf16.msra.mxu0 0
        %4627 = vmatprep.subr.bf16.mxu0 0
        %4628 = vmatpush1.bf16.msra.mxu0 0
        %4629 = vmatprep.subr.bf16.mxu0 0
        %4630 = vmatpush1.bf16.msra.mxu0 0
        %4631 = vmatprep.subr.bf16.mxu0 0
        %4632 = vmatpush1.bf16.msra.mxu0 %v4592
        %4633 = vmatprep.subr.bf16.mxu0 0
        %4634 = vmatpush1.bf16.msra.mxu0 %v4591
        %4635 = vmatprep.subr.bf16.mxu0 0
        %4636 = vmatpush2.bf16.msra.mxu0 0
        %4637 = vmatprep.subr.bf16.mxu0 0
        %4638 = vmatpush2.bf16.msra.mxu0 0
        %4639 = vmatprep.subr.bf16.mxu0 0
        %4640 = vmatpush2.bf16.msra.mxu0 0
        %4641 = vmatprep.subr.bf16.mxu0 0
        %4642 = vmatpush2.bf16.msra.mxu0 0
        %4643 = vmatprep.subr.bf16.mxu0 0
        %4644 = vmatpush2.bf16.msra.mxu0 0
        %4645 = vmatprep.subr.bf16.mxu0 0
        %4646 = vmatpush2.bf16.msra.mxu0 0
        %4647 = vmatprep.subr.bf16.mxu0 0
        %4648 = vmatpush2.bf16.msra.mxu0 0
        %4649 = vmatprep.subr.bf16.mxu0 0
        %4650 = vmatpush2.bf16.msra.mxu0 0
        %4651 = vmatprep.mubr.bf16.mxu0 0
        %4652 = vmatmul.mubr.bf16.gmra.mxu0 %v4596
        %v4653 = vpop.f32.mrf.mxu0
        %v4654 = vadd.f32 0.0, %v4653
        %v4655 = vpop.f32.mrf.mxu0
        %v4656 = vpop.f32.mrf.mxu0
        %v4657 = vadd.f32 0.0, %v4656
        %v4658 = vpop.f32.mrf.mxu0
        %4659 = vmatprep.mubr.bf16.mxu0 0
        %4660 = vmatmul.mubr.bf16.gmra.mxu0 %v4599
        %v4661 = vpop.f32.mrf.mxu0
        %v4662 = vadd.f32 0.0, %v4661
        %v4663 = vpop.f32.mrf.mxu0
        %v4664 = vpop.f32.mrf.mxu0
        %v4665 = vadd.f32 0.0, %v4664
        %v4666 = vpop.f32.mrf.mxu0
        %4667 = vmatprep.mubr.bf16.mxu0 0
        %4668 = vmatmul.mubr.bf16.gmra.mxu0 %v4602
        %v4669 = vpop.f32.mrf.mxu0
        %v4670 = vadd.f32 0.0, %v4669
        %v4671 = vpop.f32.mrf.mxu0
        %v4672 = vpop.f32.mrf.mxu0
        %v4673 = vadd.f32 0.0, %v4672
        %v4674 = vpop.f32.mrf.mxu0
        %4675 = vmatprep.mubr.bf16.mxu0 0
        %4676 = vmatmul.mubr.bf16.gmra.mxu0 %v4605
        %v4677 = vpop.f32.mrf.mxu0
        %v4678 = vadd.f32 0.0, %v4677
        %v4679 = vpop.f32.mrf.mxu0
        %v4680 = vpop.f32.mrf.mxu0
        %v4681 = vadd.f32 0.0, %v4680
        %v4682 = vpop.f32.mrf.mxu0
        %4683 = vmatprep.mubr.bf16.mxu0 0
        %4684 = vmatmul.mubr.bf16.gmra.mxu0 %v4608
        %v4685 = vpop.f32.mrf.mxu0
        %v4686 = vadd.f32 0.0, %v4685
        %v4687 = vpop.f32.mrf.mxu0
        %v4688 = vpop.f32.mrf.mxu0
        %v4689 = vadd.f32 0.0, %v4688
        %v4690 = vpop.f32.mrf.mxu0
        %4691 = vmatprep.mubr.bf16.mxu0 0
        %4692 = vmatmul.mubr.bf16.gmra.mxu0 %v4611
        %v4693 = vpop.f32.mrf.mxu0
        %v4694 = vadd.f32 0.0, %v4693
        %v4695 = vpop.f32.mrf.mxu0
        %v4696 = vpop.f32.mrf.mxu0
        %v4697 = vadd.f32 0.0, %v4696
        %v4698 = vpop.f32.mrf.mxu0
        %4699 = vmatprep.mubr.bf16.mxu0 0
        %4700 = vmatmul.mubr.bf16.gmra.mxu0 %v4614
        %v4701 = vpop.f32.mrf.mxu0
        %v4702 = vadd.f32 0.0, %v4701
        %v4703 = vpop.f32.mrf.mxu0
        %v4704 = vpop.f32.mrf.mxu0
        %v4705 = vadd.f32 0.0, %v4704
        %v4706 = vpop.f32.mrf.mxu0
        %4707 = vmatprep.mubr.bf16.mxu0 0
        %4708 = vmatmul.mubr.bf16.gmra.mxu0 %v4617
        %v4709 = vpop.f32.mrf.mxu0
        %v4710 = vadd.f32 0.0, %v4709
        %v4711 = vpop.f32.mrf.mxu0
        %v4712 = vpop.f32.mrf.mxu0
        %v4713 = vadd.f32 0.0, %v4712
        %v4714 = vpop.f32.mrf.mxu0
        %4715 = vdwg.mxu0
        %v4716 = vadd.f32 %v4138, %v4654
        %v4717 = vadd.f32 %v4139, %v4657
        %v4718 = vadd.f32 %v4140, %v4662
        %v4719 = vadd.f32 %v4141, %v4665
        %v4720 = vadd.f32 %v4142, %v4670
        %v4721 = vadd.f32 %v4143, %v4673
        %v4722 = vadd.f32 %v4144, %v4678
        %v4723 = vadd.f32 %v4145, %v4681
        %v4724 = vadd.f32 %v4146, %v4686
        %v4725 = vadd.f32 %v4147, %v4689
        %v4726 = vadd.f32 %v4148, %v4694
        %v4727 = vadd.f32 %v4149, %v4697
        %v4728 = vadd.f32 %v4150, %v4702
        %v4729 = vadd.f32 %v4151, %v4705
        %v4730 = vadd.f32 %v4152, %v4710
        %v4731 = vadd.f32 %v4153, %v4713
        %v4732 = vld [vmem:[#allocation5 + $0x3b8] sm:$0xf]
        %v4733 = vld [vmem:[#allocation5 + $0x3bc] sm:$0xf]
        %v4734 = vld [vmem:[#allocation5 + $0x3c0] sm:$0xf]
        %v4735 = vld [vmem:[#allocation5 + $0x3c4] sm:$0xf]
        %v4736 = vld [vmem:[#allocation5 + $0x3c8] sm:$0xf]
        %v4737 = vld [vmem:[#allocation5 + $0x3cc] sm:$0xf]
        %v4738 = vld [vmem:[#allocation5 + $0x3d0] sm:$0xf]
        %v4739 = vld [vmem:[#allocation5 + $0x3d4] sm:$0xf]
        %v4740 = vld [vmem:[#allocation5 + $0x3d8] sm:$0xf]
        %v4741 = vld [vmem:[#allocation5 + $0x3dc] sm:$0xf]
        %v4742 = vld [vmem:[#allocation5 + $0x3e0] sm:$0xf]
        %v4743 = vld [vmem:[#allocation5 + $0x3e4] sm:$0xf]
        %v4744 = vld [vmem:[#allocation5 + $0x3e8] sm:$0xf]
        %v4745 = vld [vmem:[#allocation5 + $0x3ec] sm:$0xf]
        %v4746 = vld [vmem:[#allocation5 + $0x3f0] sm:$0xf]
        %v4747 = vld [vmem:[#allocation5 + $0x3f4] sm:$0xf]
        %v4764 = vunpack.c.l.b16 %v4732
        %v4765 = vunpack.c.l.b16 %v4733
        %v4766 = vunpack.c.l.b16 %v4734
        %v4767 = vunpack.c.l.b16 %v4735
        %v4768 = vunpack.c.l.b16 %v4736
        %v4769 = vunpack.c.l.b16 %v4737
        %v4770 = vunpack.c.l.b16 %v4738
        %v4771 = vunpack.c.l.b16 %v4739
        %v4772 = vunpack.c.l.b16 %v4740
        %v4773 = vunpack.c.l.b16 %v4741
        %v4774 = vunpack.c.l.b16 %v4742
        %v4775 = vunpack.c.l.b16 %v4743
        %v4776 = vunpack.c.l.b16 %v4744
        %v4777 = vunpack.c.l.b16 %v4745
        %v4778 = vunpack.c.l.b16 %v4746
        %v4779 = vunpack.c.l.b16 %v4747
        %v4780 = vpack.c.b16 %v4765, %v4764
        %v4781 = vpack.c.b16 %v4767, %v4766
        %v4782 = vpack.c.b16 %v4769, %v4768
        %v4783 = vpack.c.b16 %v4771, %v4770
        %v4784 = vpack.c.b16 %v4773, %v4772
        %v4785 = vpack.c.b16 %v4775, %v4774
        %v4786 = vpack.c.b16 %v4777, %v4776
        %v4787 = vpack.c.b16 %v4779, %v4778
        %4796 = vmatprep.subr.bf16.mxu0 0
        %4797 = vmatpush1.bf16.msra.mxu0 %v4787
        %4798 = vmatprep.subr.bf16.mxu0 0
        %4799 = vmatpush1.bf16.msra.mxu0 %v4786
        %4800 = vmatprep.subr.bf16.mxu0 0
        %4801 = vmatpush1.bf16.msra.mxu0 %v4785
        %4802 = vmatprep.subr.bf16.mxu0 0
        %4803 = vmatpush1.bf16.msra.mxu0 %v4784
        %4804 = vmatprep.subr.bf16.mxu0 0
        %4805 = vmatpush1.bf16.msra.mxu0 %v4783
        %4806 = vmatprep.subr.bf16.mxu0 0
        %4807 = vmatpush1.bf16.msra.mxu0 %v4782
        %4808 = vmatprep.subr.bf16.mxu0 0
        %4809 = vmatpush1.bf16.msra.mxu0 %v4781
        %4810 = vmatprep.subr.bf16.mxu0 0
        %4811 = vmatpush1.bf16.msra.mxu0 %v4780
        %4812 = vmatprep.subr.bf16.mxu0 0
        %4813 = vmatpush2.bf16.msra.mxu0 0
        %4814 = vmatprep.subr.bf16.mxu0 0
        %4815 = vmatpush2.bf16.msra.mxu0 0
        %4816 = vmatprep.subr.bf16.mxu0 0
        %4817 = vmatpush2.bf16.msra.mxu0 0
        %4818 = vmatprep.subr.bf16.mxu0 0
        %4819 = vmatpush2.bf16.msra.mxu0 0
        %4820 = vmatprep.subr.bf16.mxu0 0
        %4821 = vmatpush2.bf16.msra.mxu0 0
        %4822 = vmatprep.subr.bf16.mxu0 0
        %4823 = vmatpush2.bf16.msra.mxu0 0
        %4824 = vmatprep.subr.bf16.mxu0 0
        %4825 = vmatpush2.bf16.msra.mxu0 0
        %4826 = vmatprep.subr.bf16.mxu0 0
        %4827 = vmatpush2.bf16.msra.mxu0 0
        %4828 = vmatprep.mubr.bf16.mxu0 0
        %4829 = vmatmul.mubr.bf16.gmra.mxu0 %v3002
        %v4830 = vpop.f32.mrf.mxu0
        %v4831 = vadd.f32 0.0, %v4830
        %v4832 = vpop.f32.mrf.mxu0
        %v4833 = vpop.f32.mrf.mxu0
        %v4834 = vadd.f32 0.0, %v4833
        %v4835 = vpop.f32.mrf.mxu0
        %4836 = vmatprep.mubr.bf16.mxu0 0
        %4837 = vmatmul.mubr.bf16.gmra.mxu0 %v3003
        %v4838 = vpop.f32.mrf.mxu0
        %v4839 = vadd.f32 0.0, %v4838
        %v4840 = vpop.f32.mrf.mxu0
        %v4841 = vpop.f32.mrf.mxu0
        %v4842 = vadd.f32 0.0, %v4841
        %v4843 = vpop.f32.mrf.mxu0
        %4844 = vmatprep.mubr.bf16.mxu0 0
        %4845 = vmatmul.mubr.bf16.gmra.mxu0 %v3004
        %v4846 = vpop.f32.mrf.mxu0
        %v4847 = vadd.f32 0.0, %v4846
        %v4848 = vpop.f32.mrf.mxu0
        %v4849 = vpop.f32.mrf.mxu0
        %v4850 = vadd.f32 0.0, %v4849
        %v4851 = vpop.f32.mrf.mxu0
        %4852 = vmatprep.mubr.bf16.mxu0 0
        %4853 = vmatmul.mubr.bf16.gmra.mxu0 %v3005
        %v4854 = vpop.f32.mrf.mxu0
        %v4855 = vadd.f32 0.0, %v4854
        %v4856 = vpop.f32.mrf.mxu0
        %v4857 = vpop.f32.mrf.mxu0
        %v4858 = vadd.f32 0.0, %v4857
        %v4859 = vpop.f32.mrf.mxu0
        %4860 = vmatprep.mubr.bf16.mxu0 0
        %4861 = vmatmul.mubr.bf16.gmra.mxu0 %v3006
        %v4862 = vpop.f32.mrf.mxu0
        %v4863 = vadd.f32 0.0, %v4862
        %v4864 = vpop.f32.mrf.mxu0
        %v4865 = vpop.f32.mrf.mxu0
        %v4866 = vadd.f32 0.0, %v4865
        %v4867 = vpop.f32.mrf.mxu0
        %4868 = vmatprep.mubr.bf16.mxu0 0
        %4869 = vmatmul.mubr.bf16.gmra.mxu0 %v3007
        %v4870 = vpop.f32.mrf.mxu0
        %v4871 = vadd.f32 0.0, %v4870
        %v4872 = vpop.f32.mrf.mxu0
        %v4873 = vpop.f32.mrf.mxu0
        %v4874 = vadd.f32 0.0, %v4873
        %v4875 = vpop.f32.mrf.mxu0
        %4876 = vmatprep.mubr.bf16.mxu0 0
        %4877 = vmatmul.mubr.bf16.gmra.mxu0 %v3008
        %v4878 = vpop.f32.mrf.mxu0
        %v4879 = vadd.f32 0.0, %v4878
        %v4880 = vpop.f32.mrf.mxu0
        %v4881 = vpop.f32.mrf.mxu0
        %v4882 = vadd.f32 0.0, %v4881
        %v4883 = vpop.f32.mrf.mxu0
        %4884 = vmatprep.mubr.bf16.mxu0 0
        %4885 = vmatmul.mubr.bf16.gmra.mxu0 %v3009
        %v4886 = vpop.f32.mrf.mxu0
        %v4887 = vadd.f32 0.0, %v4886
        %v4888 = vpop.f32.mrf.mxu0
        %v4889 = vpop.f32.mrf.mxu0
        %v4890 = vadd.f32 0.0, %v4889
        %v4891 = vpop.f32.mrf.mxu0
        %4892 = vdwg.mxu0
        %v4893 = vmul.f32 %v4831, %v2922
        %v4894 = vmul.f32 %v4834, %v2925
        %v4895 = vmul.f32 %v4839, %v2930
        %v4896 = vmul.f32 %v4842, %v2933
        %v4897 = vmul.f32 %v4847, %v2938
        %v4898 = vmul.f32 %v4850, %v2941
        %v4899 = vmul.f32 %v4855, %v2946
        %v4900 = vmul.f32 %v4858, %v2949
        %v4901 = vmul.f32 %v4863, %v2954
        %v4902 = vmul.f32 %v4866, %v2957
        %v4903 = vmul.f32 %v4871, %v2962
        %v4904 = vmul.f32 %v4874, %v2965
        %v4905 = vmul.f32 %v4879, %v2970
        %v4906 = vmul.f32 %v4882, %v2973
        %v4907 = vmul.f32 %v4887, %v2978
        %v4908 = vmul.f32 %v4890, %v2981
        %v4909 = vadd.f32 %v4893, 0.0
        %v4910 = vadd.f32 %v4894, 0.0
        %v4911 = vadd.f32 %v4895, 0.0
        %v4912 = vadd.f32 %v4896, 0.0
        %v4913 = vadd.f32 %v4897, 0.0
        %v4914 = vadd.f32 %v4898, 0.0
        %v4915 = vadd.f32 %v4899, 0.0
        %v4916 = vadd.f32 %v4900, 0.0
        %v4917 = vadd.f32 %v4901, 0.0
        %v4918 = vadd.f32 %v4902, 0.0
        %v4919 = vadd.f32 %v4903, 0.0
        %v4920 = vadd.f32 %v4904, 0.0
        %v4921 = vadd.f32 %v4905, 0.0
        %v4922 = vadd.f32 %v4906, 0.0
        %v4923 = vadd.f32 %v4907, 0.0
        %v4924 = vadd.f32 %v4908, 0.0
        %4941 = vrot.lane.b32.xlu0 %v4893, 96
        %v4942 = vpop.permute.xlu0 %4941
        %4943 = vrot.lane.b32.xlu0 %v4894, 96
        %v4944 = vpop.permute.xlu0 %4943
        %4945 = vrot.lane.b32.xlu0 %v4895, 96
        %v4946 = vpop.permute.xlu0 %4945
        %4947 = vrot.lane.b32.xlu0 %v4896, 96
        %v4948 = vpop.permute.xlu0 %4947
        %4949 = vrot.lane.b32.xlu0 %v4897, 96
        %v4950 = vpop.permute.xlu0 %4949
        %4951 = vrot.lane.b32.xlu0 %v4898, 96
        %v4952 = vpop.permute.xlu0 %4951
        %4953 = vrot.lane.b32.xlu0 %v4899, 96
        %v4954 = vpop.permute.xlu0 %4953
        %4955 = vrot.lane.b32.xlu0 %v4900, 96
        %v4956 = vpop.permute.xlu0 %4955
        %4957 = vrot.lane.b32.xlu0 %v4901, 96
        %v4958 = vpop.permute.xlu0 %4957
        %4959 = vrot.lane.b32.xlu0 %v4902, 96
        %v4960 = vpop.permute.xlu0 %4959
        %4961 = vrot.lane.b32.xlu0 %v4903, 96
        %v4962 = vpop.permute.xlu0 %4961
        %4963 = vrot.lane.b32.xlu0 %v4904, 96
        %v4964 = vpop.permute.xlu0 %4963
        %4965 = vrot.lane.b32.xlu0 %v4905, 96
        %v4966 = vpop.permute.xlu0 %4965
        %4967 = vrot.lane.b32.xlu0 %v4906, 96
        %v4968 = vpop.permute.xlu0 %4967
        %4969 = vrot.lane.b32.xlu0 %v4907, 96
        %v4970 = vpop.permute.xlu0 %4969
        %4971 = vrot.lane.b32.xlu0 %v4908, 96
        %v4972 = vpop.permute.xlu0 %4971
        %v4989 = vadd.f32 %v4909, %v4942
        %v4990 = vadd.f32 %v4910, %v4944
        %v4991 = vadd.f32 %v4911, %v4946
        %v4992 = vadd.f32 %v4912, %v4948
        %v4993 = vadd.f32 %v4913, %v4950
        %v4994 = vadd.f32 %v4914, %v4952
        %v4995 = vadd.f32 %v4915, %v4954
        %v4996 = vadd.f32 %v4916, %v4956
        %v4997 = vadd.f32 %v4917, %v4958
        %v4998 = vadd.f32 %v4918, %v4960
        %v4999 = vadd.f32 %v4919, %v4962
        %v5000 = vadd.f32 %v4920, %v4964
        %v5001 = vadd.f32 %v4921, %v4966
        %v5002 = vadd.f32 %v4922, %v4968
        %v5003 = vadd.f32 %v4923, %v4970
        %v5004 = vadd.f32 %v4924, %v4972
        %5005 = vrot.lane.b32.xlu0 %v4893, 64
        %v5006 = vpop.permute.xlu0 %5005
        %5007 = vrot.lane.b32.xlu0 %v4894, 64
        %v5008 = vpop.permute.xlu0 %5007
        %5009 = vrot.lane.b32.xlu0 %v4895, 64
        %v5010 = vpop.permute.xlu0 %5009
        %5011 = vrot.lane.b32.xlu0 %v4896, 64
        %v5012 = vpop.permute.xlu0 %5011
        %5013 = vrot.lane.b32.xlu0 %v4897, 64
        %v5014 = vpop.permute.xlu0 %5013
        %5015 = vrot.lane.b32.xlu0 %v4898, 64
        %v5016 = vpop.permute.xlu0 %5015
        %5017 = vrot.lane.b32.xlu0 %v4899, 64
        %v5018 = vpop.permute.xlu0 %5017
        %5019 = vrot.lane.b32.xlu0 %v4900, 64
        %v5020 = vpop.permute.xlu0 %5019
        %5021 = vrot.lane.b32.xlu0 %v4901, 64
        %v5022 = vpop.permute.xlu0 %5021
        %5023 = vrot.lane.b32.xlu0 %v4902, 64
        %v5024 = vpop.permute.xlu0 %5023
        %5025 = vrot.lane.b32.xlu0 %v4903, 64
        %v5026 = vpop.permute.xlu0 %5025
        %5027 = vrot.lane.b32.xlu0 %v4904, 64
        %v5028 = vpop.permute.xlu0 %5027
        %5029 = vrot.lane.b32.xlu0 %v4905, 64
        %v5030 = vpop.permute.xlu0 %5029
        %5031 = vrot.lane.b32.xlu0 %v4906, 64
        %v5032 = vpop.permute.xlu0 %5031
        %5033 = vrot.lane.b32.xlu0 %v4907, 64
        %v5034 = vpop.permute.xlu0 %5033
        %5035 = vrot.lane.b32.xlu0 %v4908, 64
        %v5036 = vpop.permute.xlu0 %5035
        %v5053 = vadd.f32 %v4989, %v5006
        %v5054 = vadd.f32 %v4990, %v5008
        %v5055 = vadd.f32 %v4991, %v5010
        %v5056 = vadd.f32 %v4992, %v5012
        %v5057 = vadd.f32 %v4993, %v5014
        %v5058 = vadd.f32 %v4994, %v5016
        %v5059 = vadd.f32 %v4995, %v5018
        %v5060 = vadd.f32 %v4996, %v5020
        %v5061 = vadd.f32 %v4997, %v5022
        %v5062 = vadd.f32 %v4998, %v5024
        %v5063 = vadd.f32 %v4999, %v5026
        %v5064 = vadd.f32 %v5000, %v5028
        %v5065 = vadd.f32 %v5001, %v5030
        %v5066 = vadd.f32 %v5002, %v5032
        %v5067 = vadd.f32 %v5003, %v5034
        %v5068 = vadd.f32 %v5004, %v5036
        %5069 = vrot.lane.b32.xlu0 %v4893, 32
        %v5070 = vpop.permute.xlu0 %5069
        %5071 = vrot.lane.b32.xlu0 %v4894, 32
        %v5072 = vpop.permute.xlu0 %5071
        %5073 = vrot.lane.b32.xlu0 %v4895, 32
        %v5074 = vpop.permute.xlu0 %5073
        %5075 = vrot.lane.b32.xlu0 %v4896, 32
        %v5076 = vpop.permute.xlu0 %5075
        %5077 = vrot.lane.b32.xlu0 %v4897, 32
        %v5078 = vpop.permute.xlu0 %5077
        %5079 = vrot.lane.b32.xlu0 %v4898, 32
        %v5080 = vpop.permute.xlu0 %5079
        %5081 = vrot.lane.b32.xlu0 %v4899, 32
        %v5082 = vpop.permute.xlu0 %5081
        %5083 = vrot.lane.b32.xlu0 %v4900, 32
        %v5084 = vpop.permute.xlu0 %5083
        %5085 = vrot.lane.b32.xlu0 %v4901, 32
        %v5086 = vpop.permute.xlu0 %5085
        %5087 = vrot.lane.b32.xlu0 %v4902, 32
        %v5088 = vpop.permute.xlu0 %5087
        %5089 = vrot.lane.b32.xlu0 %v4903, 32
        %v5090 = vpop.permute.xlu0 %5089
        %5091 = vrot.lane.b32.xlu0 %v4904, 32
        %v5092 = vpop.permute.xlu0 %5091
        %5093 = vrot.lane.b32.xlu0 %v4905, 32
        %v5094 = vpop.permute.xlu0 %5093
        %5095 = vrot.lane.b32.xlu0 %v4906, 32
        %v5096 = vpop.permute.xlu0 %5095
        %5097 = vrot.lane.b32.xlu0 %v4907, 32
        %v5098 = vpop.permute.xlu0 %5097
        %5099 = vrot.lane.b32.xlu0 %v4908, 32
        %v5100 = vpop.permute.xlu0 %5099
        %v5117 = vadd.f32 %v5053, %v5070
        %v5118 = vadd.f32 %v5054, %v5072
        %v5119 = vadd.f32 %v5055, %v5074
        %v5120 = vadd.f32 %v5056, %v5076
        %v5121 = vadd.f32 %v5057, %v5078
        %v5122 = vadd.f32 %v5058, %v5080
        %v5123 = vadd.f32 %v5059, %v5082
        %v5124 = vadd.f32 %v5060, %v5084
        %v5125 = vadd.f32 %v5061, %v5086
        %v5126 = vadd.f32 %v5062, %v5088
        %v5127 = vadd.f32 %v5063, %v5090
        %v5128 = vadd.f32 %v5064, %v5092
        %v5129 = vadd.f32 %v5065, %v5094
        %v5130 = vadd.f32 %v5066, %v5096
        %v5131 = vadd.f32 %v5067, %v5098
        %v5132 = vadd.f32 %v5068, %v5100
        %v5133 = vmax.f32 %v5117, 0.0
        %v5134 = vmax.f32 %v5118, 0.0
        %v5135 = vmax.f32 %v5119, 0.0
        %v5136 = vmax.f32 %v5120, 0.0
        %v5137 = vmax.f32 %v5121, 0.0
        %v5138 = vmax.f32 %v5122, 0.0
        %v5139 = vmax.f32 %v5123, 0.0
        %v5140 = vmax.f32 %v5124, 0.0
        %v5141 = vmax.f32 %v5125, 0.0
        %v5142 = vmax.f32 %v5126, 0.0
        %v5143 = vmax.f32 %v5127, 0.0
        %v5144 = vmax.f32 %v5128, 0.0
        %v5145 = vmax.f32 %v5129, 0.0
        %v5146 = vmax.f32 %v5130, 0.0
        %v5147 = vmax.f32 %v5131, 0.0
        %v5148 = vmax.f32 %v5132, 0.0
        %v5149 = vld [vmem:[#allocation5 + $0x488] sm:$0xf]
        %v5150 = vld [vmem:[#allocation5 + $0x48c] sm:$0xf]
        %v5151 = vld [vmem:[#allocation5 + $0x490] sm:$0xf]
        %v5152 = vld [vmem:[#allocation5 + $0x494] sm:$0xf]
        %v5153 = vpack.c.bf16 %v5134, %v5133
        %v5154 = vpack.c.bf16 %v5136, %v5135
        %v5155 = vpack.c.bf16 %v5138, %v5137
        %v5156 = vpack.c.bf16 %v5140, %v5139
        %v5157 = vpack.c.bf16 %v5142, %v5141
        %v5158 = vpack.c.bf16 %v5144, %v5143
        %v5159 = vpack.c.bf16 %v5146, %v5145
        %v5160 = vpack.c.bf16 %v5148, %v5147
        %v5165 = vunpack.c.l.b16 %v5149
        %v5166 = vunpack.c.l.b16 %v5150
        %v5167 = vunpack.c.l.b16 %v5151
        %v5168 = vunpack.c.l.b16 %v5152
        %v5169 = vpack.c.b16 %v5166, %v5165
        %v5170 = vpack.c.b16 %v5168, %v5167
        %v5174 = vsel %vm2862, %v5153, 0
        %v5177 = vsel %vm2862, %v5154, 0
        %v5180 = vsel %vm2862, %v5155, 0
        %v5183 = vsel %vm2862, %v5156, 0
        %v5186 = vsel %vm2862, %v5157, 0
        %v5189 = vsel %vm2862, %v5158, 0
        %v5192 = vsel %vm2862, %v5159, 0
        %v5195 = vsel %vm2862, %v5160, 0
        %5197 = vmatprep.subr.bf16.mxu0 0
        %5198 = vmatpush1.bf16.msra.mxu0 0
        %5199 = vmatprep.subr.bf16.mxu0 0
        %5200 = vmatpush1.bf16.msra.mxu0 0
        %5201 = vmatprep.subr.bf16.mxu0 0
        %5202 = vmatpush1.bf16.msra.mxu0 0
        %5203 = vmatprep.subr.bf16.mxu0 0
        %5204 = vmatpush1.bf16.msra.mxu0 0
        %5205 = vmatprep.subr.bf16.mxu0 0
        %5206 = vmatpush1.bf16.msra.mxu0 0
        %5207 = vmatprep.subr.bf16.mxu0 0
        %5208 = vmatpush1.bf16.msra.mxu0 0
        %5209 = vmatprep.subr.bf16.mxu0 0
        %5210 = vmatpush1.bf16.msra.mxu0 %v5170
        %5211 = vmatprep.subr.bf16.mxu0 0
        %5212 = vmatpush1.bf16.msra.mxu0 %v5169
        %5213 = vmatprep.subr.bf16.mxu0 0
        %5214 = vmatpush2.bf16.msra.mxu0 0
        %5215 = vmatprep.subr.bf16.mxu0 0
        %5216 = vmatpush2.bf16.msra.mxu0 0
        %5217 = vmatprep.subr.bf16.mxu0 0
        %5218 = vmatpush2.bf16.msra.mxu0 0
        %5219 = vmatprep.subr.bf16.mxu0 0
        %5220 = vmatpush2.bf16.msra.mxu0 0
        %5221 = vmatprep.subr.bf16.mxu0 0
        %5222 = vmatpush2.bf16.msra.mxu0 0
        %5223 = vmatprep.subr.bf16.mxu0 0
        %5224 = vmatpush2.bf16.msra.mxu0 0
        %5225 = vmatprep.subr.bf16.mxu0 0
        %5226 = vmatpush2.bf16.msra.mxu0 0
        %5227 = vmatprep.subr.bf16.mxu0 0
        %5228 = vmatpush2.bf16.msra.mxu0 0
        %5229 = vmatprep.mubr.bf16.mxu0 0
        %5230 = vmatmul.mubr.bf16.gmra.mxu0 %v5174
        %v5231 = vpop.f32.mrf.mxu0
        %v5232 = vadd.f32 0.0, %v5231
        %v5233 = vpop.f32.mrf.mxu0
        %v5234 = vpop.f32.mrf.mxu0
        %v5235 = vadd.f32 0.0, %v5234
        %v5236 = vpop.f32.mrf.mxu0
        %5237 = vmatprep.mubr.bf16.mxu0 0
        %5238 = vmatmul.mubr.bf16.gmra.mxu0 %v5177
        %v5239 = vpop.f32.mrf.mxu0
        %v5240 = vadd.f32 0.0, %v5239
        %v5241 = vpop.f32.mrf.mxu0
        %v5242 = vpop.f32.mrf.mxu0
        %v5243 = vadd.f32 0.0, %v5242
        %v5244 = vpop.f32.mrf.mxu0
        %5245 = vmatprep.mubr.bf16.mxu0 0
        %5246 = vmatmul.mubr.bf16.gmra.mxu0 %v5180
        %v5247 = vpop.f32.mrf.mxu0
        %v5248 = vadd.f32 0.0, %v5247
        %v5249 = vpop.f32.mrf.mxu0
        %v5250 = vpop.f32.mrf.mxu0
        %v5251 = vadd.f32 0.0, %v5250
        %v5252 = vpop.f32.mrf.mxu0
        %5253 = vmatprep.mubr.bf16.mxu0 0
        %5254 = vmatmul.mubr.bf16.gmra.mxu0 %v5183
        %v5255 = vpop.f32.mrf.mxu0
        %v5256 = vadd.f32 0.0, %v5255
        %v5257 = vpop.f32.mrf.mxu0
        %v5258 = vpop.f32.mrf.mxu0
        %v5259 = vadd.f32 0.0, %v5258
        %v5260 = vpop.f32.mrf.mxu0
        %5261 = vmatprep.mubr.bf16.mxu0 0
        %5262 = vmatmul.mubr.bf16.gmra.mxu0 %v5186
        %v5263 = vpop.f32.mrf.mxu0
        %v5264 = vadd.f32 0.0, %v5263
        %v5265 = vpop.f32.mrf.mxu0
        %v5266 = vpop.f32.mrf.mxu0
        %v5267 = vadd.f32 0.0, %v5266
        %v5268 = vpop.f32.mrf.mxu0
        %5269 = vmatprep.mubr.bf16.mxu0 0
        %5270 = vmatmul.mubr.bf16.gmra.mxu0 %v5189
        %v5271 = vpop.f32.mrf.mxu0
        %v5272 = vadd.f32 0.0, %v5271
        %v5273 = vpop.f32.mrf.mxu0
        %v5274 = vpop.f32.mrf.mxu0
        %v5275 = vadd.f32 0.0, %v5274
        %v5276 = vpop.f32.mrf.mxu0
        %5277 = vmatprep.mubr.bf16.mxu0 0
        %5278 = vmatmul.mubr.bf16.gmra.mxu0 %v5192
        %v5279 = vpop.f32.mrf.mxu0
        %v5280 = vadd.f32 0.0, %v5279
        %v5281 = vpop.f32.mrf.mxu0
        %v5282 = vpop.f32.mrf.mxu0
        %v5283 = vadd.f32 0.0, %v5282
        %v5284 = vpop.f32.mrf.mxu0
        %5285 = vmatprep.mubr.bf16.mxu0 0
        %5286 = vmatmul.mubr.bf16.gmra.mxu0 %v5195
        %v5287 = vpop.f32.mrf.mxu0
        %v5288 = vadd.f32 0.0, %v5287
        %v5289 = vpop.f32.mrf.mxu0
        %v5290 = vpop.f32.mrf.mxu0
        %v5291 = vadd.f32 0.0, %v5290
        %v5292 = vpop.f32.mrf.mxu0
        %5293 = vdwg.mxu0
        %v5294 = vadd.f32 %v4716, %v5232
        %v5295 = vadd.f32 %v4717, %v5235
        %v5296 = vadd.f32 %v4718, %v5240
        %v5297 = vadd.f32 %v4719, %v5243
        %v5298 = vadd.f32 %v4720, %v5248
        %v5299 = vadd.f32 %v4721, %v5251
        %v5300 = vadd.f32 %v4722, %v5256
        %v5301 = vadd.f32 %v4723, %v5259
        %v5302 = vadd.f32 %v4724, %v5264
        %v5303 = vadd.f32 %v4725, %v5267
        %v5304 = vadd.f32 %v4726, %v5272
        %v5305 = vadd.f32 %v4727, %v5275
        %v5306 = vadd.f32 %v4728, %v5280
        %v5307 = vadd.f32 %v4729, %v5283
        %v5308 = vadd.f32 %v4730, %v5288
        %v5309 = vadd.f32 %v4731, %v5291
        %v5310 = vmul.f32 %v2347, %v5294
        %v5311 = vmul.f32 %v2350, %v5295
        %v5312 = vmul.f32 %v2355, %v5296
        %v5313 = vmul.f32 %v2358, %v5297
        %v5314 = vmul.f32 %v2363, %v5298
        %v5315 = vmul.f32 %v2366, %v5299
        %v5316 = vmul.f32 %v2371, %v5300
        %v5317 = vmul.f32 %v2374, %v5301
        %v5318 = vmul.f32 %v2379, %v5302
        %v5319 = vmul.f32 %v2382, %v5303
        %v5320 = vmul.f32 %v2387, %v5304
        %v5321 = vmul.f32 %v2390, %v5305
        %v5322 = vmul.f32 %v2395, %v5306
        %v5323 = vmul.f32 %v2398, %v5307
        %v5324 = vmul.f32 %v2403, %v5308
        %v5325 = vmul.f32 %v2406, %v5309
        %v5326 = vadd.f32 %v5310, 0.0
        %v5327 = vadd.f32 %v5311, 0.0
        %v5328 = vadd.f32 %v5312, 0.0
        %v5329 = vadd.f32 %v5313, 0.0
        %v5330 = vadd.f32 %v5314, 0.0
        %v5331 = vadd.f32 %v5315, 0.0
        %v5332 = vadd.f32 %v5316, 0.0
        %v5333 = vadd.f32 %v5317, 0.0
        %v5334 = vadd.f32 %v5318, 0.0
        %v5335 = vadd.f32 %v5319, 0.0
        %v5336 = vadd.f32 %v5320, 0.0
        %v5337 = vadd.f32 %v5321, 0.0
        %v5338 = vadd.f32 %v5322, 0.0
        %v5339 = vadd.f32 %v5323, 0.0
        %v5340 = vadd.f32 %v5324, 0.0
        %v5341 = vadd.f32 %v5325, 0.0
        %5358 = vrot.lane.b32.xlu0 %v5310, 96
        %v5359 = vpop.permute.xlu0 %5358
        %5360 = vrot.lane.b32.xlu0 %v5311, 96
        %v5361 = vpop.permute.xlu0 %5360
        %5362 = vrot.lane.b32.xlu0 %v5312, 96
        %v5363 = vpop.permute.xlu0 %5362
        %5364 = vrot.lane.b32.xlu0 %v5313, 96
        %v5365 = vpop.permute.xlu0 %5364
        %5366 = vrot.lane.b32.xlu0 %v5314, 96
        %v5367 = vpop.permute.xlu0 %5366
        %5368 = vrot.lane.b32.xlu0 %v5315, 96
        %v5369 = vpop.permute.xlu0 %5368
        %5370 = vrot.lane.b32.xlu0 %v5316, 96
        %v5371 = vpop.permute.xlu0 %5370
        %5372 = vrot.lane.b32.xlu0 %v5317, 96
        %v5373 = vpop.permute.xlu0 %5372
        %5374 = vrot.lane.b32.xlu0 %v5318, 96
        %v5375 = vpop.permute.xlu0 %5374
        %5376 = vrot.lane.b32.xlu0 %v5319, 96
        %v5377 = vpop.permute.xlu0 %5376
        %5378 = vrot.lane.b32.xlu0 %v5320, 96
        %v5379 = vpop.permute.xlu0 %5378
        %5380 = vrot.lane.b32.xlu0 %v5321, 96
        %v5381 = vpop.permute.xlu0 %5380
        %5382 = vrot.lane.b32.xlu0 %v5322, 96
        %v5383 = vpop.permute.xlu0 %5382
        %5384 = vrot.lane.b32.xlu0 %v5323, 96
        %v5385 = vpop.permute.xlu0 %5384
        %5386 = vrot.lane.b32.xlu0 %v5324, 96
        %v5387 = vpop.permute.xlu0 %5386
        %5388 = vrot.lane.b32.xlu0 %v5325, 96
        %v5389 = vpop.permute.xlu0 %5388
        %v5406 = vadd.f32 %v5326, %v5359
        %v5407 = vadd.f32 %v5327, %v5361
        %v5408 = vadd.f32 %v5328, %v5363
        %v5409 = vadd.f32 %v5329, %v5365
        %v5410 = vadd.f32 %v5330, %v5367
        %v5411 = vadd.f32 %v5331, %v5369
        %v5412 = vadd.f32 %v5332, %v5371
        %v5413 = vadd.f32 %v5333, %v5373
        %v5414 = vadd.f32 %v5334, %v5375
        %v5415 = vadd.f32 %v5335, %v5377
        %v5416 = vadd.f32 %v5336, %v5379
        %v5417 = vadd.f32 %v5337, %v5381
        %v5418 = vadd.f32 %v5338, %v5383
        %v5419 = vadd.f32 %v5339, %v5385
        %v5420 = vadd.f32 %v5340, %v5387
        %v5421 = vadd.f32 %v5341, %v5389
        %5422 = vrot.lane.b32.xlu0 %v5310, 64
        %v5423 = vpop.permute.xlu0 %5422
        %5424 = vrot.lane.b32.xlu0 %v5311, 64
        %v5425 = vpop.permute.xlu0 %5424
        %5426 = vrot.lane.b32.xlu0 %v5312, 64
        %v5427 = vpop.permute.xlu0 %5426
        %5428 = vrot.lane.b32.xlu0 %v5313, 64
        %v5429 = vpop.permute.xlu0 %5428
        %5430 = vrot.lane.b32.xlu0 %v5314, 64
        %v5431 = vpop.permute.xlu0 %5430
        %5432 = vrot.lane.b32.xlu0 %v5315, 64
        %v5433 = vpop.permute.xlu0 %5432
        %5434 = vrot.lane.b32.xlu0 %v5316, 64
        %v5435 = vpop.permute.xlu0 %5434
        %5436 = vrot.lane.b32.xlu0 %v5317, 64
        %v5437 = vpop.permute.xlu0 %5436
        %5438 = vrot.lane.b32.xlu0 %v5318, 64
        %v5439 = vpop.permute.xlu0 %5438
        %5440 = vrot.lane.b32.xlu0 %v5319, 64
        %v5441 = vpop.permute.xlu0 %5440
        %5442 = vrot.lane.b32.xlu0 %v5320, 64
        %v5443 = vpop.permute.xlu0 %5442
        %5444 = vrot.lane.b32.xlu0 %v5321, 64
        %v5445 = vpop.permute.xlu0 %5444
        %5446 = vrot.lane.b32.xlu0 %v5322, 64
        %v5447 = vpop.permute.xlu0 %5446
        %5448 = vrot.lane.b32.xlu0 %v5323, 64
        %v5449 = vpop.permute.xlu0 %5448
        %5450 = vrot.lane.b32.xlu0 %v5324, 64
        %v5451 = vpop.permute.xlu0 %5450
        %5452 = vrot.lane.b32.xlu0 %v5325, 64
        %v5453 = vpop.permute.xlu0 %5452
        %v5470 = vadd.f32 %v5406, %v5423
        %v5471 = vadd.f32 %v5407, %v5425
        %v5472 = vadd.f32 %v5408, %v5427
        %v5473 = vadd.f32 %v5409, %v5429
        %v5474 = vadd.f32 %v5410, %v5431
        %v5475 = vadd.f32 %v5411, %v5433
        %v5476 = vadd.f32 %v5412, %v5435
        %v5477 = vadd.f32 %v5413, %v5437
        %v5478 = vadd.f32 %v5414, %v5439
        %v5479 = vadd.f32 %v5415, %v5441
        %v5480 = vadd.f32 %v5416, %v5443
        %v5481 = vadd.f32 %v5417, %v5445
        %v5482 = vadd.f32 %v5418, %v5447
        %v5483 = vadd.f32 %v5419, %v5449
        %v5484 = vadd.f32 %v5420, %v5451
        %v5485 = vadd.f32 %v5421, %v5453
        %5486 = vrot.lane.b32.xlu0 %v5310, 32
        %v5487 = vpop.permute.xlu0 %5486
        %5488 = vrot.lane.b32.xlu0 %v5311, 32
        %v5489 = vpop.permute.xlu0 %5488
        %5490 = vrot.lane.b32.xlu0 %v5312, 32
        %v5491 = vpop.permute.xlu0 %5490
        %5492 = vrot.lane.b32.xlu0 %v5313, 32
        %v5493 = vpop.permute.xlu0 %5492
        %5494 = vrot.lane.b32.xlu0 %v5314, 32
        %v5495 = vpop.permute.xlu0 %5494
        %5496 = vrot.lane.b32.xlu0 %v5315, 32
        %v5497 = vpop.permute.xlu0 %5496
        %5498 = vrot.lane.b32.xlu0 %v5316, 32
        %v5499 = vpop.permute.xlu0 %5498
        %5500 = vrot.lane.b32.xlu0 %v5317, 32
        %v5501 = vpop.permute.xlu0 %5500
        %5502 = vrot.lane.b32.xlu0 %v5318, 32
        %v5503 = vpop.permute.xlu0 %5502
        %5504 = vrot.lane.b32.xlu0 %v5319, 32
        %v5505 = vpop.permute.xlu0 %5504
        %5506 = vrot.lane.b32.xlu0 %v5320, 32
        %v5507 = vpop.permute.xlu0 %5506
        %5508 = vrot.lane.b32.xlu0 %v5321, 32
        %v5509 = vpop.permute.xlu0 %5508
        %5510 = vrot.lane.b32.xlu0 %v5322, 32
        %v5511 = vpop.permute.xlu0 %5510
        %5512 = vrot.lane.b32.xlu0 %v5323, 32
        %v5513 = vpop.permute.xlu0 %5512
        %5514 = vrot.lane.b32.xlu0 %v5324, 32
        %v5515 = vpop.permute.xlu0 %5514
        %5516 = vrot.lane.b32.xlu0 %v5325, 32
        %v5517 = vpop.permute.xlu0 %5516
        %v5534 = vadd.f32 %v5470, %v5487
        %v5535 = vadd.f32 %v5471, %v5489
        %v5536 = vadd.f32 %v5472, %v5491
        %v5537 = vadd.f32 %v5473, %v5493
        %v5538 = vadd.f32 %v5474, %v5495
        %v5539 = vadd.f32 %v5475, %v5497
        %v5540 = vadd.f32 %v5476, %v5499
        %v5541 = vadd.f32 %v5477, %v5501
        %v5542 = vadd.f32 %v5478, %v5503
        %v5543 = vadd.f32 %v5479, %v5505
        %v5544 = vadd.f32 %v5480, %v5507
        %v5545 = vadd.f32 %v5481, %v5509
        %v5546 = vadd.f32 %v5482, %v5511
        %v5547 = vadd.f32 %v5483, %v5513
        %v5548 = vadd.f32 %v5484, %v5515
        %v5549 = vadd.f32 %v5485, %v5517
        %v5550 = vmax.f32 %v5534, 0.0
        %v5551 = vmax.f32 %v5535, 0.0
        %v5552 = vmax.f32 %v5536, 0.0
        %v5553 = vmax.f32 %v5537, 0.0
        %v5554 = vmax.f32 %v5538, 0.0
        %v5555 = vmax.f32 %v5539, 0.0
        %v5556 = vmax.f32 %v5540, 0.0
        %v5557 = vmax.f32 %v5541, 0.0
        %v5558 = vmax.f32 %v5542, 0.0
        %v5559 = vmax.f32 %v5543, 0.0
        %v5560 = vmax.f32 %v5544, 0.0
        %v5561 = vmax.f32 %v5545, 0.0
        %v5562 = vmax.f32 %v5546, 0.0
        %v5563 = vmax.f32 %v5547, 0.0
        %v5564 = vmax.f32 %v5548, 0.0
        %v5565 = vmax.f32 %v5549, 0.0
        %v5566 = vld [vmem:[#allocation5 + $0x4a0] sm:$0xf]
        %v5567 = vld [vmem:[#allocation5 + $0x4a4] sm:$0xf]
        %v5568 = vld [vmem:[#allocation5 + $0x4a8] sm:$0xf]
        %v5569 = vld [vmem:[#allocation5 + $0x4ac] sm:$0xf]
        %v5570 = vpack.c.bf16 %v5551, %v5550
        %v5571 = vpack.c.bf16 %v5553, %v5552
        %v5572 = vpack.c.bf16 %v5555, %v5554
        %v5573 = vpack.c.bf16 %v5557, %v5556
        %v5574 = vpack.c.bf16 %v5559, %v5558
        %v5575 = vpack.c.bf16 %v5561, %v5560
        %v5576 = vpack.c.bf16 %v5563, %v5562
        %v5577 = vpack.c.bf16 %v5565, %v5564
        %v5578 = vld [vmem:[#allocation5 + $0x4b0] sm:$0x1]
        %v5579 = vunpack.c.l.bf16 %v5578
        %v5580 = vlaneseq
        %v5581 = vshrl.u32 %v5580, 7
        %v5582 = vsub.s32 0, %v5581
        %v5583 = vrot.slane %v5579, %v5582
        %v5588 = vunpack.c.l.b16 %v5566
        %v5589 = vunpack.c.l.b16 %v5567
        %v5590 = vunpack.c.l.b16 %v5568
        %v5591 = vunpack.c.l.b16 %v5569
        %v5592 = vpack.c.b16 %v5589, %v5588
        %v5593 = vpack.c.b16 %v5591, %v5590
        %v5597 = vsel %vm2862, %v5570, 0
        %v5600 = vsel %vm2862, %v5571, 0
        %v5603 = vsel %vm2862, %v5572, 0
        %v5606 = vsel %vm2862, %v5573, 0
        %v5609 = vsel %vm2862, %v5574, 0
        %v5612 = vsel %vm2862, %v5575, 0
        %v5615 = vsel %vm2862, %v5576, 0
        %v5618 = vsel %vm2862, %v5577, 0
        %5620 = vmatprep.subr.bf16.mxu0 0
        %5621 = vmatpush1.bf16.msra.mxu0 0
        %5622 = vmatprep.subr.bf16.mxu0 0
        %5623 = vmatpush1.bf16.msra.mxu0 0
        %5624 = vmatprep.subr.bf16.mxu0 0
        %5625 = vmatpush1.bf16.msra.mxu0 0
        %5626 = vmatprep.subr.bf16.mxu0 0
        %5627 = vmatpush1.bf16.msra.mxu0 0
        %5628 = vmatprep.subr.bf16.mxu0 0
        %5629 = vmatpush1.bf16.msra.mxu0 0
        %5630 = vmatprep.subr.bf16.mxu0 0
        %5631 = vmatpush1.bf16.msra.mxu0 0
        %5632 = vmatprep.subr.bf16.mxu0 0
        %5633 = vmatpush1.bf16.msra.mxu0 %v5593
        %5634 = vmatprep.subr.bf16.mxu0 0
        %5635 = vmatpush1.bf16.msra.mxu0 %v5592
        %5636 = vmatprep.subr.bf16.mxu0 0
        %5637 = vmatpush2.bf16.msra.mxu0 0
        %5638 = vmatprep.subr.bf16.mxu0 0
        %5639 = vmatpush2.bf16.msra.mxu0 0
        %5640 = vmatprep.subr.bf16.mxu0 0
        %5641 = vmatpush2.bf16.msra.mxu0 0
        %5642 = vmatprep.subr.bf16.mxu0 0
        %5643 = vmatpush2.bf16.msra.mxu0 0
        %5644 = vmatprep.subr.bf16.mxu0 0
        %5645 = vmatpush2.bf16.msra.mxu0 0
        %5646 = vmatprep.subr.bf16.mxu0 0
        %5647 = vmatpush2.bf16.msra.mxu0 0
        %5648 = vmatprep.subr.bf16.mxu0 0
        %5649 = vmatpush2.bf16.msra.mxu0 0
        %5650 = vmatprep.subr.bf16.mxu0 0
        %5651 = vmatpush2.bf16.msra.mxu0 0
        %5652 = vmatprep.mubr.bf16.mxu0 0
        %5653 = vmatmul.mubr.bf16.gmra.mxu0 %v5597
        %v5654 = vpop.f32.mrf.mxu0
        %v5655 = vadd.f32 %v5583, %v5654
        %v5656 = vpop.f32.mrf.mxu0
        %v5657 = vpop.f32.mrf.mxu0
        %v5658 = vadd.f32 %v5583, %v5657
        %v5659 = vpop.f32.mrf.mxu0
        %5660 = vmatprep.mubr.bf16.mxu0 0
        %5661 = vmatmul.mubr.bf16.gmra.mxu0 %v5600
        %v5662 = vpop.f32.mrf.mxu0
        %v5663 = vadd.f32 %v5583, %v5662
        %v5664 = vpop.f32.mrf.mxu0
        %v5665 = vpop.f32.mrf.mxu0
        %v5666 = vadd.f32 %v5583, %v5665
        %v5667 = vpop.f32.mrf.mxu0
        %5668 = vmatprep.mubr.bf16.mxu0 0
        %5669 = vmatmul.mubr.bf16.gmra.mxu0 %v5603
        %v5670 = vpop.f32.mrf.mxu0
        %v5671 = vadd.f32 %v5583, %v5670
        %v5672 = vpop.f32.mrf.mxu0
        %v5673 = vpop.f32.mrf.mxu0
        %v5674 = vadd.f32 %v5583, %v5673
        %v5675 = vpop.f32.mrf.mxu0
        %5676 = vmatprep.mubr.bf16.mxu0 0
        %5677 = vmatmul.mubr.bf16.gmra.mxu0 %v5606
        %v5678 = vpop.f32.mrf.mxu0
        %v5679 = vadd.f32 %v5583, %v5678
        %v5680 = vpop.f32.mrf.mxu0
        %v5681 = vpop.f32.mrf.mxu0
        %v5682 = vadd.f32 %v5583, %v5681
        %v5683 = vpop.f32.mrf.mxu0
        %5684 = vmatprep.mubr.bf16.mxu0 0
        %5685 = vmatmul.mubr.bf16.gmra.mxu0 %v5609
        %v5686 = vpop.f32.mrf.mxu0
        %v5687 = vadd.f32 %v5583, %v5686
        %v5688 = vpop.f32.mrf.mxu0
        %v5689 = vpop.f32.mrf.mxu0
        %v5690 = vadd.f32 %v5583, %v5689
        %v5691 = vpop.f32.mrf.mxu0
        %5692 = vmatprep.mubr.bf16.mxu0 0
        %5693 = vmatmul.mubr.bf16.gmra.mxu0 %v5612
        %v5694 = vpop.f32.mrf.mxu0
        %v5695 = vadd.f32 %v5583, %v5694
        %v5696 = vpop.f32.mrf.mxu0
        %v5697 = vpop.f32.mrf.mxu0
        %v5698 = vadd.f32 %v5583, %v5697
        %v5699 = vpop.f32.mrf.mxu0
        %5700 = vmatprep.mubr.bf16.mxu0 0
        %5701 = vmatmul.mubr.bf16.gmra.mxu0 %v5615
        %v5702 = vpop.f32.mrf.mxu0
        %v5703 = vadd.f32 %v5583, %v5702
        %v5704 = vpop.f32.mrf.mxu0
        %v5705 = vpop.f32.mrf.mxu0
        %v5706 = vadd.f32 %v5583, %v5705
        %v5707 = vpop.f32.mrf.mxu0
        %5708 = vmatprep.mubr.bf16.mxu0 0
        %5709 = vmatmul.mubr.bf16.gmra.mxu0 %v5618
        %v5710 = vpop.f32.mrf.mxu0
        %v5711 = vadd.f32 %v5583, %v5710
        %v5712 = vpop.f32.mrf.mxu0
        %v5713 = vpop.f32.mrf.mxu0
        %v5714 = vadd.f32 %v5583, %v5713
        %v5715 = vpop.f32.mrf.mxu0
        %5716 = vdwg.mxu0
        %v5717 = vlaneseq
        %v5718 = vand.u32 %v5717, 127
        %v5719 = vtanh.pop %v5655
        %v5720 = vtanh.pop %v5658
        %v5721 = vtanh.pop %v5663
        %v5722 = vtanh.pop %v5666
        %v5723 = vtanh.pop %v5671
        %v5724 = vtanh.pop %v5674
        %v5725 = vtanh.pop %v5679
        %v5726 = vtanh.pop %v5682
        %v5727 = vtanh.pop %v5687
        %v5728 = vtanh.pop %v5690
        %v5729 = vtanh.pop %v5695
        %v5730 = vtanh.pop %v5698
        %v5731 = vtanh.pop %v5703
        %v5732 = vtanh.pop %v5706
        %v5733 = vtanh.pop %v5711
        %v5734 = vtanh.pop %v5714
        %v5735 = vmax.f32 %v5655, -20.0
        %v5736 = vmax.f32 %v5658, -20.0
        %v5737 = vmax.f32 %v5663, -20.0
        %v5738 = vmax.f32 %v5666, -20.0
        %v5739 = vmax.f32 %v5671, -20.0
        %v5740 = vmax.f32 %v5674, -20.0
        %v5741 = vmax.f32 %v5679, -20.0
        %v5742 = vmax.f32 %v5682, -20.0
        %v5743 = vmax.f32 %v5687, -20.0
        %v5744 = vmax.f32 %v5690, -20.0
        %v5745 = vmax.f32 %v5695, -20.0
        %v5746 = vmax.f32 %v5698, -20.0
        %v5747 = vmax.f32 %v5703, -20.0
        %v5748 = vmax.f32 %v5706, -20.0
        %v5749 = vmax.f32 %v5711, -20.0
        %v5750 = vmax.f32 %v5714, -20.0
        %v5751 = vmin.f32 %v5735, 2.0
        %v5752 = vmin.f32 %v5736, 2.0
        %v5753 = vmin.f32 %v5737, 2.0
        %v5754 = vmin.f32 %v5738, 2.0
        %v5755 = vmin.f32 %v5739, 2.0
        %v5756 = vmin.f32 %v5740, 2.0
        %v5757 = vmin.f32 %v5741, 2.0
        %v5758 = vmin.f32 %v5742, 2.0
        %v5759 = vmin.f32 %v5743, 2.0
        %v5760 = vmin.f32 %v5744, 2.0
        %v5761 = vmin.f32 %v5745, 2.0
        %v5762 = vmin.f32 %v5746, 2.0
        %v5763 = vmin.f32 %v5747, 2.0
        %v5764 = vmin.f32 %v5748, 2.0
        %v5765 = vmin.f32 %v5749, 2.0
        %v5766 = vmin.f32 %v5750, 2.0
        %vm5767 = vcmp.lt.s32.totalorder %v5718, 8
        %vm5768 = vcmp.lt.s32.totalorder %v5718, 16
        %vm5769 = vcmp.lt.s32.totalorder %v5718, 24
        %v5770 = vsel %vm5769, %v5751, 0.0
        %v5771 = vsel %vm5769, %v5752, 0.0
        %v5772 = vsel %vm5769, %v5753, 0.0
        %v5773 = vsel %vm5769, %v5754, 0.0
        %v5774 = vsel %vm5769, %v5755, 0.0
        %v5775 = vsel %vm5769, %v5756, 0.0
        %v5776 = vsel %vm5769, %v5757, 0.0
        %v5777 = vsel %vm5769, %v5758, 0.0
        %v5778 = vsel %vm5769, %v5759, 0.0
        %v5779 = vsel %vm5769, %v5760, 0.0
        %v5780 = vsel %vm5769, %v5761, 0.0
        %v5781 = vsel %vm5769, %v5762, 0.0
        %v5782 = vsel %vm5769, %v5763, 0.0
        %v5783 = vsel %vm5769, %v5764, 0.0
        %v5784 = vsel %vm5769, %v5765, 0.0
        %v5785 = vsel %vm5769, %v5766, 0.0
        %v5786 = vsel %vm5768, %v5655, %v5770
        %v5787 = vsel %vm5768, %v5658, %v5771
        %v5788 = vsel %vm5768, %v5663, %v5772
        %v5789 = vsel %vm5768, %v5666, %v5773
        %v5790 = vsel %vm5768, %v5671, %v5774
        %v5791 = vsel %vm5768, %v5674, %v5775
        %v5792 = vsel %vm5768, %v5679, %v5776
        %v5793 = vsel %vm5768, %v5682, %v5777
        %v5794 = vsel %vm5768, %v5687, %v5778
        %v5795 = vsel %vm5768, %v5690, %v5779
        %v5796 = vsel %vm5768, %v5695, %v5780
        %v5797 = vsel %vm5768, %v5698, %v5781
        %v5798 = vsel %vm5768, %v5703, %v5782
        %v5799 = vsel %vm5768, %v5706, %v5783
        %v5800 = vsel %vm5768, %v5711, %v5784
        %v5801 = vsel %vm5768, %v5714, %v5785
        %v5802 = vsel %vm5767, %v5719, %v5786
        %v5803 = vsel %vm5767, %v5720, %v5787
        %v5804 = vsel %vm5767, %v5721, %v5788
        %v5805 = vsel %vm5767, %v5722, %v5789
        %v5806 = vsel %vm5767, %v5723, %v5790
        %v5807 = vsel %vm5767, %v5724, %v5791
        %v5808 = vsel %vm5767, %v5725, %v5792
        %v5809 = vsel %vm5767, %v5726, %v5793
        %v5810 = vsel %vm5767, %v5727, %v5794
        %v5811 = vsel %vm5767, %v5728, %v5795
        %v5812 = vsel %vm5767, %v5729, %v5796
        %v5813 = vsel %vm5767, %v5730, %v5797
        %v5814 = vsel %vm5767, %v5731, %v5798
        %v5815 = vsel %vm5767, %v5732, %v5799
        %v5816 = vsel %vm5767, %v5733, %v5800
        %v5817 = vsel %vm5767, %v5734, %v5801
        %5818 = vst [vmem:[%s176] sm:$0xff] %v5802
        %5819 = vst [vmem:[%s176 + $0x8] sm:$0xff] %v5803
        %5820 = vst [vmem:[%s176 + $0x10] sm:$0xff] %v5804
        %5821 = vst [vmem:[%s176 + $0x18] sm:$0xff] %v5805
        %5822 = vst [vmem:[%s176 + $0x20] sm:$0xff] %v5806
        %5823 = vst [vmem:[%s176 + $0x28] sm:$0xff] %v5807
        %5824 = vst [vmem:[%s176 + $0x30] sm:$0xff] %v5808
        %5825 = vst [vmem:[%s176 + $0x38] sm:$0xff] %v5809
        %5826 = vst [vmem:[%s176 + $0x40] sm:$0xff] %v5810
        %5827 = vst [vmem:[%s176 + $0x48] sm:$0xff] %v5811
        %5828 = vst [vmem:[%s176 + $0x50] sm:$0xff] %v5812
        %5829 = vst [vmem:[%s176 + $0x58] sm:$0xff] %v5813
        %5830 = vst [vmem:[%s176 + $0x60] sm:$0xff] %v5814
        %5831 = vst [vmem:[%s176 + $0x68] sm:$0xff] %v5815
        %5832 = vst [vmem:[%s176 + $0x70] sm:$0xff] %v5816
        %5833 = vst [vmem:[%s176 + $0x78] sm:$0xff] %v5817
        %s5834 = sand.u32 %s75, 1
        %s5835 = scalar_lea.sflag [#allocation4], %s5834
        %s5836 = sand.u32 %s75, 1
        %s5837 = smul.addr %s5836, 128
        %s5838 = scalar_lea.vmem [#allocation7], %s5837
        // Predicated region
        $region37: #{tpu_custom_call.1} parent=27 // pred_check
          %p5839 = pneg %p85
        $region38: #{tpu_custom_call.1} parent=27 // pred_check_branch
          %5841 = sbr.rel (%p5839) target = $region40
        $region39: #{tpu_custom_call.1} parent=27 // pred_region
          %s5842 = smul.u32 16, %s20
          %s5844 = ssub.s32 2048, 2048
          %5845 = vsyncadd %s5835, %s5844
          %s5846 = smul.addr %s5842, 128
          %s5847 = scalar_lea.hbm %s2, %s5846
          %s5848 = sshll.u32 %s5838, 4
          %s5849 = int_to_ptr.vmem [resolvable:$true] %s5848
          %5854 = dma.vmem_to_hbm [thread:$0]  %s5849, 2048, %s5847, %s5835, 128, 128, 8
        $region40: #{tpu_custom_call.1} parent=27 // pred_fallthru
          _
      $region28: #{tpu_custom_call.1} parent=5 // pred_fallthru
        _
      %p5855 = scmp.le.s32.totalorder 2, %s15
      // Predicated region
      $region41: #{tpu_custom_call.1} parent=5 // pred_check
        %p5856 = pneg %p5855
      $region42: #{tpu_custom_call.1} parent=5 // pred_check_branch
        %5858 = sbr.rel (%p5856) target = $region44
      $region43: #{tpu_custom_call.1} parent=5 // pred_region
        %s5859 = ssub.s32 %s15, 2
        // Predicated region
        $region45: #{tpu_custom_call.1} parent=43 // pred_check
          %p5860 = pneg %p91
        $region46: #{tpu_custom_call.1} parent=43 // pred_check_branch
          %5862 = sbr.rel (%p5860) target = $region48
        $region47: #{tpu_custom_call.1} parent=43 // pred_region
          %s5863 = sand.u32 %s76, 1
          %s5864 = scalar_lea.sflag [#allocation4], %s5863
          %s5865 = sand.u32 %s76, 1
          %s5866 = smul.addr %s5865, 128
          %s5867 = scalar_lea.vmem [#allocation7], %s5866
          %5868 = dma.done %s5864, 2048
        $region48: #{tpu_custom_call.1} parent=43 // pred_fallthru
          _
      $region44: #{tpu_custom_call.1} parent=5 // pred_fallthru
        _
    $region6: #{tpu_custom_call.1} parent=1 // loop_footer
      %s19 = sadd.s32 1, %s15
    $region7: #{tpu_custom_call.1} parent=1 // loop_footer_branch
      %14 = sbr.rel target = $region3
    $region8: #{tpu_custom_call.1} parent=1 // loop_exit
      _
    %5869 = vsyncpa [#allocation3], 1
    %s5870 = scalar_lea.sflag [#allocation3], 1
    %5871 = vsyncpa %s5870, 1
    %5872 = vsyncpa [#allocation6], 1
    %5873 = vsyncpa [#allocation4], 1
    %s5874 = scalar_lea.sflag [#allocation4], 1
    %5875 = vsyncpa %s5874, 1

</llo_original>
